<compile_context>
chip_gen: v7x
topology: tpu7x:2x2x1
jax: 0.10.0
libtpu: 0.0.40
codegen_flags: <defaults>
</compile_context>

<pallas_src>
import functools
import math

import jax
import jax.numpy as jnp
from jax import lax
from jax.experimental import pallas as pl
from jax.experimental.pallas import tpu as pltpu

EPS = 1e-5  # LitRMSNorm eps


def find_multiple(n: int, k: int) -> int:
    if n % k == 0:
        return n
    return n + k - n % k


def _tile(dim: int, target: int, base: int) -> int:
    """Largest multiple of `base` that divides `dim` and is <= target; else dim."""
    t = (min(target, dim) // base) * base
    while t >= base:
        if dim % t == 0:
            return t
        t -= base
    return dim


# ----------------------------- Pallas kernels ------------------------------


def _rmsnorm_kernel(x_ref, g_ref, o_ref, *, eps):
    x = x_ref[...].astype(jnp.float32)
    ms = jnp.mean(x * x, axis=-1, keepdims=True)
    xn = x * lax.rsqrt(ms + eps) * g_ref[...].astype(jnp.float32)
    o_ref[...] = xn.astype(o_ref.dtype)


def _rmsnorm_matmul_kernel(x_ref, g_ref, w_ref, o_ref, xn_ref, *, eps):
    # Fused: o = rmsnorm(x) @ W.  K is un-tiled so the row mean is exact.
    # The normalized activation is cached in VMEM scratch on the first N tile
    # and reused for the remaining N tiles of this row block.
    @pl.when(pl.program_id(1) == 0)
    def _():
        x = x_ref[...].astype(jnp.float32)
        ms = jnp.mean(x * x, axis=-1, keepdims=True)
        xn_ref[...] = (
            x * lax.rsqrt(ms + eps) * g_ref[...].astype(jnp.float32)
        ).astype(jnp.bfloat16)

    o_ref[...] = jnp.dot(
        xn_ref[...], w_ref[...], preferred_element_type=jnp.float32
    ).astype(o_ref.dtype)


def _matmul_res_kernel(x_ref, w_ref, r_ref, o_ref):
    # Tiled matmul accumulating directly into the resident f32 output block,
    # residual added in the last-K epilogue.
    k = pl.program_id(2)

    @pl.when(k == 0)
    def _():
        o_ref[...] = jnp.zeros_like(o_ref)

    o_ref[...] += jnp.dot(
        x_ref[...], w_ref[...], preferred_element_type=jnp.float32
    )

    @pl.when(k == pl.num_programs(2) - 1)
    def _():
        o_ref[...] += r_ref[...]


def _swiglu_matmul_res_kernel(a_ref, b_ref, w_ref, r_ref, o_ref, g_ref):
    # Fused SwiGLU: (silu(a) * b) @ W + residual.  The gate for each K block is
    # computed once (first N tile) into a VMEM scratch and reused afterwards.
    j = pl.program_id(1)
    k = pl.program_id(2)

    @pl.when(k == 0)
    def _():
        o_ref[...] = jnp.zeros_like(o_ref)

    @pl.when(j == 0)
    def _():
        a = a_ref[...].astype(jnp.float32)
        b = b_ref[...].astype(jnp.float32)
        g_ref[k] = (a * jax.nn.sigmoid(a) * b).astype(jnp.bfloat16)

    o_ref[...] += jnp.dot(
        g_ref[k], w_ref[...], preferred_element_type=jnp.float32
    )

    @pl.when(k == pl.num_programs(2) - 1)
    def _():
        o_ref[...] += r_ref[...]


def _flash_attn_kernel(q_ref, k_ref, v_ref, o_ref, m_ref, l_ref, acc_ref, *,
                       scale):
    # One (batch, head, q-tile) owns resident m/l/acc scratch; KV tiles stream
    # along the innermost ("arbitrary") grid axis (online softmax — no (T, T)
    # score tensor in VMEM).
    kv = pl.program_id(3)

    @pl.when(kv == 0)
    def _():
        m_ref[...] = jnp.full_like(m_ref, -jnp.inf)
        l_ref[...] = jnp.zeros_like(l_ref)
        acc_ref[...] = jnp.zeros_like(acc_ref)

    q = q_ref[0]          # (tq, hd)
    k = k_ref[0]          # (tkv, hd)
    v = v_ref[0]          # (tkv, hd)
    s = lax.dot_general(
        q, k, (((1,), (1,)), ((), ())), preferred_element_type=jnp.float32
    ) * scale
    m_prev = m_ref[...]
    m_new = jnp.maximum(m_prev, jnp.max(s, axis=-1, keepdims=True))
    alpha = jnp.exp(m_prev - m_new)
    p = jnp.exp(s - m_new)
    l_ref[...] = alpha * l_ref[...] + jnp.sum(p, axis=-1, keepdims=True)
    acc_ref[...] = alpha * acc_ref[...] + jnp.dot(
        p.astype(v.dtype), v, preferred_element_type=jnp.float32
    )
    m_ref[...] = m_new

    @pl.when(kv == pl.num_programs(3) - 1)
    def _():
        o_ref[0] = (
            acc_ref[...] * pl.reciprocal(l_ref[...], approx=True)
        ).astype(o_ref.dtype)


def _grouped_attn_kernel(q_ref, k_ref, v_ref, o_ref, *, heads, scale):
    # Fallback for head_dim < 128: process a lane-aligned group of heads with
    # full (T, T) scores.
    # TODO(synk): flash-style KV tiling for the grouped (head_dim < 128) path.
    T, gd = q_ref.shape[1], q_ref.shape[2]
    hd = gd // heads
    q = q_ref[0].reshape(T, heads, hd)
    k = k_ref[0].reshape(T, heads, hd)
    v = v_ref[0].reshape(T, heads, hd)
    s = jnp.einsum(
        "tgd,sgd->gts", q, k, preferred_element_type=jnp.float32
    ) * scale
    m = jnp.max(s, axis=-1, keepdims=True)
    p = jnp.exp(s - m)
    p = p * pl.reciprocal(jnp.sum(p, axis=-1, keepdims=True), approx=True)
    y = jnp.einsum(
        "gts,sgd->tgd", p.astype(v.dtype), v, preferred_element_type=jnp.float32
    )
    o_ref[0] = y.reshape(T, gd).astype(o_ref.dtype)


def _fused_llama_kernel(x_ref, rms1_ref, attn_w_ref, proj_w_ref, rms2_ref,
                        fc_w_ref, mlp_w_ref, norm_ref, o_ref, x_s, y_s, *,
                        B, T, C, n_head, eps):
    # Whole transformer in one pallas_call: grid = (layers,).  Per-layer
    # weights are streamed (double-buffered) via the BlockSpec index_map; the
    # f32 residual stream lives in VMEM scratch across grid steps.  Used only
    # when everything fits comfortably in VMEM (small B*T).
    layer = pl.program_id(0)
    n_layers = pl.num_programs(0)
    hd = C // n_head
    scale = 1.0 / math.sqrt(hd)

    @pl.when(layer == 0)
    def _():
        x_s[...] = x_ref[...]

    x = x_s[...]                                            # (M, C) f32

    # ---- attention branch: rmsnorm -> qkv -> SDPA -> proj -> residual ----
    ms = jnp.mean(x * x, axis=-1, keepdims=True)
    xn = (x * lax.rsqrt(ms + eps) * rms1_ref[0]).astype(jnp.bfloat16)
    qkv = jnp.dot(
        xn, attn_w_ref[0], preferred_element_type=jnp.float32
    ).astype(jnp.bfloat16)                                  # (M, 3C)

    for b in range(B):
        r0 = b * T
        for h in range(n_head):
            c0 = h * hd
            q = qkv[r0:r0 + T, c0:c0 + hd]
            k = qkv[r0:r0 + T, C + c0:C + c0 + hd]
            v = qkv[r0:r0 + T, 2 * C + c0:2 * C + c0 + hd]
            s = lax.dot_general(
                q, k, (((1,), (1,)), ((), ())),
                preferred_element_type=jnp.float32,
            ) * scale
            m = jnp.max(s, axis=-1, keepdims=True)
            p = jnp.exp(s - m)
            p = p * pl.reciprocal(jnp.sum(p, axis=-1, keepdims=True), approx=True)
            yh = jnp.dot(
                p.astype(jnp.bfloat16), v, preferred_element_type=jnp.float32
            )
            y_s[r0:r0 + T, c0:c0 + hd] = yh.astype(jnp.bfloat16)

    x = x + jnp.dot(y_s[...], proj_w_ref[0], preferred_element_type=jnp.float32)

    # ---- MLP (SwiGLU) branch ----
    ms2 = jnp.mean(x * x, axis=-1, keepdims=True)
    xn2 = (x * lax.rsqrt(ms2 + eps) * rms2_ref[0]).astype(jnp.bfloat16)
    ab = jnp.dot(xn2, fc_w_ref[0], preferred_element_type=jnp.float32)
    nh = ab.shape[-1] // 2
    a = ab[:, :nh]
    bgate = ab[:, nh:]
    g = (a * jax.nn.sigmoid(a) * bgate).astype(jnp.bfloat16)
    x = x + jnp.dot(g, mlp_w_ref[0], preferred_element_type=jnp.float32)

    x_s[...] = x

    @pl.when(layer == n_layers - 1)
    def _():
        msf = jnp.mean(x * x, axis=-1, keepdims=True)
        o_ref[...] = (x * lax.rsqrt(msf + eps) * norm_ref[...]).astype(o_ref.dtype)


# ----------------------------- kernel wrappers ------------------------------


def rmsnorm(x2d, gamma, *, tm_target=512):
    M, K = x2d.shape
    tm = _tile(M, tm_target, 8)
    return pl.pallas_call(
        functools.partial(_rmsnorm_kernel, eps=EPS),
        out_shape=jax.ShapeDtypeStruct((M, K), x2d.dtype),
        grid=(M // tm,),
        in_specs=[
            pl.BlockSpec((tm, K), lambda i: (i, 0)),
            pl.BlockSpec((1, K), lambda i: (0, 0)),
        ],
        out_specs=pl.BlockSpec((tm, K), lambda i: (i, 0)),
        compiler_params=pltpu.CompilerParams(dimension_semantics=("parallel",)),
    )(x2d, gamma.reshape(1, K))


def rmsnorm_matmul(x2d, gamma, w, *, out_dtype=jnp.bfloat16, tm_target=256,
                   tn_target=256):
    """o = rmsnorm(x) @ w.  x2d: (M, K) f32, w: (K, N) bf16 -> (M, N) bf16."""
    M, K = x2d.shape
    Kw, N = w.shape
    assert K == Kw
    tm = _tile(M, tm_target, 8)
    tn = _tile(N, tn_target, 128)
    return pl.pallas_call(
        functools.partial(_rmsnorm_matmul_kernel, eps=EPS),
        out_shape=jax.ShapeDtypeStruct((M, N), out_dtype),
        grid=(M // tm, N // tn),
        in_specs=[
            pl.BlockSpec((tm, K), lambda i, j: (i, 0)),
            pl.BlockSpec((1, K), lambda i, j: (0, 0)),
            pl.BlockSpec((K, tn), lambda i, j: (0, j)),
        ],
        out_specs=pl.BlockSpec((tm, tn), lambda i, j: (i, j)),
        scratch_shapes=[pltpu.VMEM((tm, K), jnp.bfloat16)],   # xn cache
        # N axis must stay "arbitrary" so the j==0 cache pass runs first.
        compiler_params=pltpu.CompilerParams(
            dimension_semantics=("parallel", "arbitrary")
        ),
    )(x2d, gamma.reshape(1, K), w)


def matmul_residual(x2d, w, res, *, tm_target=256, tn_target=256,
                    tk_target=512):
    """o = x @ w + res.  Accumulates in the resident f32 output block."""
    M, K = x2d.shape
    Kw, N = w.shape
    assert K == Kw and res.shape == (M, N) and res.dtype == jnp.float32
    tm = _tile(M, tm_target, 8)
    tn = _tile(N, tn_target, 128)
    tk = _tile(K, tk_target, 128)
    return pl.pallas_call(
        _matmul_res_kernel,
        out_shape=jax.ShapeDtypeStruct((M, N), jnp.float32),
        grid=(M // tm, N // tn, K // tk),
        in_specs=[
            pl.BlockSpec((tm, tk), lambda i, j, k: (i, k)),
            pl.BlockSpec((tk, tn), lambda i, j, k: (k, j)),
            pl.BlockSpec((tm, tn), lambda i, j, k: (i, j)),
        ],
        out_specs=pl.BlockSpec((tm, tn), lambda i, j, k: (i, j)),
        compiler_params=pltpu.CompilerParams(
            dimension_semantics=("parallel", "parallel", "arbitrary")
        ),
    )(x2d, w, res)


def swiglu_matmul_residual(ab, w, res, *, tm_target=256, tn_target=256,
                           tk_target=512):
    """o = (silu(a) * b) @ w + res, where ab = concat([a, b], axis=-1)."""
    M, K2 = ab.shape
    K, N = w.shape
    assert K2 == 2 * K and res.shape == (M, N) and res.dtype == jnp.float32
    tm = _tile(M, tm_target, 8)
    tn = _tile(N, tn_target, 128)
    tk = _tile(K, tk_target, 128)
    nkb = K // tk  # number of K blocks; b's blocks live nkb blocks to the right
    return pl.pallas_call(
        _swiglu_matmul_res_kernel,
        out_shape=jax.ShapeDtypeStruct((M, N), jnp.float32),
        grid=(M // tm, N // tn, nkb),
        in_specs=[
            pl.BlockSpec((tm, tk), lambda i, j, k: (i, k)),          # a half
            pl.BlockSpec((tm, tk), lambda i, j, k: (i, k + nkb)),    # b half
            pl.BlockSpec((tk, tn), lambda i, j, k: (k, j)),
            pl.BlockSpec((tm, tn), lambda i, j, k: (i, j)),
        ],
        out_specs=pl.BlockSpec((tm, tn), lambda i, j, k: (i, j)),
        scratch_shapes=[pltpu.VMEM((nkb, tm, tk), jnp.bfloat16)],    # gate cache
        # N axis "arbitrary" so the j==0 gate-cache pass runs first per row blk.
        compiler_params=pltpu.CompilerParams(
            dimension_semantics=("parallel", "arbitrary", "arbitrary")
        ),
    )(ab, ab, w, res)


def attention(qkv3, n_head, n_embd):
    """qkv3: (B, T, 3*C) packed [q | k | v] heads.  Returns (B, T, C)."""
    B, T, threeC = qkv3.shape
    assert threeC == 3 * n_embd
    hd = n_embd // n_head
    scale = 1.0 / math.sqrt(hd)

    if hd % 128 == 0:
        # Flash-style online softmax: one (batch, head, q-tile) per grid point,
        # KV tiles streamed on the innermost axis.  q/k/v are sliced straight
        # out of the packed qkv tensor via index maps.
        tq = _tile(T, 256, 8)
        tkv = _tile(T, 512, 8)
        return pl.pallas_call(
            functools.partial(_flash_attn_kernel, scale=scale),
            out_shape=jax.ShapeDtypeStruct((B, T, n_embd), qkv3.dtype),
            grid=(B, n_head, T // tq, T // tkv),
            in_specs=[
                pl.BlockSpec((1, tq, hd), lambda b, h, qi, kv: (b, qi, h)),
                pl.BlockSpec((1, tkv, hd),
                             lambda b, h, qi, kv: (b, kv, n_head + h)),
                pl.BlockSpec((1, tkv, hd),
                             lambda b, h, qi, kv: (b, kv, 2 * n_head + h)),
            ],
            out_specs=pl.BlockSpec((1, tq, hd), lambda b, h, qi, kv: (b, qi, h)),
            scratch_shapes=[
                pltpu.VMEM((tq, 1), jnp.float32),   # running max
                pltpu.VMEM((tq, 1), jnp.float32),   # running denom
                pltpu.VMEM((tq, hd), jnp.float32),  # running acc
            ],
            compiler_params=pltpu.CompilerParams(
                dimension_semantics=("parallel", "parallel", "parallel",
                                     "arbitrary")
            ),
        )(qkv3, qkv3, qkv3)

    # head_dim < 128: group heads so the block lane dim is a multiple of 128.
    G = max(1, 128 // hd)
    while n_head % G != 0:
        G -= 1
    HG = n_head // G
    gd = G * hd
    assert gd % 128 == 0, (
        "attention head groups must be lane-aligned (G*head_dim % 128 == 0); "
        f"got head_dim={hd}, group={G}"
    )
    return pl.pallas_call(
        functools.partial(_grouped_attn_kernel, heads=G, scale=scale),
        out_shape=jax.ShapeDtypeStruct((B, T, n_embd), qkv3.dtype),
        grid=(B, HG),
        in_specs=[
            pl.BlockSpec((1, T, gd), lambda b, g: (b, 0, g)),
            pl.BlockSpec((1, T, gd), lambda b, g: (b, 0, HG + g)),
            pl.BlockSpec((1, T, gd), lambda b, g: (b, 0, 2 * HG + g)),
        ],
        out_specs=pl.BlockSpec((1, T, gd), lambda b, g: (b, 0, g)),
        compiler_params=pltpu.CompilerParams(
            dimension_semantics=("parallel", "parallel")
        ),
    )(qkv3, qkv3, qkv3)


def fused_llama_forward(tokens, layer_params, norm_scale, *, n_head):
    """Whole transformer as a single pallas_call with a layer grid."""
    B, T, C = tokens.shape
    M = B * T
    L = len(layer_params)
    n_hidden = layer_params[0]["mlp_proj_wT"].shape[0]

    stack = lambda name: jnp.stack([p[name] for p in layer_params], axis=0)
    rms1 = stack("rms1").reshape(L, 1, C)
    rms2 = stack("rms2").reshape(L, 1, C)
    attn_w = stack("c_attn_wT")       # (L, C, 3C)
    proj_w = stack("c_proj_wT")       # (L, C, C)
    fc_w = stack("fc12_wT")           # (L, C, 2*n_hidden)
    mlp_w = stack("mlp_proj_wT")      # (L, n_hidden, C)

    kernel = functools.partial(
        _fused_llama_kernel, B=B, T=T, C=C, n_head=n_head, eps=EPS
    )
    out = pl.pallas_call(
        kernel,
        out_shape=jax.ShapeDtypeStruct((M, C), jnp.float32),
        grid=(L,),
        in_specs=[
            pl.BlockSpec((M, C), lambda l: (0, 0)),
            pl.BlockSpec((1, 1, C), lambda l: (l, 0, 0)),
            pl.BlockSpec((1, C, 3 * C), lambda l: (l, 0, 0)),
            pl.BlockSpec((1, C, C), lambda l: (l, 0, 0)),
            pl.BlockSpec((1, 1, C), lambda l: (l, 0, 0)),
            pl.BlockSpec((1, C, 2 * n_hidden), lambda l: (l, 0, 0)),
            pl.BlockSpec((1, n_hidden, C), lambda l: (l, 0, 0)),
            pl.BlockSpec((1, C), lambda l: (0, 0)),
        ],
        out_specs=pl.BlockSpec((M, C), lambda l: (0, 0)),
        scratch_shapes=[
            pltpu.VMEM((M, C), jnp.float32),    # residual stream carry
            pltpu.VMEM((M, C), jnp.bfloat16),   # attention output staging
        ],
        compiler_params=pltpu.CompilerParams(
            dimension_semantics=("arbitrary",)
        ),
    )(tokens.reshape(M, C), rms1, attn_w, proj_w, rms2, fc_w, mlp_w,
      norm_scale.reshape(1, C))
    return out.reshape(B, T, C)


# ----------------------------- model wrapper -------------------------------


def _fused_path_ok(B, T, C, n_head, n_hidden):
    if C % n_head != 0:
        return False
    hd = C // n_head
    M = B * T
    if hd % 128 != 0 or C % 128 != 0 or M % 8 != 0:
        return False
    if M > 1024 or T > 2048 or B * n_head > 64:
        return False
    # Per-layer bf16 weights are double-buffered across the layer grid.
    w_bytes = 2 * 2 * (C * 3 * C + C * C + 2 * C * n_hidden + n_hidden * C)
    act_bytes = 4 * M * (3 * C + 2 * n_hidden + 4 * C) + 4 * B * n_head * T * T
    return (w_bytes + act_bytes) < 12 * 1024 * 1024


def block_forward(x, p, n_head):
    B, T, C = x.shape
    M = B * T
    x2 = x.reshape(M, C)                                   # f32 residual stream

    # ---- attention branch: rmsnorm fused into qkv matmul ----
    qkv = rmsnorm_matmul(x2, p["rms1"], p["c_attn_wT"])    # (M, 3C) bf16
    y = attention(qkv.reshape(B, T, 3 * C), n_head, C)     # (B, T, C) bf16
    x2 = matmul_residual(y.reshape(M, C), p["c_proj_wT"], x2)   # f32

    # ---- MLP (SwiGLU) branch ----
    ab = rmsnorm_matmul(x2, p["rms2"], p["fc12_wT"])       # (M, 2*n_hidden) bf16
    x2 = swiglu_matmul_residual(ab, p["mlp_proj_wT"], x2)  # f32

    return x2.reshape(B, T, C)


def llama_transformer_forward(tokens, layer_params, norm_scale, *, n_head,
                              use_fused=None):
    B, T, C = tokens.shape
    n_hidden = layer_params[0]["mlp_proj_wT"].shape[0]
    if use_fused is None:
        use_fused = _fused_path_ok(B, T, C, n_head, n_hidden)
    if use_fused:
        return fused_llama_forward(tokens, layer_params, norm_scale,
                                   n_head=n_head)
    h = tokens
    for p in layer_params:
        h = block_forward(h, p, n_head)
    h = rmsnorm(h.reshape(B * T, C), norm_scale).reshape(B, T, C)
    return h


def init_params(key, n_embd, n_head, multiple_of, num_layers,
                w_dtype=jnp.bfloat16):
    hidden_dim = 4 * n_embd
    n_hidden = find_multiple(int(2 * hidden_dim / 3), multiple_of)

    def linear_wT(k, in_f, out_f):
        bound = 1.0 / math.sqrt(in_f)
        return jax.random.uniform(
            k, (in_f, out_f), jnp.float32, -bound, bound
        ).astype(w_dtype)

    layers = []
    for _ in range(num_layers):
        key, k1, k2, k3, k4, k5 = jax.random.split(key, 6)
        fc1 = linear_wT(k3, n_embd, n_hidden)
        fc2 = linear_wT(k4, n_embd, n_hidden)
        layers.append({
            "rms1": jnp.ones((n_embd,), jnp.float32),
            "rms2": jnp.ones((n_embd,), jnp.float32),
            "c_attn_wT": linear_wT(k1, n_embd, 3 * n_embd),
            "c_proj_wT": linear_wT(k2, n_embd, n_embd),
            "fc12_wT": jnp.concatenate([fc1, fc2], axis=1),   # (C, 2*n_hidden)
            "mlp_proj_wT": linear_wT(k5, n_hidden, n_embd),
        })
    norm_scale = jnp.ones((n_embd,), jnp.float32)
    return layers, norm_scale


def _ref_forward(tokens, layer_params, norm_scale, n_head):
    """Pure-JAX f32 reference matching the PyTorch module."""
    def rms(x, g):
        ms = jnp.mean(x * x, axis=-1, keepdims=True)
        return x * lax.rsqrt(ms + EPS) * g

    B, T, C = tokens.shape
    hd = C // n_head
    x = tokens
    for p in layer_params:
        xn = rms(x, p["rms1"])
        qkv = xn @ p["c_attn_wT"].astype(jnp.float32)
        q, k, v = jnp.split(qkv, 3, axis=-1)
        q = q.reshape(B, T, n_head, hd).transpose(0, 2, 1, 3)
        k = k.reshape(B, T, n_head, hd).transpose(0, 2, 1, 3)
        v = v.reshape(B, T, n_head, hd).transpose(0, 2, 1, 3)
        s = (q @ jnp.swapaxes(k, -1, -2)) / math.sqrt(hd)
        att = jax.nn.softmax(s, axis=-1)
        y = (att @ v).transpose(0, 2, 1, 3).reshape(B, T, C)
        x = x + y @ p["c_proj_wT"].astype(jnp.float32)
        xn2 = rms(x, p["rms2"])
        ab = xn2 @ p["fc12_wT"].astype(jnp.float32)
        a, b = jnp.split(ab, 2, axis=-1)
        x = x + (jax.nn.silu(a) * b) @ p["mlp_proj_wT"].astype(jnp.float32)
    return rms(x, norm_scale)


if __name__ == "__main__":
    # small config consistent with LLaMAConfig structure
    n_embd = 256
    n_head = 2            # head_size = 128 -> lane-dense attention blocks
    multiple_of = 128
    n_layers = 32
    first_layer = 30      # -> 2 Blocks, like layers[first_layer:n_layers]
    num_blocks = n_layers - first_layer

    B, T = 2, 8

    key = jax.random.PRNGKey(0)
    k_tok, k_par = jax.random.split(key)
    tokens = jax.random.normal(k_tok, (B, T, n_embd), jnp.float32)

    layer_params, norm_scale = init_params(
        k_par, n_embd, n_head, multiple_of, num_blocks
    )

    fwd_fused = jax.jit(functools.partial(
        llama_transformer_forward, n_head=n_head, use_fused=True))
    fwd_tiled = jax.jit(functools.partial(
        llama_transformer_forward, n_head=n_head, use_fused=False))

    out_fused = jax.block_until_ready(fwd_fused(tokens, layer_params, norm_scale))
    out_tiled = jax.block_until_ready(fwd_tiled(tokens, layer_params, norm_scale))
    out_gold = jax.block_until_ready(
        _ref_forward(tokens, layer_params, norm_scale, n_head))

    assert out_fused.shape == (B, T, n_embd)
    assert out_tiled.shape == (B, T, n_embd)
    assert jnp.isfinite(out_fused).all()
    assert jnp.isfinite(out_tiled).all()
    # fused vs tiled path (both bf16 matmuls): should agree tightly
    assert float(jnp.max(jnp.abs(out_fused - out_tiled))) < 1e-1
    # kernels vs f32 reference: bf16-tolerance agreement
    assert float(jnp.max(jnp.abs(out_fused - out_gold))) < 2e-1
    print("KERNEL_OK")
</pallas_src>

<mosaic_0001>
module attributes {stable_mosaic.version = 11 : i64} {
  func.func @_fused_llama_kernel(%arg0: i32, %arg1: memref<16x256xf32, #tpu.memory_space<vmem>>, %arg2: memref<1x1x256xf32, #tpu.memory_space<vmem>>, %arg3: memref<1x256x768xbf16, #tpu.memory_space<vmem>>, %arg4: memref<1x256x256xbf16, #tpu.memory_space<vmem>>, %arg5: memref<1x1x256xf32, #tpu.memory_space<vmem>>, %arg6: memref<1x256x1536xbf16, #tpu.memory_space<vmem>>, %arg7: memref<1x768x256xbf16, #tpu.memory_space<vmem>>, %arg8: memref<1x256xf32, #tpu.memory_space<vmem>>, %arg9: memref<16x256xf32, #tpu.memory_space<vmem>>, %arg10: memref<16x256xf32, #tpu.memory_space<vmem>>, %arg11: memref<16x256xbf16, #tpu.memory_space<vmem>>) attributes {dimension_semantics = [#tpu.dimension_semantics<arbitrary>], iteration_bounds = array<i64: 2>, scalar_prefetch = 0 : i64, scratch_operands = 2 : i64, tpu.core_type = #tpu.core_type<tc>, window_params = [{pipeline_mode = #tpu.pipeline_mode<synchronous>, transform_indices = @transform_0, window_bounds = array<i64: 16, 256>}, {transform_indices = @transform_1, window_bounds = array<i64: 1, 1, 256>}, {transform_indices = @transform_2, window_bounds = array<i64: 1, 256, 768>}, {transform_indices = @transform_3, window_bounds = array<i64: 1, 256, 256>}, {transform_indices = @transform_4, window_bounds = array<i64: 1, 1, 256>}, {transform_indices = @transform_5, window_bounds = array<i64: 1, 256, 1536>}, {transform_indices = @transform_6, window_bounds = array<i64: 1, 768, 256>}, {pipeline_mode = #tpu.pipeline_mode<synchronous>, transform_indices = @transform_7, window_bounds = array<i64: 1, 256>}, {pipeline_mode = #tpu.pipeline_mode<synchronous>, transform_indices = @transform_8, window_bounds = array<i64: 16, 256>}]} {
    %c0_i32 = arith.constant 0 : i32
    %0 = arith.cmpi eq, %arg0, %c0_i32 : i32
    %1 = arith.extui %0 : i1 to i32
    %c0_i32_0 = arith.constant 0 : i32
    %2 = arith.cmpi ne, %1, %c0_i32_0 : i32
    scf.if %2 {
      %c0_61 = arith.constant 0 : index
      %c0_62 = arith.constant 0 : index
      %144 = vector.load %arg1[%c0_61, %c0_62] : memref<16x256xf32, #tpu.memory_space<vmem>>, vector<16x256xf32>
      %c0_63 = arith.constant 0 : index
      %c0_64 = arith.constant 0 : index
      %145 = vector.load %arg10[%c0_63, %c0_64] : memref<16x256xf32, #tpu.memory_space<vmem>>, vector<16x256xf32>
      tpu.vector_store %arg10[%c0_63, %c0_64], %144 {strides = array<i32>} : memref<16x256xf32, #tpu.memory_space<vmem>>, vector<16x256xf32>,
    } else {
    }
    %c0 = arith.constant 0 : index
    %c0_1 = arith.constant 0 : index
    %3 = vector.load %arg10[%c0, %c0_1] : memref<16x256xf32, #tpu.memory_space<vmem>>, vector<16x256xf32>
    %4 = arith.mulf %3, %3 : vector<16x256xf32>
    %cst = arith.constant dense<0.000000e+00> : vector<16xf32>
    %5 = vector.multi_reduction <add>, %4, %cst [1] : vector<16x256xf32> to vector<16xf32>
    %6 = vector.shape_cast %5 : vector<16xf32> to vector<16x1xf32>
    %cst_2 = arith.constant 2.560000e+02 : f32
    %7 = vector.broadcast %cst_2 : f32 to vector<16x1xf32>
    %8 = arith.divf %6, %7 : vector<16x1xf32>
    %cst_3 = arith.constant 9.99999974E-6 : f32
    %9 = vector.broadcast %cst_3 : f32 to vector<16x1xf32>
    %10 = arith.addf %8, %9 : vector<16x1xf32>
    %11 = math.rsqrt %10 : vector<16x1xf32>
    %12 = vector.broadcast %11 : vector<16x1xf32> to vector<16x256xf32>
    %13 = arith.mulf %3, %12 : vector<16x256xf32>
    %c0_4 = arith.constant 0 : index
    %c0_5 = arith.constant 0 : index
    %c0_6 = arith.constant 0 : index
    %14 = vector.load %arg2[%c0_4, %c0_5, %c0_6] : memref<1x1x256xf32, #tpu.memory_space<vmem>>, vector<1x1x256xf32>
    %15 = vector.shape_cast %14 : vector<1x1x256xf32> to vector<1x256xf32>
    %16 = vector.broadcast %15 : vector<1x256xf32> to vector<16x256xf32>
    %17 = arith.mulf %13, %16 : vector<16x256xf32>
    %18 = arith.truncf %17 : vector<16x256xf32> to vector<16x256xbf16>
    %c0_7 = arith.constant 0 : index
    %c0_8 = arith.constant 0 : index
    %c0_9 = arith.constant 0 : index
    %19 = vector.load %arg3[%c0_7, %c0_8, %c0_9] : memref<1x256x768xbf16, #tpu.memory_space<vmem>>, vector<1x256x768xbf16>
    %20 = vector.shape_cast %19 : vector<1x256x768xbf16> to vector<256x768xbf16>
    %cst_10 = arith.constant dense<0.000000e+00> : vector<16x768xf32>
    %21 = tpu.matmul %18, %20, %cst_10 {dimension_numbers = #tpu.dot_dimension_numbers<[1], [0], [0], [1], [0, 0, 1, 1], [], []>} : vector<16x256xbf16>, vector<256x768xbf16>, vector<16x768xf32> -> vector<16x768xf32>
    %22 = arith.truncf %21 : vector<16x768xf32> to vector<16x768xbf16>
    %23 = vector.extract_strided_slice %22 {offsets = [0, 0], sizes = [8, 128], strides = [1, 1]} : vector<16x768xbf16> to vector<8x128xbf16>
    %24 = vector.extract_strided_slice %22 {offsets = [0, 256], sizes = [8, 128], strides = [1, 1]} : vector<16x768xbf16> to vector<8x128xbf16>
    %25 = vector.extract_strided_slice %22 {offsets = [0, 512], sizes = [8, 128], strides = [1, 1]} : vector<16x768xbf16> to vector<8x128xbf16>
    %cst_11 = arith.constant dense<0.000000e+00> : vector<8x8xf32>
    %26 = tpu.matmul %23, %24, %cst_11 {dimension_numbers = #tpu.dot_dimension_numbers<[1], [1], [0], [0], [0, 0, 1, 0], [], []>} : vector<8x128xbf16>, vector<8x128xbf16>, vector<8x8xf32> -> vector<8x8xf32>
    %cst_12 = arith.constant 0.0883883461 : f32
    %27 = vector.broadcast %cst_12 : f32 to vector<8x8xf32>
    %28 = arith.mulf %26, %27 : vector<8x8xf32>
    %cst_13 = arith.constant dense<0xFF800000> : vector<8xf32>
    %29 = vector.multi_reduction <maximumf>, %28, %cst_13 [1] : vector<8x8xf32> to vector<8xf32>
    %30 = vector.shape_cast %29 : vector<8xf32> to vector<8x1xf32>
    %31 = vector.broadcast %30 : vector<8x1xf32> to vector<8x8xf32>
    %32 = arith.subf %28, %31 : vector<8x8xf32>
    %33 = math.exp %32 : vector<8x8xf32>
    %cst_14 = arith.constant dense<0.000000e+00> : vector<8xf32>
    %34 = vector.multi_reduction <add>, %33, %cst_14 [1] : vector<8x8xf32> to vector<8xf32>
    %35 = vector.shape_cast %34 : vector<8xf32> to vector<8x1xf32>
    %36 = tpu.reciprocal %35 {approx = true} : vector<8x1xf32> -> vector<8x1xf32>
    %37 = vector.broadcast %36 : vector<8x1xf32> to vector<8x8xf32>
    %38 = arith.mulf %33, %37 : vector<8x8xf32>
    %39 = arith.truncf %38 : vector<8x8xf32> to vector<8x8xbf16>
    %cst_15 = arith.constant dense<0.000000e+00> : vector<8x128xf32>
    %40 = tpu.matmul %39, %25, %cst_15 {dimension_numbers = #tpu.dot_dimension_numbers<[1], [0], [0], [1], [0, 0, 1, 1], [], []>} : vector<8x8xbf16>, vector<8x128xbf16>, vector<8x128xf32> -> vector<8x128xf32>
    %41 = arith.truncf %40 : vector<8x128xf32> to vector<8x128xbf16>
    %c0_16 = arith.constant 0 : index
    %c0_17 = arith.constant 0 : index
    %42 = vector.load %arg11[%c0_16, %c0_17] : memref<16x256xbf16, #tpu.memory_space<vmem>>, vector<8x128xbf16>
    tpu.vector_store %arg11[%c0_16, %c0_17], %41 {strides = array<i32>} : memref<16x256xbf16, #tpu.memory_space<vmem>>, vector<8x128xbf16>,
    %43 = vector.extract_strided_slice %22 {offsets = [0, 128], sizes = [8, 128], strides = [1, 1]} : vector<16x768xbf16> to vector<8x128xbf16>
    %44 = vector.extract_strided_slice %22 {offsets = [0, 384], sizes = [8, 128], strides = [1, 1]} : vector<16x768xbf16> to vector<8x128xbf16>
    %45 = vector.extract_strided_slice %22 {offsets = [0, 640], sizes = [8, 128], strides = [1, 1]} : vector<16x768xbf16> to vector<8x128xbf16>
    %cst_18 = arith.constant dense<0.000000e+00> : vector<8x8xf32>
    %46 = tpu.matmul %43, %44, %cst_18 {dimension_numbers = #tpu.dot_dimension_numbers<[1], [1], [0], [0], [0, 0, 1, 0], [], []>} : vector<8x128xbf16>, vector<8x128xbf16>, vector<8x8xf32> -> vector<8x8xf32>
    %cst_19 = arith.constant 0.0883883461 : f32
    %47 = vector.broadcast %cst_19 : f32 to vector<8x8xf32>
    %48 = arith.mulf %46, %47 : vector<8x8xf32>
    %cst_20 = arith.constant dense<0xFF800000> : vector<8xf32>
    %49 = vector.multi_reduction <maximumf>, %48, %cst_20 [1] : vector<8x8xf32> to vector<8xf32>
    %50 = vector.shape_cast %49 : vector<8xf32> to vector<8x1xf32>
    %51 = vector.broadcast %50 : vector<8x1xf32> to vector<8x8xf32>
    %52 = arith.subf %48, %51 : vector<8x8xf32>
    %53 = math.exp %52 : vector<8x8xf32>
    %cst_21 = arith.constant dense<0.000000e+00> : vector<8xf32>
    %54 = vector.multi_reduction <add>, %53, %cst_21 [1] : vector<8x8xf32> to vector<8xf32>
    %55 = vector.shape_cast %54 : vector<8xf32> to vector<8x1xf32>
    %56 = tpu.reciprocal %55 {approx = true} : vector<8x1xf32> -> vector<8x1xf32>
    %57 = vector.broadcast %56 : vector<8x1xf32> to vector<8x8xf32>
    %58 = arith.mulf %53, %57 : vector<8x8xf32>
    %59 = arith.truncf %58 : vector<8x8xf32> to vector<8x8xbf16>
    %cst_22 = arith.constant dense<0.000000e+00> : vector<8x128xf32>
    %60 = tpu.matmul %59, %45, %cst_22 {dimension_numbers = #tpu.dot_dimension_numbers<[1], [0], [0], [1], [0, 0, 1, 1], [], []>} : vector<8x8xbf16>, vector<8x128xbf16>, vector<8x128xf32> -> vector<8x128xf32>
    %61 = arith.truncf %60 : vector<8x128xf32> to vector<8x128xbf16>
    %c0_23 = arith.constant 0 : index
    %c128 = arith.constant 128 : index
    %62 = vector.load %arg11[%c0_23, %c128] : memref<16x256xbf16, #tpu.memory_space<vmem>>, vector<8x128xbf16>
    tpu.vector_store %arg11[%c0_23, %c128], %61 {strides = array<i32>} : memref<16x256xbf16, #tpu.memory_space<vmem>>, vector<8x128xbf16>,
    %63 = vector.extract_strided_slice %22 {offsets = [8, 0], sizes = [8, 128], strides = [1, 1]} : vector<16x768xbf16> to vector<8x128xbf16>
    %64 = vector.extract_strided_slice %22 {offsets = [8, 256], sizes = [8, 128], strides = [1, 1]} : vector<16x768xbf16> to vector<8x128xbf16>
    %65 = vector.extract_strided_slice %22 {offsets = [8, 512], sizes = [8, 128], strides = [1, 1]} : vector<16x768xbf16> to vector<8x128xbf16>
    %cst_24 = arith.constant dense<0.000000e+00> : vector<8x8xf32>
    %66 = tpu.matmul %63, %64, %cst_24 {dimension_numbers = #tpu.dot_dimension_numbers<[1], [1], [0], [0], [0, 0, 1, 0], [], []>} : vector<8x128xbf16>, vector<8x128xbf16>, vector<8x8xf32> -> vector<8x8xf32>
    %cst_25 = arith.constant 0.0883883461 : f32
    %67 = vector.broadcast %cst_25 : f32 to vector<8x8xf32>
    %68 = arith.mulf %66, %67 : vector<8x8xf32>
    %cst_26 = arith.constant dense<0xFF800000> : vector<8xf32>
    %69 = vector.multi_reduction <maximumf>, %68, %cst_26 [1] : vector<8x8xf32> to vector<8xf32>
    %70 = vector.shape_cast %69 : vector<8xf32> to vector<8x1xf32>
    %71 = vector.broadcast %70 : vector<8x1xf32> to vector<8x8xf32>
    %72 = arith.subf %68, %71 : vector<8x8xf32>
    %73 = math.exp %72 : vector<8x8xf32>
    %cst_27 = arith.constant dense<0.000000e+00> : vector<8xf32>
    %74 = vector.multi_reduction <add>, %73, %cst_27 [1] : vector<8x8xf32> to vector<8xf32>
    %75 = vector.shape_cast %74 : vector<8xf32> to vector<8x1xf32>
    %76 = tpu.reciprocal %75 {approx = true} : vector<8x1xf32> -> vector<8x1xf32>
    %77 = vector.broadcast %76 : vector<8x1xf32> to vector<8x8xf32>
    %78 = arith.mulf %73, %77 : vector<8x8xf32>
    %79 = arith.truncf %78 : vector<8x8xf32> to vector<8x8xbf16>
    %cst_28 = arith.constant dense<0.000000e+00> : vector<8x128xf32>
    %80 = tpu.matmul %79, %65, %cst_28 {dimension_numbers = #tpu.dot_dimension_numbers<[1], [0], [0], [1], [0, 0, 1, 1], [], []>} : vector<8x8xbf16>, vector<8x128xbf16>, vector<8x128xf32> -> vector<8x128xf32>
    %81 = arith.truncf %80 : vector<8x128xf32> to vector<8x128xbf16>
    %c8 = arith.constant 8 : index
    %c0_29 = arith.constant 0 : index
    %82 = vector.load %arg11[%c8, %c0_29] : memref<16x256xbf16, #tpu.memory_space<vmem>>, vector<8x128xbf16>
    tpu.vector_store %arg11[%c8, %c0_29], %81 {strides = array<i32>} : memref<16x256xbf16, #tpu.memory_space<vmem>>, vector<8x128xbf16>,
    %83 = vector.extract_strided_slice %22 {offsets = [8, 128], sizes = [8, 128], strides = [1, 1]} : vector<16x768xbf16> to vector<8x128xbf16>
    %84 = vector.extract_strided_slice %22 {offsets = [8, 384], sizes = [8, 128], strides = [1, 1]} : vector<16x768xbf16> to vector<8x128xbf16>
    %85 = vector.extract_strided_slice %22 {offsets = [8, 640], sizes = [8, 128], strides = [1, 1]} : vector<16x768xbf16> to vector<8x128xbf16>
    %cst_30 = arith.constant dense<0.000000e+00> : vector<8x8xf32>
    %86 = tpu.matmul %83, %84, %cst_30 {dimension_numbers = #tpu.dot_dimension_numbers<[1], [1], [0], [0], [0, 0, 1, 0], [], []>} : vector<8x128xbf16>, vector<8x128xbf16>, vector<8x8xf32> -> vector<8x8xf32>
    %cst_31 = arith.constant 0.0883883461 : f32
    %87 = vector.broadcast %cst_31 : f32 to vector<8x8xf32>
    %88 = arith.mulf %86, %87 : vector<8x8xf32>
    %cst_32 = arith.constant dense<0xFF800000> : vector<8xf32>
    %89 = vector.multi_reduction <maximumf>, %88, %cst_32 [1] : vector<8x8xf32> to vector<8xf32>
    %90 = vector.shape_cast %89 : vector<8xf32> to vector<8x1xf32>
    %91 = vector.broadcast %90 : vector<8x1xf32> to vector<8x8xf32>
    %92 = arith.subf %88, %91 : vector<8x8xf32>
    %93 = math.exp %92 : vector<8x8xf32>
    %cst_33 = arith.constant dense<0.000000e+00> : vector<8xf32>
    %94 = vector.multi_reduction <add>, %93, %cst_33 [1] : vector<8x8xf32> to vector<8xf32>
    %95 = vector.shape_cast %94 : vector<8xf32> to vector<8x1xf32>
    %96 = tpu.reciprocal %95 {approx = true} : vector<8x1xf32> -> vector<8x1xf32>
    %97 = vector.broadcast %96 : vector<8x1xf32> to vector<8x8xf32>
    %98 = arith.mulf %93, %97 : vector<8x8xf32>
    %99 = arith.truncf %98 : vector<8x8xf32> to vector<8x8xbf16>
    %cst_34 = arith.constant dense<0.000000e+00> : vector<8x128xf32>
    %100 = tpu.matmul %99, %85, %cst_34 {dimension_numbers = #tpu.dot_dimension_numbers<[1], [0], [0], [1], [0, 0, 1, 1], [], []>} : vector<8x8xbf16>, vector<8x128xbf16>, vector<8x128xf32> -> vector<8x128xf32>
    %101 = arith.truncf %100 : vector<8x128xf32> to vector<8x128xbf16>
    %c8_35 = arith.constant 8 : index
    %c128_36 = arith.constant 128 : index
    %102 = vector.load %arg11[%c8_35, %c128_36] : memref<16x256xbf16, #tpu.memory_space<vmem>>, vector<8x128xbf16>
    tpu.vector_store %arg11[%c8_35, %c128_36], %101 {strides = array<i32>} : memref<16x256xbf16, #tpu.memory_space<vmem>>, vector<8x128xbf16>,
    %c0_37 = arith.constant 0 : index
    %c0_38 = arith.constant 0 : index
    %103 = vector.load %arg11[%c0_37, %c0_38] : memref<16x256xbf16, #tpu.memory_space<vmem>>, vector<16x256xbf16>
    %c0_39 = arith.constant 0 : index
    %c0_40 = arith.constant 0 : index
    %c0_41 = arith.constant 0 : index
    %104 = vector.load %arg4[%c0_39, %c0_40, %c0_41] : memref<1x256x256xbf16, #tpu.memory_space<vmem>>, vector<1x256x256xbf16>
    %105 = vector.shape_cast %104 : vector<1x256x256xbf16> to vector<256x256xbf16>
    %cst_42 = arith.constant dense<0.000000e+00> : vector<16x256xf32>
    %106 = tpu.matmul %103, %105, %cst_42 {dimension_numbers = #tpu.dot_dimension_numbers<[1], [0], [0], [1], [0, 0, 1, 1], [], []>} : vector<16x256xbf16>, vector<256x256xbf16>, vector<16x256xf32> -> vector<16x256xf32>
    %107 = arith.addf %3, %106 : vector<16x256xf32>
    %108 = arith.mulf %107, %107 : vector<16x256xf32>
    %cst_43 = arith.constant dense<0.000000e+00> : vector<16xf32>
    %109 = vector.multi_reduction <add>, %108, %cst_43 [1] : vector<16x256xf32> to vector<16xf32>
    %110 = vector.shape_cast %109 : vector<16xf32> to vector<16x1xf32>
    %cst_44 = arith.constant 2.560000e+02 : f32
    %111 = vector.broadcast %cst_44 : f32 to vector<16x1xf32>
    %112 = arith.divf %110, %111 : vector<16x1xf32>
    %cst_45 = arith.constant 9.99999974E-6 : f32
    %113 = vector.broadcast %cst_45 : f32 to vector<16x1xf32>
    %114 = arith.addf %112, %113 : vector<16x1xf32>
    %115 = math.rsqrt %114 : vector<16x1xf32>
    %116 = vector.broadcast %115 : vector<16x1xf32> to vector<16x256xf32>
    %117 = arith.mulf %107, %116 : vector<16x256xf32>
    %c0_46 = arith.constant 0 : index
    %c0_47 = arith.constant 0 : index
    %c0_48 = arith.constant 0 : index
    %118 = vector.load %arg5[%c0_46, %c0_47, %c0_48] : memref<1x1x256xf32, #tpu.memory_space<vmem>>, vector<1x1x256xf32>
    %119 = vector.shape_cast %118 : vector<1x1x256xf32> to vector<1x256xf32>
    %120 = vector.broadcast %119 : vector<1x256xf32> to vector<16x256xf32>
    %121 = arith.mulf %117, %120 : vector<16x256xf32>
    %122 = arith.truncf %121 : vector<16x256xf32> to vector<16x256xbf16>
    %c0_49 = arith.constant 0 : index
    %c0_50 = arith.constant 0 : index
    %c0_51 = arith.constant 0 : index
    %123 = vector.load %arg6[%c0_49, %c0_50, %c0_51] : memref<1x256x1536xbf16, #tpu.memory_space<vmem>>, vector<1x256x1536xbf16>
    %124 = vector.shape_cast %123 : vector<1x256x1536xbf16> to vector<256x1536xbf16>
    %cst_52 = arith.constant dense<0.000000e+00> : vector<16x1536xf32>
    %125 = tpu.matmul %122, %124, %cst_52 {dimension_numbers = #tpu.dot_dimension_numbers<[1], [0], [0], [1], [0, 0, 1, 1], [], []>} : vector<16x256xbf16>, vector<256x1536xbf16>, vector<16x1536xf32> -> vector<16x1536xf32>
    %126 = vector.extract_strided_slice %125 {offsets = [0, 0], sizes = [16, 768], strides = [1, 1]} : vector<16x1536xf32> to vector<16x768xf32>
    %127 = vector.extract_strided_slice %125 {offsets = [0, 768], sizes = [16, 768], strides = [1, 1]} : vector<16x1536xf32> to vector<16x768xf32>
    %128 = arith.negf %126 : vector<16x768xf32>
    %129 = math.exp %128 : vector<16x768xf32>
    %cst_53 = arith.constant 1.000000e+00 : f32
    %130 = vector.broadcast %cst_53 : f32 to vector<16x768xf32>
    %131 = arith.addf %130, %129 : vector<16x768xf32>
    %132 = arith.divf %130, %131 : vector<16x768xf32>
    %133 = arith.mulf %126, %132 : vector<16x768xf32>
    %134 = arith.mulf %133, %127 : vector<16x768xf32>
    %135 = arith.truncf %134 : vector<16x768xf32> to vector<16x768xbf16>
    %c0_54 = arith.constant 0 : index
    %c0_55 = arith.constant 0 : index
    %c0_56 = arith.constant 0 : index
    %136 = vector.load %arg7[%c0_54, %c0_55, %c0_56] : memref<1x768x256xbf16, #tpu.memory_space<vmem>>, vector<1x768x256xbf16>
    %137 = vector.shape_cast %136 : vector<1x768x256xbf16> to vector<768x256xbf16>
    %cst_57 = arith.constant dense<0.000000e+00> : vector<16x256xf32>
    %138 = tpu.matmul %135, %137, %cst_57 {dimension_numbers = #tpu.dot_dimension_numbers<[1], [0], [0], [1], [0, 0, 1, 1], [], []>} : vector<16x768xbf16>, vector<768x256xbf16>, vector<16x256xf32> -> vector<16x256xf32>
    %139 = arith.addf %107, %138 : vector<16x256xf32>
    %c0_58 = arith.constant 0 : index
    %c0_59 = arith.constant 0 : index
    %140 = vector.load %arg10[%c0_58, %c0_59] : memref<16x256xf32, #tpu.memory_space<vmem>>, vector<16x256xf32>
    tpu.vector_store %arg10[%c0_58, %c0_59], %139 {strides = array<i32>} : memref<16x256xf32, #tpu.memory_space<vmem>>, vector<16x256xf32>,
    %c1_i32 = arith.constant 1 : i32
    %141 = arith.cmpi eq, %arg0, %c1_i32 : i32
    %142 = arith.extui %141 : i1 to i32
    %c0_i32_60 = arith.constant 0 : i32
    %143 = arith.cmpi ne, %142, %c0_i32_60 : i32
    scf.if %143 {
      %144 = arith.mulf %139, %139 : vector<16x256xf32>
      %cst_61 = arith.constant dense<0.000000e+00> : vector<16xf32>
      %145 = vector.multi_reduction <add>, %144, %cst_61 [1] : vector<16x256xf32> to vector<16xf32>
      %146 = vector.shape_cast %145 : vector<16xf32> to vector<16x1xf32>
      %cst_62 = arith.constant 2.560000e+02 : f32
      %147 = vector.broadcast %cst_62 : f32 to vector<16x1xf32>
      %148 = arith.divf %146, %147 : vector<16x1xf32>
      %cst_63 = arith.constant 9.99999974E-6 : f32
      %149 = vector.broadcast %cst_63 : f32 to vector<16x1xf32>
      %150 = arith.addf %148, %149 : vector<16x1xf32>
      %151 = math.rsqrt %150 : vector<16x1xf32>
      %152 = vector.broadcast %151 : vector<16x1xf32> to vector<16x256xf32>
      %153 = arith.mulf %139, %152 : vector<16x256xf32>
      %c0_64 = arith.constant 0 : index
      %c0_65 = arith.constant 0 : index
      %154 = vector.load %arg8[%c0_64, %c0_65] : memref<1x256xf32, #tpu.memory_space<vmem>>, vector<1x256xf32>
      %155 = vector.broadcast %154 : vector<1x256xf32> to vector<16x256xf32>
      %156 = arith.mulf %153, %155 : vector<16x256xf32>
      %c0_66 = arith.constant 0 : index
      %c0_67 = arith.constant 0 : index
      %157 = vector.load %arg9[%c0_66, %c0_67] : memref<16x256xf32, #tpu.memory_space<vmem>>, vector<16x256xf32>
      tpu.vector_store %arg9[%c0_66, %c0_67], %156 {strides = array<i32>} : memref<16x256xf32, #tpu.memory_space<vmem>>, vector<16x256xf32>,
    } else {
    }
    return
  }
  func.func @transform_0(%arg0: i32) -> (i32, i32) {
    %c0_i32 = arith.constant 0 : i32
    %c0_i32_0 = arith.constant 0 : i32
    %c0_i32_1 = arith.constant 0 : i32
    return %c0_i32, %c0_i32_0 : i32, i32
  }
  func.func @transform_1(%arg0: i32) -> (i32, i32, i32) {
    %c0_i32 = arith.constant 0 : i32
    %c0_i32_0 = arith.constant 0 : i32
    %c0_i32_1 = arith.constant 0 : i32
    return %arg0, %c0_i32, %c0_i32_0 : i32, i32, i32
  }
  func.func @transform_2(%arg0: i32) -> (i32, i32, i32) {
    %c0_i32 = arith.constant 0 : i32
    %c0_i32_0 = arith.constant 0 : i32
    %c0_i32_1 = arith.constant 0 : i32
    return %arg0, %c0_i32, %c0_i32_0 : i32, i32, i32
  }
  func.func @transform_3(%arg0: i32) -> (i32, i32, i32) {
    %c0_i32 = arith.constant 0 : i32
    %c0_i32_0 = arith.constant 0 : i32
    %c0_i32_1 = arith.constant 0 : i32
    return %arg0, %c0_i32, %c0_i32_0 : i32, i32, i32
  }
  func.func @transform_4(%arg0: i32) -> (i32, i32, i32) {
    %c0_i32 = arith.constant 0 : i32
    %c0_i32_0 = arith.constant 0 : i32
    %c0_i32_1 = arith.constant 0 : i32
    return %arg0, %c0_i32, %c0_i32_0 : i32, i32, i32
  }
  func.func @transform_5(%arg0: i32) -> (i32, i32, i32) {
    %c0_i32 = arith.constant 0 : i32
    %c0_i32_0 = arith.constant 0 : i32
    %c0_i32_1 = arith.constant 0 : i32
    return %arg0, %c0_i32, %c0_i32_0 : i32, i32, i32
  }
  func.func @transform_6(%arg0: i32) -> (i32, i32, i32) {
    %c0_i32 = arith.constant 0 : i32
    %c0_i32_0 = arith.constant 0 : i32
    %c0_i32_1 = arith.constant 0 : i32
    return %arg0, %c0_i32, %c0_i32_0 : i32, i32, i32
  }
  func.func @transform_7(%arg0: i32) -> (i32, i32) {
    %c0_i32 = arith.constant 0 : i32
    %c0_i32_0 = arith.constant 0 : i32
    %c0_i32_1 = arith.constant 0 : i32
    return %c0_i32, %c0_i32_0 : i32, i32
  }
  func.func @transform_8(%arg0: i32) -> (i32, i32) {
    %c0_i32 = arith.constant 0 : i32
    %c0_i32_0 = arith.constant 0 : i32
    %c0_i32_1 = arith.constant 0 : i32
    return %c0_i32, %c0_i32_0 : i32, i32
  }
}

</mosaic_0001>

<llo_original>
// kernel: llama_transformer_forward.1
$region0: #{llama_transformer_forward.1}
  #allocation0 [shape = 'u32[]', space=smem, size = 0x4, offset = 0x4, fixed_abs, tag = 'smem constant byte address 0x4 - core index']
  #allocation1 [shape = 'u32[144,128]{1,0:T(1,128)}', space=vmem, size = 0x12000, scoped, tag = 'internal scratch']
  #allocation2 [shape = 'f32[16,256]{1,0:T(8,128)}', space=vmem, size = 0x4000, scoped, tag = 'scratch operand']
  #allocation3 [shape = 'bf16[16,256]{1,0:T(16,128)(2,1)}', space=vmem, size = 0x2000, scoped, tag = 'scratch operand']
  %s0 = inlined_call_operand.vmem [shape: f32[16,256], index: 0, kind: input, shape index: {}]
  %s1 = inlined_call_operand.vmem [shape: f32[2,1,256], index: 1, kind: input, shape index: {}]
  %s2 = inlined_call_operand.vmem [shape: bf16[2,256,768], index: 2, kind: input, shape index: {}]
  %s3 = inlined_call_operand.vmem [shape: bf16[2,256,256], index: 3, kind: input, shape index: {}]
  %s4 = inlined_call_operand.vmem [shape: f32[2,1,256], index: 4, kind: input, shape index: {}]
  %s5 = inlined_call_operand.vmem [shape: bf16[2,256,1536], index: 5, kind: input, shape index: {}]
  %s6 = inlined_call_operand.vmem [shape: bf16[2,768,256], index: 6, kind: input, shape index: {}]
  %s7 = inlined_call_operand.vmem [shape: f32[1,256], index: 7, kind: input, shape index: {}]
  %s8 = inlined_call_operand.hbm [shape: f32[16,256], index: 8, kind: output, shape index: {}]
  %s9 = sld [smem:[#allocation0]]
  $region73: #{llama_transformer_forward.1} parent=0
    _
  %s11 = ssub.s32 1, %s9
  %s12 = scalar_select 0, %s11, %s9
  $region1: #{llama_transformer_forward.1} parent=0
    #allocation4 [shape = 'u8[16384]{0}', space=vmem, size = 0x4000, scoped, tag = 'output window, operand 0, single buffered']
    #allocation5 [shape = 's32[2]{0}', space=sflag, size = 0x8, scoped, tag = 'scoped memory for llama_transformer_forward.1']
    %13 = vsyncpa [#allocation5], 0
    loop: start=0, step=1, limit=4
    $region2: #{llama_transformer_forward.1} parent=1 // loop_pre_header
      _
    $region3: #{llama_transformer_forward.1} parent=1 // loop_header
      %s15 = sphi 0, %s19
      %p16 = scmp.ge.s32.totalorder %s15, 4
      %s23 = sphi 0, %s23
      %s25 = sphi 0, %s23
      %s26 = sphi 0, %s25
      %s40 = sphi 0, %s26
      %s46 = sphi 0, %s48
      %s49 = sphi 0, %s46
      %s50 = sphi 0, %s49
      %s66 = sphi 0, %s50
      %s72 = sphi 0, %s74
      %s75 = sphi 0, %s72
      %s76 = sphi 0, %s75
      %s92 = sphi 0, %s76
      %s98 = sphi 0, %s100
      %s101 = sphi 0, %s98
      %s102 = sphi 0, %s101
      %s118 = sphi 0, %s102
      %s124 = sphi 0, %s126
      %s127 = sphi 0, %s124
      %s128 = sphi 0, %s127
      %s144 = sphi 0, %s128
      %s150 = sphi 0, %s152
      %s153 = sphi 0, %s150
      %s154 = sphi 0, %s153
      %s170 = sphi 0, %s154
      %s176 = sphi 0, %s178
      %s179 = sphi 0, %s176
      %s180 = sphi 0, %s179
      %s196 = sphi 0, %s180
      %s200 = sphi 0, %s200
      %s202 = sphi 0, %s200
      %s203 = sphi 0, %s202
      %s217 = sphi 0, %s203
      %s221 = sphi 0, %s221
      %s223 = sphi 0, %s221
      %s224 = sphi 0, %s223
      %s238 = sphi 0, %s224
    $region4: #{llama_transformer_forward.1} parent=1 // loop_header_branch
      %18 = sbr.rel (%p16) target = $region8
    $region5: #{llama_transformer_forward.1} parent=1 // loop_body
      %s20 = ssub.s32 %s15, 1
      %s21 = ssub.s32 %s15, 2
      %s22 = sadd.s32 %s15, 1
      %s24 = sadd.s32 %s23, 1
      %p27 = scmp.eq.s32.totalorder %s15, 1
      %p28 = scmp.ne.s32.totalorder %s23, %s25
      %p29 = scmp.eq.s32.totalorder %s15, 0
      %p30 = por %p28, %p29
      %p31 = scmp.ne.s32.totalorder %s23, %s25
      %p32 = scmp.eq.s32.totalorder %s20, 1
      %p33 = por %p31, %p32
      %p34 = scmp.ne.s32.totalorder %s25, %s26
      %p35 = scmp.eq.s32.totalorder %s20, 0
      %p36 = por %p34, %p35
      %p37 = scmp.ne.s32.totalorder %s25, %s26
      %p38 = scmp.eq.s32.totalorder %s21, 1
      %p39 = por %p37, %p38
      %p41 = scmp.ne.s32.totalorder %s26, %s40
      %p42 = scmp.eq.s32.totalorder %s21, 0
      %p43 = por %p41, %p42
      %s44 = ssub.s32 %s15, %s22
      %p45 = scmp.eq.s32.totalorder %s44, 0
      %s47 = sadd.s32 %s46, 1
      %s48 = scalar_select %p45, %s46, %s47
      %p51 = pneg %p45
      %p52 = scmp.eq.s32.totalorder %s15, 1
      %p53 = por %p51, %p52
      %p54 = scmp.ne.s32.totalorder %s46, %s49
      %p55 = scmp.eq.s32.totalorder %s15, 0
      %p56 = por %p54, %p55
      %p57 = scmp.ne.s32.totalorder %s46, %s49
      %p58 = scmp.eq.s32.totalorder %s20, 1
      %p59 = por %p57, %p58
      %p60 = scmp.ne.s32.totalorder %s49, %s50
      %p61 = scmp.eq.s32.totalorder %s20, 0
      %p62 = por %p60, %p61
      %p63 = scmp.ne.s32.totalorder %s49, %s50
      %p64 = scmp.eq.s32.totalorder %s21, 1
      %p65 = por %p63, %p64
      %p67 = scmp.ne.s32.totalorder %s50, %s66
      %p68 = scmp.eq.s32.totalorder %s21, 0
      %p69 = por %p67, %p68
      %s70 = ssub.s32 %s15, %s22
      %p71 = scmp.eq.s32.totalorder %s70, 0
      %s73 = sadd.s32 %s72, 1
      %s74 = scalar_select %p71, %s72, %s73
      %p77 = pneg %p71
      %p78 = scmp.eq.s32.totalorder %s15, 1
      %p79 = por %p77, %p78
      %p80 = scmp.ne.s32.totalorder %s72, %s75
      %p81 = scmp.eq.s32.totalorder %s15, 0
      %p82 = por %p80, %p81
      %p83 = scmp.ne.s32.totalorder %s72, %s75
      %p84 = scmp.eq.s32.totalorder %s20, 1
      %p85 = por %p83, %p84
      %p86 = scmp.ne.s32.totalorder %s75, %s76
      %p87 = scmp.eq.s32.totalorder %s20, 0
      %p88 = por %p86, %p87
      %p89 = scmp.ne.s32.totalorder %s75, %s76
      %p90 = scmp.eq.s32.totalorder %s21, 1
      %p91 = por %p89, %p90
      %p93 = scmp.ne.s32.totalorder %s76, %s92
      %p94 = scmp.eq.s32.totalorder %s21, 0
      %p95 = por %p93, %p94
      %s96 = ssub.s32 %s15, %s22
      %p97 = scmp.eq.s32.totalorder %s96, 0
      %s99 = sadd.s32 %s98, 1
      %s100 = scalar_select %p97, %s98, %s99
      %p103 = pneg %p97
      %p104 = scmp.eq.s32.totalorder %s15, 1
      %p105 = por %p103, %p104
      %p106 = scmp.ne.s32.totalorder %s98, %s101
      %p107 = scmp.eq.s32.totalorder %s15, 0
      %p108 = por %p106, %p107
      %p109 = scmp.ne.s32.totalorder %s98, %s101
      %p110 = scmp.eq.s32.totalorder %s20, 1
      %p111 = por %p109, %p110
      %p112 = scmp.ne.s32.totalorder %s101, %s102
      %p113 = scmp.eq.s32.totalorder %s20, 0
      %p114 = por %p112, %p113
      %p115 = scmp.ne.s32.totalorder %s101, %s102
      %p116 = scmp.eq.s32.totalorder %s21, 1
      %p117 = por %p115, %p116
      %p119 = scmp.ne.s32.totalorder %s102, %s118
      %p120 = scmp.eq.s32.totalorder %s21, 0
      %p121 = por %p119, %p120
      %s122 = ssub.s32 %s15, %s22
      %p123 = scmp.eq.s32.totalorder %s122, 0
      %s125 = sadd.s32 %s124, 1
      %s126 = scalar_select %p123, %s124, %s125
      %p129 = pneg %p123
      %p130 = scmp.eq.s32.totalorder %s15, 1
      %p131 = por %p129, %p130
      %p132 = scmp.ne.s32.totalorder %s124, %s127
      %p133 = scmp.eq.s32.totalorder %s15, 0
      %p134 = por %p132, %p133
      %p135 = scmp.ne.s32.totalorder %s124, %s127
      %p136 = scmp.eq.s32.totalorder %s20, 1
      %p137 = por %p135, %p136
      %p138 = scmp.ne.s32.totalorder %s127, %s128
      %p139 = scmp.eq.s32.totalorder %s20, 0
      %p140 = por %p138, %p139
      %p141 = scmp.ne.s32.totalorder %s127, %s128
      %p142 = scmp.eq.s32.totalorder %s21, 1
      %p143 = por %p141, %p142
      %p145 = scmp.ne.s32.totalorder %s128, %s144
      %p146 = scmp.eq.s32.totalorder %s21, 0
      %p147 = por %p145, %p146
      %s148 = ssub.s32 %s15, %s22
      %p149 = scmp.eq.s32.totalorder %s148, 0
      %s151 = sadd.s32 %s150, 1
      %s152 = scalar_select %p149, %s150, %s151
      %p155 = pneg %p149
      %p156 = scmp.eq.s32.totalorder %s15, 1
      %p157 = por %p155, %p156
      %p158 = scmp.ne.s32.totalorder %s150, %s153
      %p159 = scmp.eq.s32.totalorder %s15, 0
      %p160 = por %p158, %p159
      %p161 = scmp.ne.s32.totalorder %s150, %s153
      %p162 = scmp.eq.s32.totalorder %s20, 1
      %p163 = por %p161, %p162
      %p164 = scmp.ne.s32.totalorder %s153, %s154
      %p165 = scmp.eq.s32.totalorder %s20, 0
      %p166 = por %p164, %p165
      %p167 = scmp.ne.s32.totalorder %s153, %s154
      %p168 = scmp.eq.s32.totalorder %s21, 1
      %p169 = por %p167, %p168
      %p171 = scmp.ne.s32.totalorder %s154, %s170
      %p172 = scmp.eq.s32.totalorder %s21, 0
      %p173 = por %p171, %p172
      %s174 = ssub.s32 %s15, %s22
      %p175 = scmp.eq.s32.totalorder %s174, 0
      %s177 = sadd.s32 %s176, 1
      %s178 = scalar_select %p175, %s176, %s177
      %p181 = pneg %p175
      %p182 = scmp.eq.s32.totalorder %s15, 1
      %p183 = por %p181, %p182
      %p184 = scmp.ne.s32.totalorder %s176, %s179
      %p185 = scmp.eq.s32.totalorder %s15, 0
      %p186 = por %p184, %p185
      %p187 = scmp.ne.s32.totalorder %s176, %s179
      %p188 = scmp.eq.s32.totalorder %s20, 1
      %p189 = por %p187, %p188
      %p190 = scmp.ne.s32.totalorder %s179, %s180
      %p191 = scmp.eq.s32.totalorder %s20, 0
      %p192 = por %p190, %p191
      %p193 = scmp.ne.s32.totalorder %s179, %s180
      %p194 = scmp.eq.s32.totalorder %s21, 1
      %p195 = por %p193, %p194
      %p197 = scmp.ne.s32.totalorder %s180, %s196
      %p198 = scmp.eq.s32.totalorder %s21, 0
      %p199 = por %p197, %p198
      %s201 = sadd.s32 %s200, 1
      %p204 = scmp.eq.s32.totalorder %s15, 1
      %p205 = scmp.ne.s32.totalorder %s200, %s202
      %p206 = scmp.eq.s32.totalorder %s15, 0
      %p207 = por %p205, %p206
      %p208 = scmp.ne.s32.totalorder %s200, %s202
      %p209 = scmp.eq.s32.totalorder %s20, 1
      %p210 = por %p208, %p209
      %p211 = scmp.ne.s32.totalorder %s202, %s203
      %p212 = scmp.eq.s32.totalorder %s20, 0
      %p213 = por %p211, %p212
      %p214 = scmp.ne.s32.totalorder %s202, %s203
      %p215 = scmp.eq.s32.totalorder %s21, 1
      %p216 = por %p214, %p215
      %p218 = scmp.ne.s32.totalorder %s203, %s217
      %p219 = scmp.eq.s32.totalorder %s21, 0
      %p220 = por %p218, %p219
      %s222 = sadd.s32 %s221, 1
      %p225 = scmp.eq.s32.totalorder %s15, 1
      %p226 = scmp.ne.s32.totalorder %s221, %s223
      %p227 = scmp.eq.s32.totalorder %s15, 0
      %p228 = por %p226, %p227
      %p229 = scmp.ne.s32.totalorder %s221, %s223
      %p230 = scmp.eq.s32.totalorder %s20, 1
      %p231 = por %p229, %p230
      %p232 = scmp.ne.s32.totalorder %s223, %s224
      %p233 = scmp.eq.s32.totalorder %s20, 0
      %p234 = por %p232, %p233
      %p235 = scmp.ne.s32.totalorder %s223, %s224
      %p236 = scmp.eq.s32.totalorder %s21, 1
      %p237 = por %p235, %p236
      %p239 = scmp.ne.s32.totalorder %s224, %s238
      %p240 = scmp.eq.s32.totalorder %s21, 0
      %p241 = por %p239, %p240
      %p242 = scmp.le.s32.totalorder 1, %s15
      %p243 = scmp.lt.s32.totalorder %s15, 3
      %p244 = pnand %p242, %p243
      %p245 = pneg %p244
      // Predicated region
      $region9: #{llama_transformer_forward.1} parent=5 // pred_check
        _
      $region10: #{llama_transformer_forward.1} parent=5 // pred_check_branch
        %247 = sbr.rel (%p244) target = $region12
      $region11: #{llama_transformer_forward.1} parent=5 // pred_region
        %s248 = ssub.s32 %s15, 1
        // Predicated region
        $region13: #{llama_transformer_forward.1} parent=11 // pred_check
          %p249 = pneg %p36
        $region14: #{llama_transformer_forward.1} parent=11 // pred_check_branch
          %251 = sbr.rel (%p249) target = $region16
        $region15: #{llama_transformer_forward.1} parent=11 // pred_region
          _
        $region16: #{llama_transformer_forward.1} parent=11 // pred_fallthru
          _
        // Predicated region
        $region17: #{llama_transformer_forward.1} parent=11 // pred_check
          %p252 = pneg %p213
        $region18: #{llama_transformer_forward.1} parent=11 // pred_check_branch
          %254 = sbr.rel (%p252) target = $region20
        $region19: #{llama_transformer_forward.1} parent=11 // pred_region
          _
        $region20: #{llama_transformer_forward.1} parent=11 // pred_fallthru
          _
      $region12: #{llama_transformer_forward.1} parent=5 // pred_fallthru
        _
      %p255 = scmp.lt.s32.totalorder %s15, 2
      // Predicated region
      $region21: #{llama_transformer_forward.1} parent=5 // pred_check
        %p256 = pneg %p255
      $region22: #{llama_transformer_forward.1} parent=5 // pred_check_branch
        %258 = sbr.rel (%p256) target = $region24
      $region23: #{llama_transformer_forward.1} parent=5 // pred_region
        // Predicated region
        $region25: #{llama_transformer_forward.1} parent=23 // pred_check
          %p259 = pneg %p56
        $region26: #{llama_transformer_forward.1} parent=23 // pred_check_branch
          %261 = sbr.rel (%p259) target = $region28
        $region27: #{llama_transformer_forward.1} parent=23 // pred_region
          %p262 = scmp.lt.s32.totalorder %s15, 1
          %s263 = scalar_select %p262, %s15, 1
          %s264 = smul.addr %s263, 2
          %s265 = scalar_lea.vmem %s1, %s264
        $region28: #{llama_transformer_forward.1} parent=23 // pred_fallthru
          _
        // Predicated region
        $region29: #{llama_transformer_forward.1} parent=23 // pred_check
          %p266 = pneg %p82
        $region30: #{llama_transformer_forward.1} parent=23 // pred_check_branch
          %268 = sbr.rel (%p266) target = $region32
        $region31: #{llama_transformer_forward.1} parent=23 // pred_region
          %p269 = scmp.lt.s32.totalorder %s15, 1
          %s270 = scalar_select %p269, %s15, 1
          %s271 = smul.addr %s270, 192
          %s272 = smul.addr %s271, 4
          %s273 = scalar_lea.vmem %s2, %s272
        $region32: #{llama_transformer_forward.1} parent=23 // pred_fallthru
          _
        // Predicated region
        $region33: #{llama_transformer_forward.1} parent=23 // pred_check
          %p274 = pneg %p108
        $region34: #{llama_transformer_forward.1} parent=23 // pred_check_branch
          %276 = sbr.rel (%p274) target = $region36
        $region35: #{llama_transformer_forward.1} parent=23 // pred_region
          %p277 = scmp.lt.s32.totalorder %s15, 1
          %s278 = scalar_select %p277, %s15, 1
          %s279 = smul.addr %s278, 64
          %s280 = smul.addr %s279, 4
          %s281 = scalar_lea.vmem %s3, %s280
        $region36: #{llama_transformer_forward.1} parent=23 // pred_fallthru
          _
        // Predicated region
        $region37: #{llama_transformer_forward.1} parent=23 // pred_check
          %p282 = pneg %p134
        $region38: #{llama_transformer_forward.1} parent=23 // pred_check_branch
          %284 = sbr.rel (%p282) target = $region40
        $region39: #{llama_transformer_forward.1} parent=23 // pred_region
          %p285 = scmp.lt.s32.totalorder %s15, 1
          %s286 = scalar_select %p285, %s15, 1
          %s287 = smul.addr %s286, 2
          %s288 = scalar_lea.vmem %s4, %s287
        $region40: #{llama_transformer_forward.1} parent=23 // pred_fallthru
          _
        // Predicated region
        $region41: #{llama_transformer_forward.1} parent=23 // pred_check
          %p289 = pneg %p160
        $region42: #{llama_transformer_forward.1} parent=23 // pred_check_branch
          %291 = sbr.rel (%p289) target = $region44
        $region43: #{llama_transformer_forward.1} parent=23 // pred_region
          %p292 = scmp.lt.s32.totalorder %s15, 1
          %s293 = scalar_select %p292, %s15, 1
          %s294 = smul.addr %s293, 384
          %s295 = smul.addr %s294, 4
          %s296 = scalar_lea.vmem %s5, %s295
        $region44: #{llama_transformer_forward.1} parent=23 // pred_fallthru
          _
        // Predicated region
        $region45: #{llama_transformer_forward.1} parent=23 // pred_check
          %p297 = pneg %p186
        $region46: #{llama_transformer_forward.1} parent=23 // pred_check_branch
          %299 = sbr.rel (%p297) target = $region48
        $region47: #{llama_transformer_forward.1} parent=23 // pred_region
          %p300 = scmp.lt.s32.totalorder %s15, 1
          %s301 = scalar_select %p300, %s15, 1
          %s302 = smul.addr %s301, 192
          %s303 = smul.addr %s302, 4
          %s304 = scalar_lea.vmem %s6, %s303
        $region48: #{llama_transformer_forward.1} parent=23 // pred_fallthru
          _
      $region24: #{llama_transformer_forward.1} parent=5 // pred_fallthru
        _
      %p305 = scmp.le.s32.totalorder 1, %s15
      %p306 = scmp.lt.s32.totalorder %s15, 3
      %p307 = pnand %p305, %p306
      %p308 = pneg %p307
      // Predicated region
      $region49: #{llama_transformer_forward.1} parent=5 // pred_check
        _
      $region50: #{llama_transformer_forward.1} parent=5 // pred_check_branch
        %310 = sbr.rel (%p307) target = $region52
      $region51: #{llama_transformer_forward.1} parent=5 // pred_region
        %s311 = ssub.s32 %s15, 1
        %p312 = pneg %p36
        %p313 = pneg %p33
        %p314 = scmp.lt.s32.totalorder %s20, 1
        %s315 = scalar_select %p314, %s20, 1
        %s316 = smul.addr %s315, 2
        %s317 = scalar_lea.vmem %s1, %s316
        %p318 = pneg %p62
        %p319 = pneg %p59
        %p320 = scmp.lt.s32.totalorder %s20, 1
        %s321 = scalar_select %p320, %s20, 1
        %s322 = smul.addr %s321, 192
        %s323 = smul.addr %s322, 4
        %s324 = scalar_lea.vmem %s2, %s323
        %p325 = pneg %p88
        %p326 = pneg %p85
        %p327 = scmp.lt.s32.totalorder %s20, 1
        %s328 = scalar_select %p327, %s20, 1
        %s329 = smul.addr %s328, 64
        %s330 = smul.addr %s329, 4
        %s331 = scalar_lea.vmem %s3, %s330
        %p332 = pneg %p114
        %p333 = pneg %p111
        %p334 = scmp.lt.s32.totalorder %s20, 1
        %s335 = scalar_select %p334, %s20, 1
        %s336 = smul.addr %s335, 2
        %s337 = scalar_lea.vmem %s4, %s336
        %p338 = pneg %p140
        %p339 = pneg %p137
        %p340 = scmp.lt.s32.totalorder %s20, 1
        %s341 = scalar_select %p340, %s20, 1
        %s342 = smul.addr %s341, 384
        %s343 = smul.addr %s342, 4
        %s344 = scalar_lea.vmem %s5, %s343
        %p345 = pneg %p166
        %p346 = pneg %p163
        %p347 = scmp.lt.s32.totalorder %s20, 1
        %s348 = scalar_select %p347, %s20, 1
        %s349 = smul.addr %s348, 192
        %s350 = smul.addr %s349, 4
        %s351 = scalar_lea.vmem %s6, %s350
        %p352 = pneg %p192
        %p353 = pneg %p189
        %p354 = pneg %p213
        %p355 = pneg %p210
        %p356 = pneg %p234
        %p357 = pneg %p231
        %p358 = scmp.lt.s32.totalorder %s20, 1
        %s359 = scalar_select %p358, %s20, 1
        %s360 = smul.addr %s359, 2
        %s361 = scalar_lea.vmem %s1, %s360
        %p362 = scmp.lt.s32.totalorder %s20, 1
        %s363 = scalar_select %p362, %s20, 1
        %s364 = smul.addr %s363, 192
        %s365 = smul.addr %s364, 4
        %s366 = scalar_lea.vmem %s2, %s365
        %p367 = scmp.lt.s32.totalorder %s20, 1
        %s368 = scalar_select %p367, %s20, 1
        %s369 = smul.addr %s368, 64
        %s370 = smul.addr %s369, 4
        %s371 = scalar_lea.vmem %s3, %s370
        %p372 = scmp.lt.s32.totalorder %s20, 1
        %s373 = scalar_select %p372, %s20, 1
        %s374 = smul.addr %s373, 2
        %s375 = scalar_lea.vmem %s4, %s374
        %p376 = scmp.lt.s32.totalorder %s20, 1
        %s377 = scalar_select %p376, %s20, 1
        %s378 = smul.addr %s377, 384
        %s379 = smul.addr %s378, 4
        %s380 = scalar_lea.vmem %s5, %s379
        %p381 = scmp.lt.s32.totalorder %s20, 1
        %s382 = scalar_select %p381, %s20, 1
        %s383 = smul.addr %s382, 192
        %s384 = smul.addr %s383, 4
        %s385 = scalar_lea.vmem %s6, %s384
        %p387 = scmp.eq.s32.totalorder %s20, 0
        // Predicated region
        $region53: #{llama_transformer_forward.1} parent=51 // pred_check
          %p388 = pneg %p387
        $region54: #{llama_transformer_forward.1} parent=51 // pred_check_branch
          %390 = sbr.rel (%p388) target = $region56
        $region55: #{llama_transformer_forward.1} parent=51 // pred_region
          %v391 = vld [vmem:[%s0] sm:$0xff]
          %v392 = vld [vmem:[%s0 + $0x8] sm:$0xff]
          %v393 = vld [vmem:[%s0 + $0x10] sm:$0xff]
          %v394 = vld [vmem:[%s0 + $0x18] sm:$0xff]
          %395 = vst [vmem:[#allocation2] sm:$0xff] %v391
          %396 = vst [vmem:[#allocation2 + $0x8] sm:$0xff] %v392
          %397 = vst [vmem:[#allocation2 + $0x10] sm:$0xff] %v393
          %398 = vst [vmem:[#allocation2 + $0x18] sm:$0xff] %v394
        $region56: #{llama_transformer_forward.1} parent=51 // pred_fallthru
          _
        %v399 = vld [vmem:[#allocation2] sm:$0xff]
        %v400 = vld [vmem:[#allocation2 + $0x8] sm:$0xff]
        %v401 = vld [vmem:[#allocation2 + $0x10] sm:$0xff]
        %v402 = vld [vmem:[#allocation2 + $0x18] sm:$0xff]
        %v403 = vmul.f32 %v399, %v399
        %v404 = vmul.f32 %v400, %v400
        %v405 = vmul.f32 %v401, %v401
        %v406 = vmul.f32 %v402, %v402
        %v407 = vadd.f32 %v403, %v404
        %408 = vadd.xlane.f32.xlu0 %v407
        %v409 = vpop.xlane.xlu0 %408
        %v410 = vadd.f32 %v405, %v406
        %411 = vadd.xlane.f32.xlu0 %v410
        %v412 = vpop.xlane.xlu0 %411
        %v413 = vrcp.pop 256.0
        %v414 = vmul.f32 %v409, %v413
        %v415 = vmul.f32 %v412, %v413
        %v416 = vadd.f32 %v414, 1e-05
        %v417 = vadd.f32 %v415, 1e-05
        %v418 = vrsqrt.pop %v416
        %v419 = vrsqrt.pop %v417
        %v420 = vmul.f32 %v399, %v418
        %v421 = vmul.f32 %v400, %v418
        %v422 = vmul.f32 %v401, %v419
        %v423 = vmul.f32 %v402, %v419
        %v424 = vld [vmem:[%s361] sm:$0x3]
        %v426 = vlaneseq
        %v427 = vshrl.u32 %v426, 7
        %v428 = vsub.s32 0, %v427
        %v429 = vrot.slane %v424, %v428
        %v430 = vlaneseq
        %v431 = vshrl.u32 %v430, 7
        %v432 = vsub.s32 1, %v431
        %v433 = vrot.slane %v424, %v432
        %v436 = vmul.f32 %v420, %v429
        %v437 = vmul.f32 %v421, %v433
        %v438 = vmul.f32 %v422, %v429
        %v439 = vmul.f32 %v423, %v433
        %v440 = vpack.c.bf16 %v438, %v436
        %v441 = vpack.c.bf16 %v439, %v437
        %v442 = vld [vmem:[%s366] sm:$0xff]
        %v443 = vld [vmem:[%s366 + $0x8] sm:$0xff]
        %v444 = vld [vmem:[%s366 + $0x10] sm:$0xff]
        %v445 = vld [vmem:[%s366 + $0x18] sm:$0xff]
        %v446 = vld [vmem:[%s366 + $0x20] sm:$0xff]
        %v447 = vld [vmem:[%s366 + $0x28] sm:$0xff]
        %v448 = vld [vmem:[%s366 + $0x30] sm:$0xff]
        %v449 = vld [vmem:[%s366 + $0x38] sm:$0xff]
        %v450 = vld [vmem:[%s366 + $0x40] sm:$0xff]
        %v451 = vld [vmem:[%s366 + $0x48] sm:$0xff]
        %v452 = vld [vmem:[%s366 + $0x50] sm:$0xff]
        %v453 = vld [vmem:[%s366 + $0x58] sm:$0xff]
        %v454 = vld [vmem:[%s366 + $0x60] sm:$0xff]
        %v455 = vld [vmem:[%s366 + $0x68] sm:$0xff]
        %v456 = vld [vmem:[%s366 + $0x70] sm:$0xff]
        %v457 = vld [vmem:[%s366 + $0x78] sm:$0xff]
        %v458 = vld [vmem:[%s366 + $0x80] sm:$0xff]
        %v459 = vld [vmem:[%s366 + $0x88] sm:$0xff]
        %v460 = vld [vmem:[%s366 + $0x90] sm:$0xff]
        %v461 = vld [vmem:[%s366 + $0x98] sm:$0xff]
        %v462 = vld [vmem:[%s366 + $0xa0] sm:$0xff]
        %v463 = vld [vmem:[%s366 + $0xa8] sm:$0xff]
        %v464 = vld [vmem:[%s366 + $0xb0] sm:$0xff]
        %v465 = vld [vmem:[%s366 + $0xb8] sm:$0xff]
        %v466 = vld [vmem:[%s366 + $0xc0] sm:$0xff]
        %v467 = vld [vmem:[%s366 + $0xc8] sm:$0xff]
        %v468 = vld [vmem:[%s366 + $0xd0] sm:$0xff]
        %v469 = vld [vmem:[%s366 + $0xd8] sm:$0xff]
        %v470 = vld [vmem:[%s366 + $0xe0] sm:$0xff]
        %v471 = vld [vmem:[%s366 + $0xe8] sm:$0xff]
        %v472 = vld [vmem:[%s366 + $0xf0] sm:$0xff]
        %v473 = vld [vmem:[%s366 + $0xf8] sm:$0xff]
        %v474 = vld [vmem:[%s366 + $0x100] sm:$0xff]
        %v475 = vld [vmem:[%s366 + $0x108] sm:$0xff]
        %v476 = vld [vmem:[%s366 + $0x110] sm:$0xff]
        %v477 = vld [vmem:[%s366 + $0x118] sm:$0xff]
        %v478 = vld [vmem:[%s366 + $0x120] sm:$0xff]
        %v479 = vld [vmem:[%s366 + $0x128] sm:$0xff]
        %v480 = vld [vmem:[%s366 + $0x130] sm:$0xff]
        %v481 = vld [vmem:[%s366 + $0x138] sm:$0xff]
        %v482 = vld [vmem:[%s366 + $0x140] sm:$0xff]
        %v483 = vld [vmem:[%s366 + $0x148] sm:$0xff]
        %v484 = vld [vmem:[%s366 + $0x150] sm:$0xff]
        %v485 = vld [vmem:[%s366 + $0x158] sm:$0xff]
        %v486 = vld [vmem:[%s366 + $0x160] sm:$0xff]
        %v487 = vld [vmem:[%s366 + $0x168] sm:$0xff]
        %v488 = vld [vmem:[%s366 + $0x170] sm:$0xff]
        %v489 = vld [vmem:[%s366 + $0x178] sm:$0xff]
        %v490 = vld [vmem:[%s366 + $0x180] sm:$0xff]
        %v491 = vld [vmem:[%s366 + $0x188] sm:$0xff]
        %v492 = vld [vmem:[%s366 + $0x190] sm:$0xff]
        %v493 = vld [vmem:[%s366 + $0x198] sm:$0xff]
        %v494 = vld [vmem:[%s366 + $0x1a0] sm:$0xff]
        %v495 = vld [vmem:[%s366 + $0x1a8] sm:$0xff]
        %v496 = vld [vmem:[%s366 + $0x1b0] sm:$0xff]
        %v497 = vld [vmem:[%s366 + $0x1b8] sm:$0xff]
        %v498 = vld [vmem:[%s366 + $0x1c0] sm:$0xff]
        %v499 = vld [vmem:[%s366 + $0x1c8] sm:$0xff]
        %v500 = vld [vmem:[%s366 + $0x1d0] sm:$0xff]
        %v501 = vld [vmem:[%s366 + $0x1d8] sm:$0xff]
        %v502 = vld [vmem:[%s366 + $0x1e0] sm:$0xff]
        %v503 = vld [vmem:[%s366 + $0x1e8] sm:$0xff]
        %v504 = vld [vmem:[%s366 + $0x1f0] sm:$0xff]
        %v505 = vld [vmem:[%s366 + $0x1f8] sm:$0xff]
        %v506 = vld [vmem:[%s366 + $0x200] sm:$0xff]
        %v507 = vld [vmem:[%s366 + $0x208] sm:$0xff]
        %v508 = vld [vmem:[%s366 + $0x210] sm:$0xff]
        %v509 = vld [vmem:[%s366 + $0x218] sm:$0xff]
        %v510 = vld [vmem:[%s366 + $0x220] sm:$0xff]
        %v511 = vld [vmem:[%s366 + $0x228] sm:$0xff]
        %v512 = vld [vmem:[%s366 + $0x230] sm:$0xff]
        %v513 = vld [vmem:[%s366 + $0x238] sm:$0xff]
        %v514 = vld [vmem:[%s366 + $0x240] sm:$0xff]
        %v515 = vld [vmem:[%s366 + $0x248] sm:$0xff]
        %v516 = vld [vmem:[%s366 + $0x250] sm:$0xff]
        %v517 = vld [vmem:[%s366 + $0x258] sm:$0xff]
        %v518 = vld [vmem:[%s366 + $0x260] sm:$0xff]
        %v519 = vld [vmem:[%s366 + $0x268] sm:$0xff]
        %v520 = vld [vmem:[%s366 + $0x270] sm:$0xff]
        %v521 = vld [vmem:[%s366 + $0x278] sm:$0xff]
        %v522 = vld [vmem:[%s366 + $0x280] sm:$0xff]
        %v523 = vld [vmem:[%s366 + $0x288] sm:$0xff]
        %v524 = vld [vmem:[%s366 + $0x290] sm:$0xff]
        %v525 = vld [vmem:[%s366 + $0x298] sm:$0xff]
        %v526 = vld [vmem:[%s366 + $0x2a0] sm:$0xff]
        %v527 = vld [vmem:[%s366 + $0x2a8] sm:$0xff]
        %v528 = vld [vmem:[%s366 + $0x2b0] sm:$0xff]
        %v529 = vld [vmem:[%s366 + $0x2b8] sm:$0xff]
        %v530 = vld [vmem:[%s366 + $0x2c0] sm:$0xff]
        %v531 = vld [vmem:[%s366 + $0x2c8] sm:$0xff]
        %v532 = vld [vmem:[%s366 + $0x2d0] sm:$0xff]
        %v533 = vld [vmem:[%s366 + $0x2d8] sm:$0xff]
        %v534 = vld [vmem:[%s366 + $0x2e0] sm:$0xff]
        %v535 = vld [vmem:[%s366 + $0x2e8] sm:$0xff]
        %v536 = vld [vmem:[%s366 + $0x2f0] sm:$0xff]
        %v537 = vld [vmem:[%s366 + $0x2f8] sm:$0xff]
        %v634 = vunpack.c.l.b16 %v442
        %v635 = vunpack.c.h.b16 %v442
        %v636 = vunpack.c.l.b16 %v443
        %v637 = vunpack.c.h.b16 %v443
        %v638 = vunpack.c.l.b16 %v444
        %v639 = vunpack.c.h.b16 %v444
        %v640 = vunpack.c.l.b16 %v445
        %v641 = vunpack.c.h.b16 %v445
        %v642 = vunpack.c.l.b16 %v446
        %v643 = vunpack.c.h.b16 %v446
        %v644 = vunpack.c.l.b16 %v447
        %v645 = vunpack.c.h.b16 %v447
        %v646 = vunpack.c.l.b16 %v448
        %v647 = vunpack.c.h.b16 %v448
        %v648 = vunpack.c.l.b16 %v449
        %v649 = vunpack.c.h.b16 %v449
        %v650 = vunpack.c.l.b16 %v450
        %v651 = vunpack.c.h.b16 %v450
        %v652 = vunpack.c.l.b16 %v451
        %v653 = vunpack.c.h.b16 %v451
        %v654 = vunpack.c.l.b16 %v452
        %v655 = vunpack.c.h.b16 %v452
        %v656 = vunpack.c.l.b16 %v453
        %v657 = vunpack.c.h.b16 %v453
        %v658 = vunpack.c.l.b16 %v454
        %v659 = vunpack.c.h.b16 %v454
        %v660 = vunpack.c.l.b16 %v455
        %v661 = vunpack.c.h.b16 %v455
        %v662 = vunpack.c.l.b16 %v456
        %v663 = vunpack.c.h.b16 %v456
        %v664 = vunpack.c.l.b16 %v457
        %v665 = vunpack.c.h.b16 %v457
        %v666 = vunpack.c.l.b16 %v458
        %v667 = vunpack.c.h.b16 %v458
        %v668 = vunpack.c.l.b16 %v459
        %v669 = vunpack.c.h.b16 %v459
        %v670 = vunpack.c.l.b16 %v460
        %v671 = vunpack.c.h.b16 %v460
        %v672 = vunpack.c.l.b16 %v461
        %v673 = vunpack.c.h.b16 %v461
        %v674 = vunpack.c.l.b16 %v462
        %v675 = vunpack.c.h.b16 %v462
        %v676 = vunpack.c.l.b16 %v463
        %v677 = vunpack.c.h.b16 %v463
        %v678 = vunpack.c.l.b16 %v464
        %v679 = vunpack.c.h.b16 %v464
        %v680 = vunpack.c.l.b16 %v465
        %v681 = vunpack.c.h.b16 %v465
        %v682 = vunpack.c.l.b16 %v466
        %v683 = vunpack.c.h.b16 %v466
        %v684 = vunpack.c.l.b16 %v467
        %v685 = vunpack.c.h.b16 %v467
        %v686 = vunpack.c.l.b16 %v468
        %v687 = vunpack.c.h.b16 %v468
        %v688 = vunpack.c.l.b16 %v469
        %v689 = vunpack.c.h.b16 %v469
        %v690 = vunpack.c.l.b16 %v470
        %v691 = vunpack.c.h.b16 %v470
        %v692 = vunpack.c.l.b16 %v471
        %v693 = vunpack.c.h.b16 %v471
        %v694 = vunpack.c.l.b16 %v472
        %v695 = vunpack.c.h.b16 %v472
        %v696 = vunpack.c.l.b16 %v473
        %v697 = vunpack.c.h.b16 %v473
        %v698 = vunpack.c.l.b16 %v474
        %v699 = vunpack.c.h.b16 %v474
        %v700 = vunpack.c.l.b16 %v475
        %v701 = vunpack.c.h.b16 %v475
        %v702 = vunpack.c.l.b16 %v476
        %v703 = vunpack.c.h.b16 %v476
        %v704 = vunpack.c.l.b16 %v477
        %v705 = vunpack.c.h.b16 %v477
        %v706 = vunpack.c.l.b16 %v478
        %v707 = vunpack.c.h.b16 %v478
        %v708 = vunpack.c.l.b16 %v479
        %v709 = vunpack.c.h.b16 %v479
        %v710 = vunpack.c.l.b16 %v480
        %v711 = vunpack.c.h.b16 %v480
        %v712 = vunpack.c.l.b16 %v481
        %v713 = vunpack.c.h.b16 %v481
        %v714 = vunpack.c.l.b16 %v482
        %v715 = vunpack.c.h.b16 %v482
        %v716 = vunpack.c.l.b16 %v483
        %v717 = vunpack.c.h.b16 %v483
        %v718 = vunpack.c.l.b16 %v484
        %v719 = vunpack.c.h.b16 %v484
        %v720 = vunpack.c.l.b16 %v485
        %v721 = vunpack.c.h.b16 %v485
        %v722 = vunpack.c.l.b16 %v486
        %v723 = vunpack.c.h.b16 %v486
        %v724 = vunpack.c.l.b16 %v487
        %v725 = vunpack.c.h.b16 %v487
        %v726 = vunpack.c.l.b16 %v488
        %v727 = vunpack.c.h.b16 %v488
        %v728 = vunpack.c.l.b16 %v489
        %v729 = vunpack.c.h.b16 %v489
        %v730 = vunpack.c.l.b16 %v490
        %v731 = vunpack.c.h.b16 %v490
        %v732 = vunpack.c.l.b16 %v491
        %v733 = vunpack.c.h.b16 %v491
        %v734 = vunpack.c.l.b16 %v492
        %v735 = vunpack.c.h.b16 %v492
        %v736 = vunpack.c.l.b16 %v493
        %v737 = vunpack.c.h.b16 %v493
        %v738 = vunpack.c.l.b16 %v494
        %v739 = vunpack.c.h.b16 %v494
        %v740 = vunpack.c.l.b16 %v495
        %v741 = vunpack.c.h.b16 %v495
        %v742 = vunpack.c.l.b16 %v496
        %v743 = vunpack.c.h.b16 %v496
        %v744 = vunpack.c.l.b16 %v497
        %v745 = vunpack.c.h.b16 %v497
        %v746 = vunpack.c.l.b16 %v498
        %v747 = vunpack.c.h.b16 %v498
        %v748 = vunpack.c.l.b16 %v499
        %v749 = vunpack.c.h.b16 %v499
        %v750 = vunpack.c.l.b16 %v500
        %v751 = vunpack.c.h.b16 %v500
        %v752 = vunpack.c.l.b16 %v501
        %v753 = vunpack.c.h.b16 %v501
        %v754 = vunpack.c.l.b16 %v502
        %v755 = vunpack.c.h.b16 %v502
        %v756 = vunpack.c.l.b16 %v503
        %v757 = vunpack.c.h.b16 %v503
        %v758 = vunpack.c.l.b16 %v504
        %v759 = vunpack.c.h.b16 %v504
        %v760 = vunpack.c.l.b16 %v505
        %v761 = vunpack.c.h.b16 %v505
        %v762 = vunpack.c.l.b16 %v506
        %v763 = vunpack.c.h.b16 %v506
        %v764 = vunpack.c.l.b16 %v507
        %v765 = vunpack.c.h.b16 %v507
        %v766 = vunpack.c.l.b16 %v508
        %v767 = vunpack.c.h.b16 %v508
        %v768 = vunpack.c.l.b16 %v509
        %v769 = vunpack.c.h.b16 %v509
        %v770 = vunpack.c.l.b16 %v510
        %v771 = vunpack.c.h.b16 %v510
        %v772 = vunpack.c.l.b16 %v511
        %v773 = vunpack.c.h.b16 %v511
        %v774 = vunpack.c.l.b16 %v512
        %v775 = vunpack.c.h.b16 %v512
        %v776 = vunpack.c.l.b16 %v513
        %v777 = vunpack.c.h.b16 %v513
        %v778 = vunpack.c.l.b16 %v514
        %v779 = vunpack.c.h.b16 %v514
        %v780 = vunpack.c.l.b16 %v515
        %v781 = vunpack.c.h.b16 %v515
        %v782 = vunpack.c.l.b16 %v516
        %v783 = vunpack.c.h.b16 %v516
        %v784 = vunpack.c.l.b16 %v517
        %v785 = vunpack.c.h.b16 %v517
        %v786 = vunpack.c.l.b16 %v518
        %v787 = vunpack.c.h.b16 %v518
        %v788 = vunpack.c.l.b16 %v519
        %v789 = vunpack.c.h.b16 %v519
        %v790 = vunpack.c.l.b16 %v520
        %v791 = vunpack.c.h.b16 %v520
        %v792 = vunpack.c.l.b16 %v521
        %v793 = vunpack.c.h.b16 %v521
        %v794 = vunpack.c.l.b16 %v522
        %v795 = vunpack.c.h.b16 %v522
        %v796 = vunpack.c.l.b16 %v523
        %v797 = vunpack.c.h.b16 %v523
        %v798 = vunpack.c.l.b16 %v524
        %v799 = vunpack.c.h.b16 %v524
        %v800 = vunpack.c.l.b16 %v525
        %v801 = vunpack.c.h.b16 %v525
        %v802 = vunpack.c.l.b16 %v526
        %v803 = vunpack.c.h.b16 %v526
        %v804 = vunpack.c.l.b16 %v527
        %v805 = vunpack.c.h.b16 %v527
        %v806 = vunpack.c.l.b16 %v528
        %v807 = vunpack.c.h.b16 %v528
        %v808 = vunpack.c.l.b16 %v529
        %v809 = vunpack.c.h.b16 %v529
        %v810 = vunpack.c.l.b16 %v530
        %v811 = vunpack.c.h.b16 %v530
        %v812 = vunpack.c.l.b16 %v531
        %v813 = vunpack.c.h.b16 %v531
        %v814 = vunpack.c.l.b16 %v532
        %v815 = vunpack.c.h.b16 %v532
        %v816 = vunpack.c.l.b16 %v533
        %v817 = vunpack.c.h.b16 %v533
        %v818 = vunpack.c.l.b16 %v534
        %v819 = vunpack.c.h.b16 %v534
        %v820 = vunpack.c.l.b16 %v535
        %v821 = vunpack.c.h.b16 %v535
        %v822 = vunpack.c.l.b16 %v536
        %v823 = vunpack.c.h.b16 %v536
        %v824 = vunpack.c.l.b16 %v537
        %v825 = vunpack.c.h.b16 %v537
        %v826 = vpack.c.b16 %v640, %v634
        %v827 = vpack.c.b16 %v641, %v635
        %v828 = vpack.c.b16 %v642, %v636
        %v829 = vpack.c.b16 %v643, %v637
        %v830 = vpack.c.b16 %v644, %v638
        %v831 = vpack.c.b16 %v645, %v639
        %v832 = vpack.c.b16 %v652, %v646
        %v833 = vpack.c.b16 %v653, %v647
        %v834 = vpack.c.b16 %v654, %v648
        %v835 = vpack.c.b16 %v655, %v649
        %v836 = vpack.c.b16 %v656, %v650
        %v837 = vpack.c.b16 %v657, %v651
        %v838 = vpack.c.b16 %v664, %v658
        %v839 = vpack.c.b16 %v665, %v659
        %v840 = vpack.c.b16 %v666, %v660
        %v841 = vpack.c.b16 %v667, %v661
        %v842 = vpack.c.b16 %v668, %v662
        %v843 = vpack.c.b16 %v669, %v663
        %v844 = vpack.c.b16 %v676, %v670
        %v845 = vpack.c.b16 %v677, %v671
        %v846 = vpack.c.b16 %v678, %v672
        %v847 = vpack.c.b16 %v679, %v673
        %v848 = vpack.c.b16 %v680, %v674
        %v849 = vpack.c.b16 %v681, %v675
        %v850 = vpack.c.b16 %v688, %v682
        %v851 = vpack.c.b16 %v689, %v683
        %v852 = vpack.c.b16 %v690, %v684
        %v853 = vpack.c.b16 %v691, %v685
        %v854 = vpack.c.b16 %v692, %v686
        %v855 = vpack.c.b16 %v693, %v687
        %v856 = vpack.c.b16 %v700, %v694
        %v857 = vpack.c.b16 %v701, %v695
        %v858 = vpack.c.b16 %v702, %v696
        %v859 = vpack.c.b16 %v703, %v697
        %v860 = vpack.c.b16 %v704, %v698
        %v861 = vpack.c.b16 %v705, %v699
        %v862 = vpack.c.b16 %v712, %v706
        %v863 = vpack.c.b16 %v713, %v707
        %v864 = vpack.c.b16 %v714, %v708
        %v865 = vpack.c.b16 %v715, %v709
        %v866 = vpack.c.b16 %v716, %v710
        %v867 = vpack.c.b16 %v717, %v711
        %v868 = vpack.c.b16 %v724, %v718
        %v869 = vpack.c.b16 %v725, %v719
        %v870 = vpack.c.b16 %v726, %v720
        %v871 = vpack.c.b16 %v727, %v721
        %v872 = vpack.c.b16 %v728, %v722
        %v873 = vpack.c.b16 %v729, %v723
        %v874 = vpack.c.b16 %v736, %v730
        %v875 = vpack.c.b16 %v737, %v731
        %v876 = vpack.c.b16 %v738, %v732
        %v877 = vpack.c.b16 %v739, %v733
        %v878 = vpack.c.b16 %v740, %v734
        %v879 = vpack.c.b16 %v741, %v735
        %v880 = vpack.c.b16 %v748, %v742
        %v881 = vpack.c.b16 %v749, %v743
        %v882 = vpack.c.b16 %v750, %v744
        %v883 = vpack.c.b16 %v751, %v745
        %v884 = vpack.c.b16 %v752, %v746
        %v885 = vpack.c.b16 %v753, %v747
        %v886 = vpack.c.b16 %v760, %v754
        %v887 = vpack.c.b16 %v761, %v755
        %v888 = vpack.c.b16 %v762, %v756
        %v889 = vpack.c.b16 %v763, %v757
        %v890 = vpack.c.b16 %v764, %v758
        %v891 = vpack.c.b16 %v765, %v759
        %v892 = vpack.c.b16 %v772, %v766
        %v893 = vpack.c.b16 %v773, %v767
        %v894 = vpack.c.b16 %v774, %v768
        %v895 = vpack.c.b16 %v775, %v769
        %v896 = vpack.c.b16 %v776, %v770
        %v897 = vpack.c.b16 %v777, %v771
        %v898 = vpack.c.b16 %v784, %v778
        %v899 = vpack.c.b16 %v785, %v779
        %v900 = vpack.c.b16 %v786, %v780
        %v901 = vpack.c.b16 %v787, %v781
        %v902 = vpack.c.b16 %v788, %v782
        %v903 = vpack.c.b16 %v789, %v783
        %v904 = vpack.c.b16 %v796, %v790
        %v905 = vpack.c.b16 %v797, %v791
        %v906 = vpack.c.b16 %v798, %v792
        %v907 = vpack.c.b16 %v799, %v793
        %v908 = vpack.c.b16 %v800, %v794
        %v909 = vpack.c.b16 %v801, %v795
        %v910 = vpack.c.b16 %v808, %v802
        %v911 = vpack.c.b16 %v809, %v803
        %v912 = vpack.c.b16 %v810, %v804
        %v913 = vpack.c.b16 %v811, %v805
        %v914 = vpack.c.b16 %v812, %v806
        %v915 = vpack.c.b16 %v813, %v807
        %v916 = vpack.c.b16 %v820, %v814
        %v917 = vpack.c.b16 %v821, %v815
        %v918 = vpack.c.b16 %v822, %v816
        %v919 = vpack.c.b16 %v823, %v817
        %v920 = vpack.c.b16 %v824, %v818
        %v921 = vpack.c.b16 %v825, %v819
        %1018 = vmatprep.subr.bf16.mxu0 %v827
        %1019 = vmatpush1.bf16.msra.mxu0 %v826
        %1020 = vmatprep.subr.bf16.mxu0 %v833
        %1021 = vmatpush1.bf16.msra.mxu0 %v832
        %1022 = vmatprep.subr.bf16.mxu0 %v839
        %1023 = vmatpush1.bf16.msra.mxu0 %v838
        %1024 = vmatprep.subr.bf16.mxu0 %v845
        %1025 = vmatpush1.bf16.msra.mxu0 %v844
        %1026 = vmatprep.subr.bf16.mxu0 %v851
        %1027 = vmatpush1.bf16.msra.mxu0 %v850
        %1028 = vmatprep.subr.bf16.mxu0 %v857
        %1029 = vmatpush1.bf16.msra.mxu0 %v856
        %1030 = vmatprep.subr.bf16.mxu0 %v863
        %1031 = vmatpush1.bf16.msra.mxu0 %v862
        %1032 = vmatprep.subr.bf16.mxu0 %v869
        %1033 = vmatpush1.bf16.msra.mxu0 %v868
        %1034 = vmatprep.subr.bf16.mxu0 %v875
        %1035 = vmatpush1.bf16.msra.mxu0 %v874
        %1036 = vmatprep.subr.bf16.mxu0 %v881
        %1037 = vmatpush1.bf16.msra.mxu0 %v880
        %1038 = vmatprep.subr.bf16.mxu0 %v887
        %1039 = vmatpush1.bf16.msra.mxu0 %v886
        %1040 = vmatprep.subr.bf16.mxu0 %v893
        %1041 = vmatpush1.bf16.msra.mxu0 %v892
        %1042 = vmatprep.subr.bf16.mxu0 %v899
        %1043 = vmatpush1.bf16.msra.mxu0 %v898
        %1044 = vmatprep.subr.bf16.mxu0 %v905
        %1045 = vmatpush1.bf16.msra.mxu0 %v904
        %1046 = vmatprep.subr.bf16.mxu0 %v911
        %1047 = vmatpush1.bf16.msra.mxu0 %v910
        %1048 = vmatprep.subr.bf16.mxu0 %v917
        %1049 = vmatpush1.bf16.msra.mxu0 %v916
        %1050 = vmatprep.mubr.bf16.mxu0 %v441
        %1051 = vmatmul.mubr.bf16.gmra.mrb[0].mxu0 %v440
        %v1052 = vpop.f32.mrb[0].mxu0
        %v1053 = vadd.f32 0.0, %v1052
        %v1054 = vpop.f32.mrb[0].mxu0
        %v1055 = vadd.f32 0.0, %v1054
        %v1056 = vpop.f32.mrb[0].mxu0
        %v1057 = vadd.f32 0.0, %v1056
        %v1058 = vpop.f32.mrb[0].mxu0
        %v1059 = vadd.f32 0.0, %v1058
        %1060 = vdwg.mxu0
        %1061 = vmatprep.subr.bf16.mxu0 %v829
        %1062 = vmatpush1.bf16.msra.mxu0 %v828
        %1063 = vmatprep.subr.bf16.mxu0 %v835
        %1064 = vmatpush1.bf16.msra.mxu0 %v834
        %1065 = vmatprep.subr.bf16.mxu0 %v841
        %1066 = vmatpush1.bf16.msra.mxu0 %v840
        %1067 = vmatprep.subr.bf16.mxu0 %v847
        %1068 = vmatpush1.bf16.msra.mxu0 %v846
        %1069 = vmatprep.subr.bf16.mxu0 %v853
        %1070 = vmatpush1.bf16.msra.mxu0 %v852
        %1071 = vmatprep.subr.bf16.mxu0 %v859
        %1072 = vmatpush1.bf16.msra.mxu0 %v858
        %1073 = vmatprep.subr.bf16.mxu0 %v865
        %1074 = vmatpush1.bf16.msra.mxu0 %v864
        %1075 = vmatprep.subr.bf16.mxu0 %v871
        %1076 = vmatpush1.bf16.msra.mxu0 %v870
        %1077 = vmatprep.subr.bf16.mxu0 %v877
        %1078 = vmatpush1.bf16.msra.mxu0 %v876
        %1079 = vmatprep.subr.bf16.mxu0 %v883
        %1080 = vmatpush1.bf16.msra.mxu0 %v882
        %1081 = vmatprep.subr.bf16.mxu0 %v889
        %1082 = vmatpush1.bf16.msra.mxu0 %v888
        %1083 = vmatprep.subr.bf16.mxu0 %v895
        %1084 = vmatpush1.bf16.msra.mxu0 %v894
        %1085 = vmatprep.subr.bf16.mxu0 %v901
        %1086 = vmatpush1.bf16.msra.mxu0 %v900
        %1087 = vmatprep.subr.bf16.mxu0 %v907
        %1088 = vmatpush1.bf16.msra.mxu0 %v906
        %1089 = vmatprep.subr.bf16.mxu0 %v913
        %1090 = vmatpush1.bf16.msra.mxu0 %v912
        %1091 = vmatprep.subr.bf16.mxu0 %v919
        %1092 = vmatpush1.bf16.msra.mxu0 %v918
        %1093 = vmatprep.mubr.bf16.mxu0 %v441
        %1094 = vmatmul.mubr.bf16.gmra.mrb[0].mxu0 %v440
        %v1095 = vpop.f32.mrb[0].mxu0
        %v1096 = vadd.f32 0.0, %v1095
        %v1097 = vpop.f32.mrb[0].mxu0
        %v1098 = vadd.f32 0.0, %v1097
        %v1099 = vpop.f32.mrb[0].mxu0
        %v1100 = vadd.f32 0.0, %v1099
        %v1101 = vpop.f32.mrb[0].mxu0
        %v1102 = vadd.f32 0.0, %v1101
        %1103 = vdwg.mxu0
        %1104 = vmatprep.subr.bf16.mxu0 %v831
        %1105 = vmatpush1.bf16.msra.mxu0 %v830
        %1106 = vmatprep.subr.bf16.mxu0 %v837
        %1107 = vmatpush1.bf16.msra.mxu0 %v836
        %1108 = vmatprep.subr.bf16.mxu0 %v843
        %1109 = vmatpush1.bf16.msra.mxu0 %v842
        %1110 = vmatprep.subr.bf16.mxu0 %v849
        %1111 = vmatpush1.bf16.msra.mxu0 %v848
        %1112 = vmatprep.subr.bf16.mxu0 %v855
        %1113 = vmatpush1.bf16.msra.mxu0 %v854
        %1114 = vmatprep.subr.bf16.mxu0 %v861
        %1115 = vmatpush1.bf16.msra.mxu0 %v860
        %1116 = vmatprep.subr.bf16.mxu0 %v867
        %1117 = vmatpush1.bf16.msra.mxu0 %v866
        %1118 = vmatprep.subr.bf16.mxu0 %v873
        %1119 = vmatpush1.bf16.msra.mxu0 %v872
        %1120 = vmatprep.subr.bf16.mxu0 %v879
        %1121 = vmatpush1.bf16.msra.mxu0 %v878
        %1122 = vmatprep.subr.bf16.mxu0 %v885
        %1123 = vmatpush1.bf16.msra.mxu0 %v884
        %1124 = vmatprep.subr.bf16.mxu0 %v891
        %1125 = vmatpush1.bf16.msra.mxu0 %v890
        %1126 = vmatprep.subr.bf16.mxu0 %v897
        %1127 = vmatpush1.bf16.msra.mxu0 %v896
        %1128 = vmatprep.subr.bf16.mxu0 %v903
        %1129 = vmatpush1.bf16.msra.mxu0 %v902
        %1130 = vmatprep.subr.bf16.mxu0 %v909
        %1131 = vmatpush1.bf16.msra.mxu0 %v908
        %1132 = vmatprep.subr.bf16.mxu0 %v915
        %1133 = vmatpush1.bf16.msra.mxu0 %v914
        %1134 = vmatprep.subr.bf16.mxu0 %v921
        %1135 = vmatpush1.bf16.msra.mxu0 %v920
        %1136 = vmatprep.mubr.bf16.mxu0 %v441
        %1137 = vmatmul.mubr.bf16.gmra.mrb[0].mxu0 %v440
        %v1138 = vpop.f32.mrb[0].mxu0
        %v1139 = vadd.f32 0.0, %v1138
        %v1140 = vpop.f32.mrb[0].mxu0
        %v1141 = vadd.f32 0.0, %v1140
        %v1142 = vpop.f32.mrb[0].mxu0
        %v1143 = vadd.f32 0.0, %v1142
        %v1144 = vpop.f32.mrb[0].mxu0
        %v1145 = vadd.f32 0.0, %v1144
        %1146 = vdwg.mxu0
        %v1147 = vpack.c.bf16 %v1057, %v1053
        %v1148 = vpack.c.bf16 %v1059, %v1055
        %v1149 = vpack.c.bf16 %v1100, %v1096
        %v1150 = vpack.c.bf16 %v1102, %v1098
        %v1151 = vpack.c.bf16 %v1143, %v1139
        %v1152 = vpack.c.bf16 %v1145, %v1141
        %1153 = vmatprep.subr.bf16.mxu0 0
        %1154 = vmatpush1.bf16.xpose.msra.mxu0 %v1149
        %1155 = vmatprep.subr.bf16.mxu0 0
        %1156 = vmatpush1.bf16.xpose.msra.mxu0 0
        %1157 = vmatprep.subr.bf16.mxu0 0
        %1158 = vmatpush1.bf16.xpose.msra.mxu0 0
        %1159 = vmatprep.subr.bf16.mxu0 0
        %1160 = vmatpush1.bf16.xpose.msra.mxu0 0
        %1161 = vmatprep.subr.bf16.mxu0 0
        %1162 = vmatpush1.bf16.xpose.msra.mxu0 0
        %1163 = vmatprep.subr.bf16.mxu0 0
        %1164 = vmatpush1.bf16.xpose.msra.mxu0 0
        %1165 = vmatprep.subr.bf16.mxu0 0
        %1166 = vmatpush1.bf16.xpose.msra.mxu0 0
        %1167 = vmatprep.subr.bf16.mxu0 0
        %1168 = vmatpush1.bf16.xpose.msra.mxu0 0
        %1169 = vmatprep.subr.bf16.mxu0 0
        %1170 = vmatpush1.bf16.xpose.msra.mxu0 0
        %1171 = vmatprep.subr.bf16.mxu0 0
        %1172 = vmatpush1.bf16.xpose.msra.mxu0 0
        %1173 = vmatprep.subr.bf16.mxu0 0
        %1174 = vmatpush1.bf16.xpose.msra.mxu0 0
        %1175 = vmatprep.subr.bf16.mxu0 0
        %1176 = vmatpush1.bf16.xpose.msra.mxu0 0
        %1177 = vmatprep.subr.bf16.mxu0 0
        %1178 = vmatpush1.bf16.xpose.msra.mxu0 0
        %1179 = vmatprep.subr.bf16.mxu0 0
        %1180 = vmatpush1.bf16.xpose.msra.mxu0 0
        %1181 = vmatprep.subr.bf16.mxu0 0
        %1182 = vmatpush1.bf16.xpose.msra.mxu0 0
        %1183 = vmatprep.subr.bf16.mxu0 0
        %1184 = vmatpush1.bf16.xpose.msra.mxu0 0
        %1185 = vmatprep.mubr.bf16.mxu0 0
        %1186 = vmatmul.mubr.bf16.gmra.mrb[0].mxu0 %v1147
        %v1187 = vpop.f32.mrb[0].mxu0
        %v1188 = vadd.f32 0.0, %v1187
        %v1189 = vpop.f32.mrb[0].mxu0
        %v1190 = vpop.f32.mrb[0].mxu0
        %v1191 = vpop.f32.mrb[0].mxu0
        %1192 = vdwg.mxu0
        %v1193 = vmul.f32 %v1188, 0.088388346
        %vm1194 = vcmask 64512
        %v1195 = vsel %vm1194, %v1193, -inf
        %1196 = vmax.xlane.f32.xlu0 %v1195
        %v1197 = vpop.xlane.xlu0 %1196
        %v1198 = vsub.f32 %v1193, %v1197
        %v1199 = vmul.f32 %v1198, 1.442695
        %v1200 = vpow.pop %v1199
        %v1201 = vsel %vm1194, %v1200, 0.0
        %1202 = vadd.xlane.f32.xlu0 %v1201
        %v1203 = vpop.xlane.xlu0 %1202
        %v1204 = vrcp.pop %v1203
        %v1205 = vmul.f32 %v1200, %v1204
        %v1206 = vpack.c.bf16 %v1205, %v1205
        %v1208 = vsel %vm1194, %v1206, 0
        %vm1210 = vcmask 1043456
        %v1212 = vsel %vm1210, %v1151, 0
        %1214 = vmatprep.subr.bf16.mxu0 0
        %1215 = vmatpush1.bf16.msra.mxu0 %v1212
        %1216 = vmatprep.subr.bf16.mxu0 0
        %1217 = vmatpush1.bf16.msra.mxu0 0
        %1218 = vmatprep.subr.bf16.mxu0 0
        %1219 = vmatpush1.bf16.msra.mxu0 0
        %1220 = vmatprep.subr.bf16.mxu0 0
        %1221 = vmatpush1.bf16.msra.mxu0 0
        %1222 = vmatprep.subr.bf16.mxu0 0
        %1223 = vmatpush1.bf16.msra.mxu0 0
        %1224 = vmatprep.subr.bf16.mxu0 0
        %1225 = vmatpush1.bf16.msra.mxu0 0
        %1226 = vmatprep.subr.bf16.mxu0 0
        %1227 = vmatpush1.bf16.msra.mxu0 0
        %1228 = vmatprep.subr.bf16.mxu0 0
        %1229 = vmatpush1.bf16.msra.mxu0 0
        %1230 = vmatprep.subr.bf16.mxu0 0
        %1231 = vmatpush1.bf16.msra.mxu0 0
        %1232 = vmatprep.subr.bf16.mxu0 0
        %1233 = vmatpush1.bf16.msra.mxu0 0
        %1234 = vmatprep.subr.bf16.mxu0 0
        %1235 = vmatpush1.bf16.msra.mxu0 0
        %1236 = vmatprep.subr.bf16.mxu0 0
        %1237 = vmatpush1.bf16.msra.mxu0 0
        %1238 = vmatprep.subr.bf16.mxu0 0
        %1239 = vmatpush1.bf16.msra.mxu0 0
        %1240 = vmatprep.subr.bf16.mxu0 0
        %1241 = vmatpush1.bf16.msra.mxu0 0
        %1242 = vmatprep.subr.bf16.mxu0 0
        %1243 = vmatpush1.bf16.msra.mxu0 0
        %1244 = vmatprep.subr.bf16.mxu0 0
        %1245 = vmatpush1.bf16.msra.mxu0 0
        %1246 = vmatprep.mubr.bf16.mxu0 0
        %1247 = vmatmul.mubr.bf16.gmra.mrb[0].mxu0 %v1208
        %v1248 = vpop.f32.mrb[0].mxu0
        %v1249 = vadd.f32 0.0, %v1248
        %v1250 = vpop.f32.mrb[0].mxu0
        %v1251 = vpop.f32.mrb[0].mxu0
        %v1252 = vpop.f32.mrb[0].mxu0
        %1253 = vdwg.mxu0
        %v1254 = vpack.c.bf16 %v1249, %v1249
        %1255 = vst [vmem:[#allocation3] sm:$0xf] %v1254
        %1256 = vmatprep.subr.bf16.mxu0 0
        %1257 = vmatpush1.bf16.xpose.msra.mxu0 %v1150
        %1258 = vmatprep.subr.bf16.mxu0 0
        %1259 = vmatpush1.bf16.xpose.msra.mxu0 0
        %1260 = vmatprep.subr.bf16.mxu0 0
        %1261 = vmatpush1.bf16.xpose.msra.mxu0 0
        %1262 = vmatprep.subr.bf16.mxu0 0
        %1263 = vmatpush1.bf16.xpose.msra.mxu0 0
        %1264 = vmatprep.subr.bf16.mxu0 0
        %1265 = vmatpush1.bf16.xpose.msra.mxu0 0
        %1266 = vmatprep.subr.bf16.mxu0 0
        %1267 = vmatpush1.bf16.xpose.msra.mxu0 0
        %1268 = vmatprep.subr.bf16.mxu0 0
        %1269 = vmatpush1.bf16.xpose.msra.mxu0 0
        %1270 = vmatprep.subr.bf16.mxu0 0
        %1271 = vmatpush1.bf16.xpose.msra.mxu0 0
        %1272 = vmatprep.subr.bf16.mxu0 0
        %1273 = vmatpush1.bf16.xpose.msra.mxu0 0
        %1274 = vmatprep.subr.bf16.mxu0 0
        %1275 = vmatpush1.bf16.xpose.msra.mxu0 0
        %1276 = vmatprep.subr.bf16.mxu0 0
        %1277 = vmatpush1.bf16.xpose.msra.mxu0 0
        %1278 = vmatprep.subr.bf16.mxu0 0
        %1279 = vmatpush1.bf16.xpose.msra.mxu0 0
        %1280 = vmatprep.subr.bf16.mxu0 0
        %1281 = vmatpush1.bf16.xpose.msra.mxu0 0
        %1282 = vmatprep.subr.bf16.mxu0 0
        %1283 = vmatpush1.bf16.xpose.msra.mxu0 0
        %1284 = vmatprep.subr.bf16.mxu0 0
        %1285 = vmatpush1.bf16.xpose.msra.mxu0 0
        %1286 = vmatprep.subr.bf16.mxu0 0
        %1287 = vmatpush1.bf16.xpose.msra.mxu0 0
        %1288 = vmatprep.mubr.bf16.mxu0 0
        %1289 = vmatmul.mubr.bf16.gmra.mrb[0].mxu0 %v1148
        %v1290 = vpop.f32.mrb[0].mxu0
        %v1291 = vadd.f32 0.0, %v1290
        %v1292 = vpop.f32.mrb[0].mxu0
        %v1293 = vpop.f32.mrb[0].mxu0
        %v1294 = vpop.f32.mrb[0].mxu0
        %1295 = vdwg.mxu0
        %v1296 = vmul.f32 %v1291, 0.088388346
        %v1297 = vsel %vm1194, %v1296, -inf
        %1298 = vmax.xlane.f32.xlu0 %v1297
        %v1299 = vpop.xlane.xlu0 %1298
        %v1300 = vsub.f32 %v1296, %v1299
        %v1301 = vmul.f32 %v1300, 1.442695
        %v1302 = vpow.pop %v1301
        %v1303 = vsel %vm1194, %v1302, 0.0
        %1304 = vadd.xlane.f32.xlu0 %v1303
        %v1305 = vpop.xlane.xlu0 %1304
        %v1306 = vrcp.pop %v1305
        %v1307 = vmul.f32 %v1302, %v1306
        %v1308 = vpack.c.bf16 %v1307, %v1307
        %v1310 = vsel %vm1194, %v1308, 0
        %v1313 = vsel %vm1210, %v1152, 0
        %1315 = vmatprep.subr.bf16.mxu0 0
        %1316 = vmatpush1.bf16.msra.mxu0 %v1313
        %1317 = vmatprep.subr.bf16.mxu0 0
        %1318 = vmatpush1.bf16.msra.mxu0 0
        %1319 = vmatprep.subr.bf16.mxu0 0
        %1320 = vmatpush1.bf16.msra.mxu0 0
        %1321 = vmatprep.subr.bf16.mxu0 0
        %1322 = vmatpush1.bf16.msra.mxu0 0
        %1323 = vmatprep.subr.bf16.mxu0 0
        %1324 = vmatpush1.bf16.msra.mxu0 0
        %1325 = vmatprep.subr.bf16.mxu0 0
        %1326 = vmatpush1.bf16.msra.mxu0 0
        %1327 = vmatprep.subr.bf16.mxu0 0
        %1328 = vmatpush1.bf16.msra.mxu0 0
        %1329 = vmatprep.subr.bf16.mxu0 0
        %1330 = vmatpush1.bf16.msra.mxu0 0
        %1331 = vmatprep.subr.bf16.mxu0 0
        %1332 = vmatpush1.bf16.msra.mxu0 0
        %1333 = vmatprep.subr.bf16.mxu0 0
        %1334 = vmatpush1.bf16.msra.mxu0 0
        %1335 = vmatprep.subr.bf16.mxu0 0
        %1336 = vmatpush1.bf16.msra.mxu0 0
        %1337 = vmatprep.subr.bf16.mxu0 0
        %1338 = vmatpush1.bf16.msra.mxu0 0
        %1339 = vmatprep.subr.bf16.mxu0 0
        %1340 = vmatpush1.bf16.msra.mxu0 0
        %1341 = vmatprep.subr.bf16.mxu0 0
        %1342 = vmatpush1.bf16.msra.mxu0 0
        %1343 = vmatprep.subr.bf16.mxu0 0
        %1344 = vmatpush1.bf16.msra.mxu0 0
        %1345 = vmatprep.subr.bf16.mxu0 0
        %1346 = vmatpush1.bf16.msra.mxu0 0
        %1347 = vmatprep.mubr.bf16.mxu0 0
        %1348 = vmatmul.mubr.bf16.gmra.mrb[0].mxu0 %v1310
        %v1349 = vpop.f32.mrb[0].mxu0
        %v1350 = vadd.f32 0.0, %v1349
        %v1351 = vpop.f32.mrb[0].mxu0
        %v1352 = vpop.f32.mrb[0].mxu0
        %v1353 = vpop.f32.mrb[0].mxu0
        %1354 = vdwg.mxu0
        %v1355 = vpack.c.bf16 %v1350, %v1350
        %1356 = vst [vmem:[#allocation3 + $0x8] sm:$0xf] %v1355
        %v1358 = vrot.slane %v1147, 4
        %v1361 = vrot.slane %v1149, 4
        %1363 = vmatprep.subr.bf16.mxu0 0
        %1364 = vmatpush1.bf16.xpose.msra.mxu0 %v1361
        %1365 = vmatprep.subr.bf16.mxu0 0
        %1366 = vmatpush1.bf16.xpose.msra.mxu0 0
        %1367 = vmatprep.subr.bf16.mxu0 0
        %1368 = vmatpush1.bf16.xpose.msra.mxu0 0
        %1369 = vmatprep.subr.bf16.mxu0 0
        %1370 = vmatpush1.bf16.xpose.msra.mxu0 0
        %1371 = vmatprep.subr.bf16.mxu0 0
        %1372 = vmatpush1.bf16.xpose.msra.mxu0 0
        %1373 = vmatprep.subr.bf16.mxu0 0
        %1374 = vmatpush1.bf16.xpose.msra.mxu0 0
        %1375 = vmatprep.subr.bf16.mxu0 0
        %1376 = vmatpush1.bf16.xpose.msra.mxu0 0
        %1377 = vmatprep.subr.bf16.mxu0 0
        %1378 = vmatpush1.bf16.xpose.msra.mxu0 0
        %1379 = vmatprep.subr.bf16.mxu0 0
        %1380 = vmatpush1.bf16.xpose.msra.mxu0 0
        %1381 = vmatprep.subr.bf16.mxu0 0
        %1382 = vmatpush1.bf16.xpose.msra.mxu0 0
        %1383 = vmatprep.subr.bf16.mxu0 0
        %1384 = vmatpush1.bf16.xpose.msra.mxu0 0
        %1385 = vmatprep.subr.bf16.mxu0 0
        %1386 = vmatpush1.bf16.xpose.msra.mxu0 0
        %1387 = vmatprep.subr.bf16.mxu0 0
        %1388 = vmatpush1.bf16.xpose.msra.mxu0 0
        %1389 = vmatprep.subr.bf16.mxu0 0
        %1390 = vmatpush1.bf16.xpose.msra.mxu0 0
        %1391 = vmatprep.subr.bf16.mxu0 0
        %1392 = vmatpush1.bf16.xpose.msra.mxu0 0
        %1393 = vmatprep.subr.bf16.mxu0 0
        %1394 = vmatpush1.bf16.xpose.msra.mxu0 0
        %1395 = vmatprep.mubr.bf16.mxu0 0
        %1396 = vmatmul.mubr.bf16.gmra.mrb[0].mxu0 %v1358
        %v1397 = vpop.f32.mrb[0].mxu0
        %v1398 = vadd.f32 0.0, %v1397
        %v1399 = vpop.f32.mrb[0].mxu0
        %v1400 = vpop.f32.mrb[0].mxu0
        %v1401 = vpop.f32.mrb[0].mxu0
        %1402 = vdwg.mxu0
        %v1403 = vmul.f32 %v1398, 0.088388346
        %v1404 = vsel %vm1194, %v1403, -inf
        %1405 = vmax.xlane.f32.xlu0 %v1404
        %v1406 = vpop.xlane.xlu0 %1405
        %v1407 = vsub.f32 %v1403, %v1406
        %v1408 = vmul.f32 %v1407, 1.442695
        %v1409 = vpow.pop %v1408
        %v1410 = vsel %vm1194, %v1409, 0.0
        %1411 = vadd.xlane.f32.xlu0 %v1410
        %v1412 = vpop.xlane.xlu0 %1411
        %v1413 = vrcp.pop %v1412
        %v1414 = vmul.f32 %v1409, %v1413
        %v1415 = vpack.c.bf16 %v1414, %v1414
        %v1417 = vrot.slane %v1151, 4
        %v1419 = vsel %vm1194, %v1415, 0
        %v1422 = vsel %vm1210, %v1417, 0
        %1424 = vmatprep.subr.bf16.mxu0 0
        %1425 = vmatpush1.bf16.msra.mxu0 %v1422
        %1426 = vmatprep.subr.bf16.mxu0 0
        %1427 = vmatpush1.bf16.msra.mxu0 0
        %1428 = vmatprep.subr.bf16.mxu0 0
        %1429 = vmatpush1.bf16.msra.mxu0 0
        %1430 = vmatprep.subr.bf16.mxu0 0
        %1431 = vmatpush1.bf16.msra.mxu0 0
        %1432 = vmatprep.subr.bf16.mxu0 0
        %1433 = vmatpush1.bf16.msra.mxu0 0
        %1434 = vmatprep.subr.bf16.mxu0 0
        %1435 = vmatpush1.bf16.msra.mxu0 0
        %1436 = vmatprep.subr.bf16.mxu0 0
        %1437 = vmatpush1.bf16.msra.mxu0 0
        %1438 = vmatprep.subr.bf16.mxu0 0
        %1439 = vmatpush1.bf16.msra.mxu0 0
        %1440 = vmatprep.subr.bf16.mxu0 0
        %1441 = vmatpush1.bf16.msra.mxu0 0
        %1442 = vmatprep.subr.bf16.mxu0 0
        %1443 = vmatpush1.bf16.msra.mxu0 0
        %1444 = vmatprep.subr.bf16.mxu0 0
        %1445 = vmatpush1.bf16.msra.mxu0 0
        %1446 = vmatprep.subr.bf16.mxu0 0
        %1447 = vmatpush1.bf16.msra.mxu0 0
        %1448 = vmatprep.subr.bf16.mxu0 0
        %1449 = vmatpush1.bf16.msra.mxu0 0
        %1450 = vmatprep.subr.bf16.mxu0 0
        %1451 = vmatpush1.bf16.msra.mxu0 0
        %1452 = vmatprep.subr.bf16.mxu0 0
        %1453 = vmatpush1.bf16.msra.mxu0 0
        %1454 = vmatprep.subr.bf16.mxu0 0
        %1455 = vmatpush1.bf16.msra.mxu0 0
        %1456 = vmatprep.mubr.bf16.mxu0 0
        %1457 = vmatmul.mubr.bf16.gmra.mrb[0].mxu0 %v1419
        %v1458 = vpop.f32.mrb[0].mxu0
        %v1459 = vadd.f32 0.0, %v1458
        %v1460 = vpop.f32.mrb[0].mxu0
        %v1461 = vpop.f32.mrb[0].mxu0
        %v1462 = vpop.f32.mrb[0].mxu0
        %1463 = vdwg.mxu0
        %v1464 = vpack.c.bf16 %v1459, %v1459
        %v1466 = vrot.slane %v1464, 4
        %1468 = vst [vmem:[#allocation3] sm:$0xf0] %v1466
        %v1470 = vrot.slane %v1148, 4
        %v1473 = vrot.slane %v1150, 4
        %1475 = vmatprep.subr.bf16.mxu0 0
        %1476 = vmatpush1.bf16.xpose.msra.mxu0 %v1473
        %1477 = vmatprep.subr.bf16.mxu0 0
        %1478 = vmatpush1.bf16.xpose.msra.mxu0 0
        %1479 = vmatprep.subr.bf16.mxu0 0
        %1480 = vmatpush1.bf16.xpose.msra.mxu0 0
        %1481 = vmatprep.subr.bf16.mxu0 0
        %1482 = vmatpush1.bf16.xpose.msra.mxu0 0
        %1483 = vmatprep.subr.bf16.mxu0 0
        %1484 = vmatpush1.bf16.xpose.msra.mxu0 0
        %1485 = vmatprep.subr.bf16.mxu0 0
        %1486 = vmatpush1.bf16.xpose.msra.mxu0 0
        %1487 = vmatprep.subr.bf16.mxu0 0
        %1488 = vmatpush1.bf16.xpose.msra.mxu0 0
        %1489 = vmatprep.subr.bf16.mxu0 0
        %1490 = vmatpush1.bf16.xpose.msra.mxu0 0
        %1491 = vmatprep.subr.bf16.mxu0 0
        %1492 = vmatpush1.bf16.xpose.msra.mxu0 0
        %1493 = vmatprep.subr.bf16.mxu0 0
        %1494 = vmatpush1.bf16.xpose.msra.mxu0 0
        %1495 = vmatprep.subr.bf16.mxu0 0
        %1496 = vmatpush1.bf16.xpose.msra.mxu0 0
        %1497 = vmatprep.subr.bf16.mxu0 0
        %1498 = vmatpush1.bf16.xpose.msra.mxu0 0
        %1499 = vmatprep.subr.bf16.mxu0 0
        %1500 = vmatpush1.bf16.xpose.msra.mxu0 0
        %1501 = vmatprep.subr.bf16.mxu0 0
        %1502 = vmatpush1.bf16.xpose.msra.mxu0 0
        %1503 = vmatprep.subr.bf16.mxu0 0
        %1504 = vmatpush1.bf16.xpose.msra.mxu0 0
        %1505 = vmatprep.subr.bf16.mxu0 0
        %1506 = vmatpush1.bf16.xpose.msra.mxu0 0
        %1507 = vmatprep.mubr.bf16.mxu0 0
        %1508 = vmatmul.mubr.bf16.gmra.mrb[0].mxu0 %v1470
        %v1509 = vpop.f32.mrb[0].mxu0
        %v1510 = vadd.f32 0.0, %v1509
        %v1511 = vpop.f32.mrb[0].mxu0
        %v1512 = vpop.f32.mrb[0].mxu0
        %v1513 = vpop.f32.mrb[0].mxu0
        %1514 = vdwg.mxu0
        %v1515 = vmul.f32 %v1510, 0.088388346
        %v1516 = vsel %vm1194, %v1515, -inf
        %1517 = vmax.xlane.f32.xlu0 %v1516
        %v1518 = vpop.xlane.xlu0 %1517
        %v1519 = vsub.f32 %v1515, %v1518
        %v1520 = vmul.f32 %v1519, 1.442695
        %v1521 = vpow.pop %v1520
        %v1522 = vsel %vm1194, %v1521, 0.0
        %1523 = vadd.xlane.f32.xlu0 %v1522
        %v1524 = vpop.xlane.xlu0 %1523
        %v1525 = vrcp.pop %v1524
        %v1526 = vmul.f32 %v1521, %v1525
        %v1527 = vpack.c.bf16 %v1526, %v1526
        %v1529 = vrot.slane %v1152, 4
        %v1531 = vsel %vm1194, %v1527, 0
        %v1534 = vsel %vm1210, %v1529, 0
        %1536 = vmatprep.subr.bf16.mxu0 0
        %1537 = vmatpush1.bf16.msra.mxu0 %v1534
        %1538 = vmatprep.subr.bf16.mxu0 0
        %1539 = vmatpush1.bf16.msra.mxu0 0
        %1540 = vmatprep.subr.bf16.mxu0 0
        %1541 = vmatpush1.bf16.msra.mxu0 0
        %1542 = vmatprep.subr.bf16.mxu0 0
        %1543 = vmatpush1.bf16.msra.mxu0 0
        %1544 = vmatprep.subr.bf16.mxu0 0
        %1545 = vmatpush1.bf16.msra.mxu0 0
        %1546 = vmatprep.subr.bf16.mxu0 0
        %1547 = vmatpush1.bf16.msra.mxu0 0
        %1548 = vmatprep.subr.bf16.mxu0 0
        %1549 = vmatpush1.bf16.msra.mxu0 0
        %1550 = vmatprep.subr.bf16.mxu0 0
        %1551 = vmatpush1.bf16.msra.mxu0 0
        %1552 = vmatprep.subr.bf16.mxu0 0
        %1553 = vmatpush1.bf16.msra.mxu0 0
        %1554 = vmatprep.subr.bf16.mxu0 0
        %1555 = vmatpush1.bf16.msra.mxu0 0
        %1556 = vmatprep.subr.bf16.mxu0 0
        %1557 = vmatpush1.bf16.msra.mxu0 0
        %1558 = vmatprep.subr.bf16.mxu0 0
        %1559 = vmatpush1.bf16.msra.mxu0 0
        %1560 = vmatprep.subr.bf16.mxu0 0
        %1561 = vmatpush1.bf16.msra.mxu0 0
        %1562 = vmatprep.subr.bf16.mxu0 0
        %1563 = vmatpush1.bf16.msra.mxu0 0
        %1564 = vmatprep.subr.bf16.mxu0 0
        %1565 = vmatpush1.bf16.msra.mxu0 0
        %1566 = vmatprep.subr.bf16.mxu0 0
        %1567 = vmatpush1.bf16.msra.mxu0 0
        %1568 = vmatprep.mubr.bf16.mxu0 0
        %1569 = vmatmul.mubr.bf16.gmra.mrb[0].mxu0 %v1531
        %v1570 = vpop.f32.mrb[0].mxu0
        %v1571 = vadd.f32 0.0, %v1570
        %v1572 = vpop.f32.mrb[0].mxu0
        %v1573 = vpop.f32.mrb[0].mxu0
        %v1574 = vpop.f32.mrb[0].mxu0
        %1575 = vdwg.mxu0
        %v1576 = vpack.c.bf16 %v1571, %v1571
        %v1578 = vrot.slane %v1576, 4
        %1580 = vst [vmem:[#allocation3 + $0x8] sm:$0xf0] %v1578
        %v1581 = vld [vmem:[#allocation3] sm:$0xff]
        %v1582 = vld [vmem:[#allocation3 + $0x8] sm:$0xff]
        %v1583 = vld [vmem:[%s371] sm:$0xff]
        %v1584 = vld [vmem:[%s371 + $0x8] sm:$0xff]
        %v1585 = vld [vmem:[%s371 + $0x10] sm:$0xff]
        %v1586 = vld [vmem:[%s371 + $0x18] sm:$0xff]
        %v1587 = vld [vmem:[%s371 + $0x20] sm:$0xff]
        %v1588 = vld [vmem:[%s371 + $0x28] sm:$0xff]
        %v1589 = vld [vmem:[%s371 + $0x30] sm:$0xff]
        %v1590 = vld [vmem:[%s371 + $0x38] sm:$0xff]
        %v1591 = vld [vmem:[%s371 + $0x40] sm:$0xff]
        %v1592 = vld [vmem:[%s371 + $0x48] sm:$0xff]
        %v1593 = vld [vmem:[%s371 + $0x50] sm:$0xff]
        %v1594 = vld [vmem:[%s371 + $0x58] sm:$0xff]
        %v1595 = vld [vmem:[%s371 + $0x60] sm:$0xff]
        %v1596 = vld [vmem:[%s371 + $0x68] sm:$0xff]
        %v1597 = vld [vmem:[%s371 + $0x70] sm:$0xff]
        %v1598 = vld [vmem:[%s371 + $0x78] sm:$0xff]
        %v1599 = vld [vmem:[%s371 + $0x80] sm:$0xff]
        %v1600 = vld [vmem:[%s371 + $0x88] sm:$0xff]
        %v1601 = vld [vmem:[%s371 + $0x90] sm:$0xff]
        %v1602 = vld [vmem:[%s371 + $0x98] sm:$0xff]
        %v1603 = vld [vmem:[%s371 + $0xa0] sm:$0xff]
        %v1604 = vld [vmem:[%s371 + $0xa8] sm:$0xff]
        %v1605 = vld [vmem:[%s371 + $0xb0] sm:$0xff]
        %v1606 = vld [vmem:[%s371 + $0xb8] sm:$0xff]
        %v1607 = vld [vmem:[%s371 + $0xc0] sm:$0xff]
        %v1608 = vld [vmem:[%s371 + $0xc8] sm:$0xff]
        %v1609 = vld [vmem:[%s371 + $0xd0] sm:$0xff]
        %v1610 = vld [vmem:[%s371 + $0xd8] sm:$0xff]
        %v1611 = vld [vmem:[%s371 + $0xe0] sm:$0xff]
        %v1612 = vld [vmem:[%s371 + $0xe8] sm:$0xff]
        %v1613 = vld [vmem:[%s371 + $0xf0] sm:$0xff]
        %v1614 = vld [vmem:[%s371 + $0xf8] sm:$0xff]
        %v1647 = vunpack.c.l.b16 %v1583
        %v1648 = vunpack.c.h.b16 %v1583
        %v1649 = vunpack.c.l.b16 %v1584
        %v1650 = vunpack.c.h.b16 %v1584
        %v1651 = vunpack.c.l.b16 %v1585
        %v1652 = vunpack.c.h.b16 %v1585
        %v1653 = vunpack.c.l.b16 %v1586
        %v1654 = vunpack.c.h.b16 %v1586
        %v1655 = vunpack.c.l.b16 %v1587
        %v1656 = vunpack.c.h.b16 %v1587
        %v1657 = vunpack.c.l.b16 %v1588
        %v1658 = vunpack.c.h.b16 %v1588
        %v1659 = vunpack.c.l.b16 %v1589
        %v1660 = vunpack.c.h.b16 %v1589
        %v1661 = vunpack.c.l.b16 %v1590
        %v1662 = vunpack.c.h.b16 %v1590
        %v1663 = vunpack.c.l.b16 %v1591
        %v1664 = vunpack.c.h.b16 %v1591
        %v1665 = vunpack.c.l.b16 %v1592
        %v1666 = vunpack.c.h.b16 %v1592
        %v1667 = vunpack.c.l.b16 %v1593
        %v1668 = vunpack.c.h.b16 %v1593
        %v1669 = vunpack.c.l.b16 %v1594
        %v1670 = vunpack.c.h.b16 %v1594
        %v1671 = vunpack.c.l.b16 %v1595
        %v1672 = vunpack.c.h.b16 %v1595
        %v1673 = vunpack.c.l.b16 %v1596
        %v1674 = vunpack.c.h.b16 %v1596
        %v1675 = vunpack.c.l.b16 %v1597
        %v1676 = vunpack.c.h.b16 %v1597
        %v1677 = vunpack.c.l.b16 %v1598
        %v1678 = vunpack.c.h.b16 %v1598
        %v1679 = vunpack.c.l.b16 %v1599
        %v1680 = vunpack.c.h.b16 %v1599
        %v1681 = vunpack.c.l.b16 %v1600
        %v1682 = vunpack.c.h.b16 %v1600
        %v1683 = vunpack.c.l.b16 %v1601
        %v1684 = vunpack.c.h.b16 %v1601
        %v1685 = vunpack.c.l.b16 %v1602
        %v1686 = vunpack.c.h.b16 %v1602
        %v1687 = vunpack.c.l.b16 %v1603
        %v1688 = vunpack.c.h.b16 %v1603
        %v1689 = vunpack.c.l.b16 %v1604
        %v1690 = vunpack.c.h.b16 %v1604
        %v1691 = vunpack.c.l.b16 %v1605
        %v1692 = vunpack.c.h.b16 %v1605
        %v1693 = vunpack.c.l.b16 %v1606
        %v1694 = vunpack.c.h.b16 %v1606
        %v1695 = vunpack.c.l.b16 %v1607
        %v1696 = vunpack.c.h.b16 %v1607
        %v1697 = vunpack.c.l.b16 %v1608
        %v1698 = vunpack.c.h.b16 %v1608
        %v1699 = vunpack.c.l.b16 %v1609
        %v1700 = vunpack.c.h.b16 %v1609
        %v1701 = vunpack.c.l.b16 %v1610
        %v1702 = vunpack.c.h.b16 %v1610
        %v1703 = vunpack.c.l.b16 %v1611
        %v1704 = vunpack.c.h.b16 %v1611
        %v1705 = vunpack.c.l.b16 %v1612
        %v1706 = vunpack.c.h.b16 %v1612
        %v1707 = vunpack.c.l.b16 %v1613
        %v1708 = vunpack.c.h.b16 %v1613
        %v1709 = vunpack.c.l.b16 %v1614
        %v1710 = vunpack.c.h.b16 %v1614
        %v1711 = vpack.c.b16 %v1649, %v1647
        %v1712 = vpack.c.b16 %v1650, %v1648
        %v1713 = vpack.c.b16 %v1653, %v1651
        %v1714 = vpack.c.b16 %v1654, %v1652
        %v1715 = vpack.c.b16 %v1657, %v1655
        %v1716 = vpack.c.b16 %v1658, %v1656
        %v1717 = vpack.c.b16 %v1661, %v1659
        %v1718 = vpack.c.b16 %v1662, %v1660
        %v1719 = vpack.c.b16 %v1665, %v1663
        %v1720 = vpack.c.b16 %v1666, %v1664
        %v1721 = vpack.c.b16 %v1669, %v1667
        %v1722 = vpack.c.b16 %v1670, %v1668
        %v1723 = vpack.c.b16 %v1673, %v1671
        %v1724 = vpack.c.b16 %v1674, %v1672
        %v1725 = vpack.c.b16 %v1677, %v1675
        %v1726 = vpack.c.b16 %v1678, %v1676
        %v1727 = vpack.c.b16 %v1681, %v1679
        %v1728 = vpack.c.b16 %v1682, %v1680
        %v1729 = vpack.c.b16 %v1685, %v1683
        %v1730 = vpack.c.b16 %v1686, %v1684
        %v1731 = vpack.c.b16 %v1689, %v1687
        %v1732 = vpack.c.b16 %v1690, %v1688
        %v1733 = vpack.c.b16 %v1693, %v1691
        %v1734 = vpack.c.b16 %v1694, %v1692
        %v1735 = vpack.c.b16 %v1697, %v1695
        %v1736 = vpack.c.b16 %v1698, %v1696
        %v1737 = vpack.c.b16 %v1701, %v1699
        %v1738 = vpack.c.b16 %v1702, %v1700
        %v1739 = vpack.c.b16 %v1705, %v1703
        %v1740 = vpack.c.b16 %v1706, %v1704
        %v1741 = vpack.c.b16 %v1709, %v1707
        %v1742 = vpack.c.b16 %v1710, %v1708
        %1775 = vmatprep.subr.bf16.mxu0 %v1712
        %1776 = vmatpush1.bf16.msra.mxu0 %v1711
        %1777 = vmatprep.subr.bf16.mxu0 %v1714
        %1778 = vmatpush1.bf16.msra.mxu0 %v1713
        %1779 = vmatprep.subr.bf16.mxu0 %v1716
        %1780 = vmatpush1.bf16.msra.mxu0 %v1715
        %1781 = vmatprep.subr.bf16.mxu0 %v1718
        %1782 = vmatpush1.bf16.msra.mxu0 %v1717
        %1783 = vmatprep.subr.bf16.mxu0 %v1720
        %1784 = vmatpush1.bf16.msra.mxu0 %v1719
        %1785 = vmatprep.subr.bf16.mxu0 %v1722
        %1786 = vmatpush1.bf16.msra.mxu0 %v1721
        %1787 = vmatprep.subr.bf16.mxu0 %v1724
        %1788 = vmatpush1.bf16.msra.mxu0 %v1723
        %1789 = vmatprep.subr.bf16.mxu0 %v1726
        %1790 = vmatpush1.bf16.msra.mxu0 %v1725
        %1791 = vmatprep.subr.bf16.mxu0 %v1728
        %1792 = vmatpush1.bf16.msra.mxu0 %v1727
        %1793 = vmatprep.subr.bf16.mxu0 %v1730
        %1794 = vmatpush1.bf16.msra.mxu0 %v1729
        %1795 = vmatprep.subr.bf16.mxu0 %v1732
        %1796 = vmatpush1.bf16.msra.mxu0 %v1731
        %1797 = vmatprep.subr.bf16.mxu0 %v1734
        %1798 = vmatpush1.bf16.msra.mxu0 %v1733
        %1799 = vmatprep.subr.bf16.mxu0 %v1736
        %1800 = vmatpush1.bf16.msra.mxu0 %v1735
        %1801 = vmatprep.subr.bf16.mxu0 %v1738
        %1802 = vmatpush1.bf16.msra.mxu0 %v1737
        %1803 = vmatprep.subr.bf16.mxu0 %v1740
        %1804 = vmatpush1.bf16.msra.mxu0 %v1739
        %1805 = vmatprep.subr.bf16.mxu0 %v1742
        %1806 = vmatpush1.bf16.msra.mxu0 %v1741
        %1807 = vmatprep.mubr.bf16.mxu0 %v1582
        %1808 = vmatmul.mubr.bf16.gmra.mrb[0].mxu0 %v1581
        %v1809 = vpop.f32.mrb[0].mxu0
        %v1810 = vadd.f32 0.0, %v1809
        %v1811 = vpop.f32.mrb[0].mxu0
        %v1812 = vadd.f32 0.0, %v1811
        %v1813 = vpop.f32.mrb[0].mxu0
        %v1814 = vadd.f32 0.0, %v1813
        %v1815 = vpop.f32.mrb[0].mxu0
        %v1816 = vadd.f32 0.0, %v1815
        %1817 = vdwg.mxu0
        %v1818 = vadd.f32 %v399, %v1810
        %v1819 = vadd.f32 %v400, %v1812
        %v1820 = vadd.f32 %v401, %v1814
        %v1821 = vadd.f32 %v402, %v1816
        %v1822 = vmul.f32 %v1818, %v1818
        %v1823 = vmul.f32 %v1819, %v1819
        %v1824 = vmul.f32 %v1820, %v1820
        %v1825 = vmul.f32 %v1821, %v1821
        %v1826 = vadd.f32 %v1822, %v1823
        %1827 = vadd.xlane.f32.xlu0 %v1826
        %v1828 = vpop.xlane.xlu0 %1827
        %v1829 = vadd.f32 %v1824, %v1825
        %1830 = vadd.xlane.f32.xlu0 %v1829
        %v1831 = vpop.xlane.xlu0 %1830
        %v1832 = vmul.f32 %v1828, %v413
        %v1833 = vmul.f32 %v1831, %v413
        %v1834 = vadd.f32 %v1832, 1e-05
        %v1835 = vadd.f32 %v1833, 1e-05
        %v1836 = vrsqrt.pop %v1834
        %v1837 = vrsqrt.pop %v1835
        %v1838 = vmul.f32 %v1818, %v1836
        %v1839 = vmul.f32 %v1819, %v1836
        %v1840 = vmul.f32 %v1820, %v1837
        %v1841 = vmul.f32 %v1821, %v1837
        %v1842 = vld [vmem:[%s375] sm:$0x3]
        %v1844 = vlaneseq
        %v1845 = vshrl.u32 %v1844, 7
        %v1846 = vsub.s32 0, %v1845
        %v1847 = vrot.slane %v1842, %v1846
        %v1848 = vlaneseq
        %v1849 = vshrl.u32 %v1848, 7
        %v1850 = vsub.s32 1, %v1849
        %v1851 = vrot.slane %v1842, %v1850
        %v1854 = vmul.f32 %v1838, %v1847
        %v1855 = vmul.f32 %v1839, %v1851
        %v1856 = vmul.f32 %v1840, %v1847
        %v1857 = vmul.f32 %v1841, %v1851
        %v1858 = vpack.c.bf16 %v1856, %v1854
        %v1859 = vpack.c.bf16 %v1857, %v1855
        %v1860 = vld [vmem:[%s380] sm:$0xff]
        %v1861 = vld [vmem:[%s380 + $0x8] sm:$0xff]
        %v1862 = vld [vmem:[%s380 + $0x10] sm:$0xff]
        %v1863 = vld [vmem:[%s380 + $0x18] sm:$0xff]
        %v1864 = vld [vmem:[%s380 + $0x20] sm:$0xff]
        %v1865 = vld [vmem:[%s380 + $0x28] sm:$0xff]
        %v1866 = vld [vmem:[%s380 + $0x30] sm:$0xff]
        %v1867 = vld [vmem:[%s380 + $0x38] sm:$0xff]
        %v1868 = vld [vmem:[%s380 + $0x40] sm:$0xff]
        %v1869 = vld [vmem:[%s380 + $0x48] sm:$0xff]
        %v1870 = vld [vmem:[%s380 + $0x50] sm:$0xff]
        %v1871 = vld [vmem:[%s380 + $0x58] sm:$0xff]
        %v1872 = vld [vmem:[%s380 + $0x60] sm:$0xff]
        %v1873 = vld [vmem:[%s380 + $0x68] sm:$0xff]
        %v1874 = vld [vmem:[%s380 + $0x70] sm:$0xff]
        %v1875 = vld [vmem:[%s380 + $0x78] sm:$0xff]
        %v1876 = vld [vmem:[%s380 + $0x80] sm:$0xff]
        %v1877 = vld [vmem:[%s380 + $0x88] sm:$0xff]
        %v1878 = vld [vmem:[%s380 + $0x90] sm:$0xff]
        %v1879 = vld [vmem:[%s380 + $0x98] sm:$0xff]
        %v1880 = vld [vmem:[%s380 + $0xa0] sm:$0xff]
        %v1881 = vld [vmem:[%s380 + $0xa8] sm:$0xff]
        %v1882 = vld [vmem:[%s380 + $0xb0] sm:$0xff]
        %v1883 = vld [vmem:[%s380 + $0xb8] sm:$0xff]
        %v1884 = vld [vmem:[%s380 + $0xc0] sm:$0xff]
        %v1885 = vld [vmem:[%s380 + $0xc8] sm:$0xff]
        %v1886 = vld [vmem:[%s380 + $0xd0] sm:$0xff]
        %v1887 = vld [vmem:[%s380 + $0xd8] sm:$0xff]
        %v1888 = vld [vmem:[%s380 + $0xe0] sm:$0xff]
        %v1889 = vld [vmem:[%s380 + $0xe8] sm:$0xff]
        %v1890 = vld [vmem:[%s380 + $0xf0] sm:$0xff]
        %v1891 = vld [vmem:[%s380 + $0xf8] sm:$0xff]
        %v1892 = vld [vmem:[%s380 + $0x100] sm:$0xff]
        %v1893 = vld [vmem:[%s380 + $0x108] sm:$0xff]
        %v1894 = vld [vmem:[%s380 + $0x110] sm:$0xff]
        %v1895 = vld [vmem:[%s380 + $0x118] sm:$0xff]
        %v1896 = vld [vmem:[%s380 + $0x120] sm:$0xff]
        %v1897 = vld [vmem:[%s380 + $0x128] sm:$0xff]
        %v1898 = vld [vmem:[%s380 + $0x130] sm:$0xff]
        %v1899 = vld [vmem:[%s380 + $0x138] sm:$0xff]
        %v1900 = vld [vmem:[%s380 + $0x140] sm:$0xff]
        %v1901 = vld [vmem:[%s380 + $0x148] sm:$0xff]
        %v1902 = vld [vmem:[%s380 + $0x150] sm:$0xff]
        %v1903 = vld [vmem:[%s380 + $0x158] sm:$0xff]
        %v1904 = vld [vmem:[%s380 + $0x160] sm:$0xff]
        %v1905 = vld [vmem:[%s380 + $0x168] sm:$0xff]
        %v1906 = vld [vmem:[%s380 + $0x170] sm:$0xff]
        %v1907 = vld [vmem:[%s380 + $0x178] sm:$0xff]
        %v1908 = vld [vmem:[%s380 + $0x180] sm:$0xff]
        %v1909 = vld [vmem:[%s380 + $0x188] sm:$0xff]
        %v1910 = vld [vmem:[%s380 + $0x190] sm:$0xff]
        %v1911 = vld [vmem:[%s380 + $0x198] sm:$0xff]
        %v1912 = vld [vmem:[%s380 + $0x1a0] sm:$0xff]
        %v1913 = vld [vmem:[%s380 + $0x1a8] sm:$0xff]
        %v1914 = vld [vmem:[%s380 + $0x1b0] sm:$0xff]
        %v1915 = vld [vmem:[%s380 + $0x1b8] sm:$0xff]
        %v1916 = vld [vmem:[%s380 + $0x1c0] sm:$0xff]
        %v1917 = vld [vmem:[%s380 + $0x1c8] sm:$0xff]
        %v1918 = vld [vmem:[%s380 + $0x1d0] sm:$0xff]
        %v1919 = vld [vmem:[%s380 + $0x1d8] sm:$0xff]
        %v1920 = vld [vmem:[%s380 + $0x1e0] sm:$0xff]
        %v1921 = vld [vmem:[%s380 + $0x1e8] sm:$0xff]
        %v1922 = vld [vmem:[%s380 + $0x1f0] sm:$0xff]
        %v1923 = vld [vmem:[%s380 + $0x1f8] sm:$0xff]
        %v1924 = vld [vmem:[%s380 + $0x200] sm:$0xff]
        %v1925 = vld [vmem:[%s380 + $0x208] sm:$0xff]
        %v1926 = vld [vmem:[%s380 + $0x210] sm:$0xff]
        %v1927 = vld [vmem:[%s380 + $0x218] sm:$0xff]
        %v1928 = vld [vmem:[%s380 + $0x220] sm:$0xff]
        %v1929 = vld [vmem:[%s380 + $0x228] sm:$0xff]
        %v1930 = vld [vmem:[%s380 + $0x230] sm:$0xff]
        %v1931 = vld [vmem:[%s380 + $0x238] sm:$0xff]
        %v1932 = vld [vmem:[%s380 + $0x240] sm:$0xff]
        %v1933 = vld [vmem:[%s380 + $0x248] sm:$0xff]
        %v1934 = vld [vmem:[%s380 + $0x250] sm:$0xff]
        %v1935 = vld [vmem:[%s380 + $0x258] sm:$0xff]
        %v1936 = vld [vmem:[%s380 + $0x260] sm:$0xff]
        %v1937 = vld [vmem:[%s380 + $0x268] sm:$0xff]
        %v1938 = vld [vmem:[%s380 + $0x270] sm:$0xff]
        %v1939 = vld [vmem:[%s380 + $0x278] sm:$0xff]
        %v1940 = vld [vmem:[%s380 + $0x280] sm:$0xff]
        %v1941 = vld [vmem:[%s380 + $0x288] sm:$0xff]
        %v1942 = vld [vmem:[%s380 + $0x290] sm:$0xff]
        %v1943 = vld [vmem:[%s380 + $0x298] sm:$0xff]
        %v1944 = vld [vmem:[%s380 + $0x2a0] sm:$0xff]
        %v1945 = vld [vmem:[%s380 + $0x2a8] sm:$0xff]
        %v1946 = vld [vmem:[%s380 + $0x2b0] sm:$0xff]
        %v1947 = vld [vmem:[%s380 + $0x2b8] sm:$0xff]
        %v1948 = vld [vmem:[%s380 + $0x2c0] sm:$0xff]
        %v1949 = vld [vmem:[%s380 + $0x2c8] sm:$0xff]
        %v1950 = vld [vmem:[%s380 + $0x2d0] sm:$0xff]
        %v1951 = vld [vmem:[%s380 + $0x2d8] sm:$0xff]
        %v1952 = vld [vmem:[%s380 + $0x2e0] sm:$0xff]
        %v1953 = vld [vmem:[%s380 + $0x2e8] sm:$0xff]
        %v1954 = vld [vmem:[%s380 + $0x2f0] sm:$0xff]
        %v1955 = vld [vmem:[%s380 + $0x2f8] sm:$0xff]
        %v1956 = vld [vmem:[%s380 + $0x300] sm:$0xff]
        %v1957 = vld [vmem:[%s380 + $0x308] sm:$0xff]
        %v1958 = vld [vmem:[%s380 + $0x310] sm:$0xff]
        %v1959 = vld [vmem:[%s380 + $0x318] sm:$0xff]
        %v1960 = vld [vmem:[%s380 + $0x320] sm:$0xff]
        %v1961 = vld [vmem:[%s380 + $0x328] sm:$0xff]
        %v1962 = vld [vmem:[%s380 + $0x330] sm:$0xff]
        %v1963 = vld [vmem:[%s380 + $0x338] sm:$0xff]
        %v1964 = vld [vmem:[%s380 + $0x340] sm:$0xff]
        %v1965 = vld [vmem:[%s380 + $0x348] sm:$0xff]
        %v1966 = vld [vmem:[%s380 + $0x350] sm:$0xff]
        %v1967 = vld [vmem:[%s380 + $0x358] sm:$0xff]
        %v1968 = vld [vmem:[%s380 + $0x360] sm:$0xff]
        %v1969 = vld [vmem:[%s380 + $0x368] sm:$0xff]
        %v1970 = vld [vmem:[%s380 + $0x370] sm:$0xff]
        %v1971 = vld [vmem:[%s380 + $0x378] sm:$0xff]
        %v1972 = vld [vmem:[%s380 + $0x380] sm:$0xff]
        %v1973 = vld [vmem:[%s380 + $0x388] sm:$0xff]
        %v1974 = vld [vmem:[%s380 + $0x390] sm:$0xff]
        %v1975 = vld [vmem:[%s380 + $0x398] sm:$0xff]
        %v1976 = vld [vmem:[%s380 + $0x3a0] sm:$0xff]
        %v1977 = vld [vmem:[%s380 + $0x3a8] sm:$0xff]
        %v1978 = vld [vmem:[%s380 + $0x3b0] sm:$0xff]
        %v1979 = vld [vmem:[%s380 + $0x3b8] sm:$0xff]
        %v1980 = vld [vmem:[%s380 + $0x3c0] sm:$0xff]
        %v1981 = vld [vmem:[%s380 + $0x3c8] sm:$0xff]
        %v1982 = vld [vmem:[%s380 + $0x3d0] sm:$0xff]
        %v1983 = vld [vmem:[%s380 + $0x3d8] sm:$0xff]
        %v1984 = vld [vmem:[%s380 + $0x3e0] sm:$0xff]
        %v1985 = vld [vmem:[%s380 + $0x3e8] sm:$0xff]
        %v1986 = vld [vmem:[%s380 + $0x3f0] sm:$0xff]
        %v1987 = vld [vmem:[%s380 + $0x3f8] sm:$0xff]
        %v1988 = vld [vmem:[%s380 + $0x400] sm:$0xff]
        %v1989 = vld [vmem:[%s380 + $0x408] sm:$0xff]
        %v1990 = vld [vmem:[%s380 + $0x410] sm:$0xff]
        %v1991 = vld [vmem:[%s380 + $0x418] sm:$0xff]
        %v1992 = vld [vmem:[%s380 + $0x420] sm:$0xff]
        %v1993 = vld [vmem:[%s380 + $0x428] sm:$0xff]
        %v1994 = vld [vmem:[%s380 + $0x430] sm:$0xff]
        %v1995 = vld [vmem:[%s380 + $0x438] sm:$0xff]
        %v1996 = vld [vmem:[%s380 + $0x440] sm:$0xff]
        %v1997 = vld [vmem:[%s380 + $0x448] sm:$0xff]
        %v1998 = vld [vmem:[%s380 + $0x450] sm:$0xff]
        %v1999 = vld [vmem:[%s380 + $0x458] sm:$0xff]
        %v2000 = vld [vmem:[%s380 + $0x460] sm:$0xff]
        %v2001 = vld [vmem:[%s380 + $0x468] sm:$0xff]
        %v2002 = vld [vmem:[%s380 + $0x470] sm:$0xff]
        %v2003 = vld [vmem:[%s380 + $0x478] sm:$0xff]
        %v2004 = vld [vmem:[%s380 + $0x480] sm:$0xff]
        %v2005 = vld [vmem:[%s380 + $0x488] sm:$0xff]
        %v2006 = vld [vmem:[%s380 + $0x490] sm:$0xff]
        %v2007 = vld [vmem:[%s380 + $0x498] sm:$0xff]
        %v2008 = vld [vmem:[%s380 + $0x4a0] sm:$0xff]
        %v2009 = vld [vmem:[%s380 + $0x4a8] sm:$0xff]
        %v2010 = vld [vmem:[%s380 + $0x4b0] sm:$0xff]
        %v2011 = vld [vmem:[%s380 + $0x4b8] sm:$0xff]
        %v2012 = vld [vmem:[%s380 + $0x4c0] sm:$0xff]
        %v2013 = vld [vmem:[%s380 + $0x4c8] sm:$0xff]
        %v2014 = vld [vmem:[%s380 + $0x4d0] sm:$0xff]
        %v2015 = vld [vmem:[%s380 + $0x4d8] sm:$0xff]
        %v2016 = vld [vmem:[%s380 + $0x4e0] sm:$0xff]
        %v2017 = vld [vmem:[%s380 + $0x4e8] sm:$0xff]
        %v2018 = vld [vmem:[%s380 + $0x4f0] sm:$0xff]
        %v2019 = vld [vmem:[%s380 + $0x4f8] sm:$0xff]
        %v2020 = vld [vmem:[%s380 + $0x500] sm:$0xff]
        %v2021 = vld [vmem:[%s380 + $0x508] sm:$0xff]
        %v2022 = vld [vmem:[%s380 + $0x510] sm:$0xff]
        %v2023 = vld [vmem:[%s380 + $0x518] sm:$0xff]
        %v2024 = vld [vmem:[%s380 + $0x520] sm:$0xff]
        %v2025 = vld [vmem:[%s380 + $0x528] sm:$0xff]
        %v2026 = vld [vmem:[%s380 + $0x530] sm:$0xff]
        %v2027 = vld [vmem:[%s380 + $0x538] sm:$0xff]
        %v2028 = vld [vmem:[%s380 + $0x540] sm:$0xff]
        %v2029 = vld [vmem:[%s380 + $0x548] sm:$0xff]
        %v2030 = vld [vmem:[%s380 + $0x550] sm:$0xff]
        %v2031 = vld [vmem:[%s380 + $0x558] sm:$0xff]
        %v2032 = vld [vmem:[%s380 + $0x560] sm:$0xff]
        %v2033 = vld [vmem:[%s380 + $0x568] sm:$0xff]
        %v2034 = vld [vmem:[%s380 + $0x570] sm:$0xff]
        %v2035 = vld [vmem:[%s380 + $0x578] sm:$0xff]
        %v2036 = vld [vmem:[%s380 + $0x580] sm:$0xff]
        %v2037 = vld [vmem:[%s380 + $0x588] sm:$0xff]
        %v2038 = vld [vmem:[%s380 + $0x590] sm:$0xff]
        %v2039 = vld [vmem:[%s380 + $0x598] sm:$0xff]
        %v2040 = vld [vmem:[%s380 + $0x5a0] sm:$0xff]
        %v2041 = vld [vmem:[%s380 + $0x5a8] sm:$0xff]
        %v2042 = vld [vmem:[%s380 + $0x5b0] sm:$0xff]
        %v2043 = vld [vmem:[%s380 + $0x5b8] sm:$0xff]
        %v2044 = vld [vmem:[%s380 + $0x5c0] sm:$0xff]
        %v2045 = vld [vmem:[%s380 + $0x5c8] sm:$0xff]
        %v2046 = vld [vmem:[%s380 + $0x5d0] sm:$0xff]
        %v2047 = vld [vmem:[%s380 + $0x5d8] sm:$0xff]
        %v2048 = vld [vmem:[%s380 + $0x5e0] sm:$0xff]
        %v2049 = vld [vmem:[%s380 + $0x5e8] sm:$0xff]
        %v2050 = vld [vmem:[%s380 + $0x5f0] sm:$0xff]
        %v2051 = vld [vmem:[%s380 + $0x5f8] sm:$0xff]
        %v2244 = vunpack.c.l.b16 %v1860
        %v2245 = vunpack.c.h.b16 %v1860
        %v2246 = vunpack.c.l.b16 %v1861
        %v2247 = vunpack.c.h.b16 %v1861
        %v2248 = vunpack.c.l.b16 %v1862
        %v2249 = vunpack.c.h.b16 %v1862
        %v2250 = vunpack.c.l.b16 %v1863
        %v2251 = vunpack.c.h.b16 %v1863
        %v2252 = vunpack.c.l.b16 %v1864
        %v2253 = vunpack.c.h.b16 %v1864
        %v2254 = vunpack.c.l.b16 %v1865
        %v2255 = vunpack.c.h.b16 %v1865
        %v2256 = vunpack.c.l.b16 %v1866
        %v2257 = vunpack.c.h.b16 %v1866
        %v2258 = vunpack.c.l.b16 %v1867
        %v2259 = vunpack.c.h.b16 %v1867
        %v2260 = vunpack.c.l.b16 %v1868
        %v2261 = vunpack.c.h.b16 %v1868
        %v2262 = vunpack.c.l.b16 %v1869
        %v2263 = vunpack.c.h.b16 %v1869
        %v2264 = vunpack.c.l.b16 %v1870
        %v2265 = vunpack.c.h.b16 %v1870
        %v2266 = vunpack.c.l.b16 %v1871
        %v2267 = vunpack.c.h.b16 %v1871
        %v2268 = vunpack.c.l.b16 %v1872
        %v2269 = vunpack.c.h.b16 %v1872
        %v2270 = vunpack.c.l.b16 %v1873
        %v2271 = vunpack.c.h.b16 %v1873
        %v2272 = vunpack.c.l.b16 %v1874
        %v2273 = vunpack.c.h.b16 %v1874
        %v2274 = vunpack.c.l.b16 %v1875
        %v2275 = vunpack.c.h.b16 %v1875
        %v2276 = vunpack.c.l.b16 %v1876
        %v2277 = vunpack.c.h.b16 %v1876
        %v2278 = vunpack.c.l.b16 %v1877
        %v2279 = vunpack.c.h.b16 %v1877
        %v2280 = vunpack.c.l.b16 %v1878
        %v2281 = vunpack.c.h.b16 %v1878
        %v2282 = vunpack.c.l.b16 %v1879
        %v2283 = vunpack.c.h.b16 %v1879
        %v2284 = vunpack.c.l.b16 %v1880
        %v2285 = vunpack.c.h.b16 %v1880
        %v2286 = vunpack.c.l.b16 %v1881
        %v2287 = vunpack.c.h.b16 %v1881
        %v2288 = vunpack.c.l.b16 %v1882
        %v2289 = vunpack.c.h.b16 %v1882
        %v2290 = vunpack.c.l.b16 %v1883
        %v2291 = vunpack.c.h.b16 %v1883
        %v2292 = vunpack.c.l.b16 %v1884
        %v2293 = vunpack.c.h.b16 %v1884
        %v2294 = vunpack.c.l.b16 %v1885
        %v2295 = vunpack.c.h.b16 %v1885
        %v2296 = vunpack.c.l.b16 %v1886
        %v2297 = vunpack.c.h.b16 %v1886
        %v2298 = vunpack.c.l.b16 %v1887
        %v2299 = vunpack.c.h.b16 %v1887
        %v2300 = vunpack.c.l.b16 %v1888
        %v2301 = vunpack.c.h.b16 %v1888
        %v2302 = vunpack.c.l.b16 %v1889
        %v2303 = vunpack.c.h.b16 %v1889
        %v2304 = vunpack.c.l.b16 %v1890
        %v2305 = vunpack.c.h.b16 %v1890
        %v2306 = vunpack.c.l.b16 %v1891
        %v2307 = vunpack.c.h.b16 %v1891
        %v2308 = vunpack.c.l.b16 %v1892
        %v2309 = vunpack.c.h.b16 %v1892
        %v2310 = vunpack.c.l.b16 %v1893
        %v2311 = vunpack.c.h.b16 %v1893
        %v2312 = vunpack.c.l.b16 %v1894
        %v2313 = vunpack.c.h.b16 %v1894
        %v2314 = vunpack.c.l.b16 %v1895
        %v2315 = vunpack.c.h.b16 %v1895
        %v2316 = vunpack.c.l.b16 %v1896
        %v2317 = vunpack.c.h.b16 %v1896
        %v2318 = vunpack.c.l.b16 %v1897
        %v2319 = vunpack.c.h.b16 %v1897
        %v2320 = vunpack.c.l.b16 %v1898
        %v2321 = vunpack.c.h.b16 %v1898
        %v2322 = vunpack.c.l.b16 %v1899
        %v2323 = vunpack.c.h.b16 %v1899
        %v2324 = vunpack.c.l.b16 %v1900
        %v2325 = vunpack.c.h.b16 %v1900
        %v2326 = vunpack.c.l.b16 %v1901
        %v2327 = vunpack.c.h.b16 %v1901
        %v2328 = vunpack.c.l.b16 %v1902
        %v2329 = vunpack.c.h.b16 %v1902
        %v2330 = vunpack.c.l.b16 %v1903
        %v2331 = vunpack.c.h.b16 %v1903
        %v2332 = vunpack.c.l.b16 %v1904
        %v2333 = vunpack.c.h.b16 %v1904
        %v2334 = vunpack.c.l.b16 %v1905
        %v2335 = vunpack.c.h.b16 %v1905
        %v2336 = vunpack.c.l.b16 %v1906
        %v2337 = vunpack.c.h.b16 %v1906
        %v2338 = vunpack.c.l.b16 %v1907
        %v2339 = vunpack.c.h.b16 %v1907
        %v2340 = vunpack.c.l.b16 %v1908
        %v2341 = vunpack.c.h.b16 %v1908
        %v2342 = vunpack.c.l.b16 %v1909
        %v2343 = vunpack.c.h.b16 %v1909
        %v2344 = vunpack.c.l.b16 %v1910
        %v2345 = vunpack.c.h.b16 %v1910
        %v2346 = vunpack.c.l.b16 %v1911
        %v2347 = vunpack.c.h.b16 %v1911
        %v2348 = vunpack.c.l.b16 %v1912
        %v2349 = vunpack.c.h.b16 %v1912
        %v2350 = vunpack.c.l.b16 %v1913
        %v2351 = vunpack.c.h.b16 %v1913
        %v2352 = vunpack.c.l.b16 %v1914
        %v2353 = vunpack.c.h.b16 %v1914
        %v2354 = vunpack.c.l.b16 %v1915
        %v2355 = vunpack.c.h.b16 %v1915
        %v2356 = vunpack.c.l.b16 %v1916
        %v2357 = vunpack.c.h.b16 %v1916
        %v2358 = vunpack.c.l.b16 %v1917
        %v2359 = vunpack.c.h.b16 %v1917
        %v2360 = vunpack.c.l.b16 %v1918
        %v2361 = vunpack.c.h.b16 %v1918
        %v2362 = vunpack.c.l.b16 %v1919
        %v2363 = vunpack.c.h.b16 %v1919
        %v2364 = vunpack.c.l.b16 %v1920
        %v2365 = vunpack.c.h.b16 %v1920
        %v2366 = vunpack.c.l.b16 %v1921
        %v2367 = vunpack.c.h.b16 %v1921
        %v2368 = vunpack.c.l.b16 %v1922
        %v2369 = vunpack.c.h.b16 %v1922
        %v2370 = vunpack.c.l.b16 %v1923
        %v2371 = vunpack.c.h.b16 %v1923
        %v2372 = vunpack.c.l.b16 %v1924
        %v2373 = vunpack.c.h.b16 %v1924
        %v2374 = vunpack.c.l.b16 %v1925
        %v2375 = vunpack.c.h.b16 %v1925
        %v2376 = vunpack.c.l.b16 %v1926
        %v2377 = vunpack.c.h.b16 %v1926
        %v2378 = vunpack.c.l.b16 %v1927
        %v2379 = vunpack.c.h.b16 %v1927
        %v2380 = vunpack.c.l.b16 %v1928
        %v2381 = vunpack.c.h.b16 %v1928
        %v2382 = vunpack.c.l.b16 %v1929
        %v2383 = vunpack.c.h.b16 %v1929
        %v2384 = vunpack.c.l.b16 %v1930
        %v2385 = vunpack.c.h.b16 %v1930
        %v2386 = vunpack.c.l.b16 %v1931
        %v2387 = vunpack.c.h.b16 %v1931
        %v2388 = vunpack.c.l.b16 %v1932
        %v2389 = vunpack.c.h.b16 %v1932
        %v2390 = vunpack.c.l.b16 %v1933
        %v2391 = vunpack.c.h.b16 %v1933
        %v2392 = vunpack.c.l.b16 %v1934
        %v2393 = vunpack.c.h.b16 %v1934
        %v2394 = vunpack.c.l.b16 %v1935
        %v2395 = vunpack.c.h.b16 %v1935
        %v2396 = vunpack.c.l.b16 %v1936
        %v2397 = vunpack.c.h.b16 %v1936
        %v2398 = vunpack.c.l.b16 %v1937
        %v2399 = vunpack.c.h.b16 %v1937
        %v2400 = vunpack.c.l.b16 %v1938
        %v2401 = vunpack.c.h.b16 %v1938
        %v2402 = vunpack.c.l.b16 %v1939
        %v2403 = vunpack.c.h.b16 %v1939
        %v2404 = vunpack.c.l.b16 %v1940
        %v2405 = vunpack.c.h.b16 %v1940
        %v2406 = vunpack.c.l.b16 %v1941
        %v2407 = vunpack.c.h.b16 %v1941
        %v2408 = vunpack.c.l.b16 %v1942
        %v2409 = vunpack.c.h.b16 %v1942
        %v2410 = vunpack.c.l.b16 %v1943
        %v2411 = vunpack.c.h.b16 %v1943
        %v2412 = vunpack.c.l.b16 %v1944
        %v2413 = vunpack.c.h.b16 %v1944
        %v2414 = vunpack.c.l.b16 %v1945
        %v2415 = vunpack.c.h.b16 %v1945
        %v2416 = vunpack.c.l.b16 %v1946
        %v2417 = vunpack.c.h.b16 %v1946
        %v2418 = vunpack.c.l.b16 %v1947
        %v2419 = vunpack.c.h.b16 %v1947
        %v2420 = vunpack.c.l.b16 %v1948
        %v2421 = vunpack.c.h.b16 %v1948
        %v2422 = vunpack.c.l.b16 %v1949
        %v2423 = vunpack.c.h.b16 %v1949
        %v2424 = vunpack.c.l.b16 %v1950
        %v2425 = vunpack.c.h.b16 %v1950
        %v2426 = vunpack.c.l.b16 %v1951
        %v2427 = vunpack.c.h.b16 %v1951
        %v2428 = vunpack.c.l.b16 %v1952
        %v2429 = vunpack.c.h.b16 %v1952
        %v2430 = vunpack.c.l.b16 %v1953
        %v2431 = vunpack.c.h.b16 %v1953
        %v2432 = vunpack.c.l.b16 %v1954
        %v2433 = vunpack.c.h.b16 %v1954
        %v2434 = vunpack.c.l.b16 %v1955
        %v2435 = vunpack.c.h.b16 %v1955
        %v2436 = vunpack.c.l.b16 %v1956
        %v2437 = vunpack.c.h.b16 %v1956
        %v2438 = vunpack.c.l.b16 %v1957
        %v2439 = vunpack.c.h.b16 %v1957
        %v2440 = vunpack.c.l.b16 %v1958
        %v2441 = vunpack.c.h.b16 %v1958
        %v2442 = vunpack.c.l.b16 %v1959
        %v2443 = vunpack.c.h.b16 %v1959
        %v2444 = vunpack.c.l.b16 %v1960
        %v2445 = vunpack.c.h.b16 %v1960
        %v2446 = vunpack.c.l.b16 %v1961
        %v2447 = vunpack.c.h.b16 %v1961
        %v2448 = vunpack.c.l.b16 %v1962
        %v2449 = vunpack.c.h.b16 %v1962
        %v2450 = vunpack.c.l.b16 %v1963
        %v2451 = vunpack.c.h.b16 %v1963
        %v2452 = vunpack.c.l.b16 %v1964
        %v2453 = vunpack.c.h.b16 %v1964
        %v2454 = vunpack.c.l.b16 %v1965
        %v2455 = vunpack.c.h.b16 %v1965
        %v2456 = vunpack.c.l.b16 %v1966
        %v2457 = vunpack.c.h.b16 %v1966
        %v2458 = vunpack.c.l.b16 %v1967
        %v2459 = vunpack.c.h.b16 %v1967
        %v2460 = vunpack.c.l.b16 %v1968
        %v2461 = vunpack.c.h.b16 %v1968
        %v2462 = vunpack.c.l.b16 %v1969
        %v2463 = vunpack.c.h.b16 %v1969
        %v2464 = vunpack.c.l.b16 %v1970
        %v2465 = vunpack.c.h.b16 %v1970
        %v2466 = vunpack.c.l.b16 %v1971
        %v2467 = vunpack.c.h.b16 %v1971
        %v2468 = vunpack.c.l.b16 %v1972
        %v2469 = vunpack.c.h.b16 %v1972
        %v2470 = vunpack.c.l.b16 %v1973
        %v2471 = vunpack.c.h.b16 %v1973
        %v2472 = vunpack.c.l.b16 %v1974
        %v2473 = vunpack.c.h.b16 %v1974
        %v2474 = vunpack.c.l.b16 %v1975
        %v2475 = vunpack.c.h.b16 %v1975
        %v2476 = vunpack.c.l.b16 %v1976
        %v2477 = vunpack.c.h.b16 %v1976
        %v2478 = vunpack.c.l.b16 %v1977
        %v2479 = vunpack.c.h.b16 %v1977
        %v2480 = vunpack.c.l.b16 %v1978
        %v2481 = vunpack.c.h.b16 %v1978
        %v2482 = vunpack.c.l.b16 %v1979
        %v2483 = vunpack.c.h.b16 %v1979
        %v2484 = vunpack.c.l.b16 %v1980
        %v2485 = vunpack.c.h.b16 %v1980
        %v2486 = vunpack.c.l.b16 %v1981
        %v2487 = vunpack.c.h.b16 %v1981
        %v2488 = vunpack.c.l.b16 %v1982
        %v2489 = vunpack.c.h.b16 %v1982
        %v2490 = vunpack.c.l.b16 %v1983
        %v2491 = vunpack.c.h.b16 %v1983
        %v2492 = vunpack.c.l.b16 %v1984
        %v2493 = vunpack.c.h.b16 %v1984
        %v2494 = vunpack.c.l.b16 %v1985
        %v2495 = vunpack.c.h.b16 %v1985
        %v2496 = vunpack.c.l.b16 %v1986
        %v2497 = vunpack.c.h.b16 %v1986
        %v2498 = vunpack.c.l.b16 %v1987
        %v2499 = vunpack.c.h.b16 %v1987
        %v2500 = vunpack.c.l.b16 %v1988
        %v2501 = vunpack.c.h.b16 %v1988
        %v2502 = vunpack.c.l.b16 %v1989
        %v2503 = vunpack.c.h.b16 %v1989
        %v2504 = vunpack.c.l.b16 %v1990
        %v2505 = vunpack.c.h.b16 %v1990
        %v2506 = vunpack.c.l.b16 %v1991
        %v2507 = vunpack.c.h.b16 %v1991
        %v2508 = vunpack.c.l.b16 %v1992
        %v2509 = vunpack.c.h.b16 %v1992
        %v2510 = vunpack.c.l.b16 %v1993
        %v2511 = vunpack.c.h.b16 %v1993
        %v2512 = vunpack.c.l.b16 %v1994
        %v2513 = vunpack.c.h.b16 %v1994
        %v2514 = vunpack.c.l.b16 %v1995
        %v2515 = vunpack.c.h.b16 %v1995
        %v2516 = vunpack.c.l.b16 %v1996
        %v2517 = vunpack.c.h.b16 %v1996
        %v2518 = vunpack.c.l.b16 %v1997
        %v2519 = vunpack.c.h.b16 %v1997
        %v2520 = vunpack.c.l.b16 %v1998
        %v2521 = vunpack.c.h.b16 %v1998
        %v2522 = vunpack.c.l.b16 %v1999
        %v2523 = vunpack.c.h.b16 %v1999
        %v2524 = vunpack.c.l.b16 %v2000
        %v2525 = vunpack.c.h.b16 %v2000
        %v2526 = vunpack.c.l.b16 %v2001
        %v2527 = vunpack.c.h.b16 %v2001
        %v2528 = vunpack.c.l.b16 %v2002
        %v2529 = vunpack.c.h.b16 %v2002
        %v2530 = vunpack.c.l.b16 %v2003
        %v2531 = vunpack.c.h.b16 %v2003
        %v2532 = vunpack.c.l.b16 %v2004
        %v2533 = vunpack.c.h.b16 %v2004
        %v2534 = vunpack.c.l.b16 %v2005
        %v2535 = vunpack.c.h.b16 %v2005
        %v2536 = vunpack.c.l.b16 %v2006
        %v2537 = vunpack.c.h.b16 %v2006
        %v2538 = vunpack.c.l.b16 %v2007
        %v2539 = vunpack.c.h.b16 %v2007
        %v2540 = vunpack.c.l.b16 %v2008
        %v2541 = vunpack.c.h.b16 %v2008
        %v2542 = vunpack.c.l.b16 %v2009
        %v2543 = vunpack.c.h.b16 %v2009
        %v2544 = vunpack.c.l.b16 %v2010
        %v2545 = vunpack.c.h.b16 %v2010
        %v2546 = vunpack.c.l.b16 %v2011
        %v2547 = vunpack.c.h.b16 %v2011
        %v2548 = vunpack.c.l.b16 %v2012
        %v2549 = vunpack.c.h.b16 %v2012
        %v2550 = vunpack.c.l.b16 %v2013
        %v2551 = vunpack.c.h.b16 %v2013
        %v2552 = vunpack.c.l.b16 %v2014
        %v2553 = vunpack.c.h.b16 %v2014
        %v2554 = vunpack.c.l.b16 %v2015
        %v2555 = vunpack.c.h.b16 %v2015
        %v2556 = vunpack.c.l.b16 %v2016
        %v2557 = vunpack.c.h.b16 %v2016
        %v2558 = vunpack.c.l.b16 %v2017
        %v2559 = vunpack.c.h.b16 %v2017
        %v2560 = vunpack.c.l.b16 %v2018
        %v2561 = vunpack.c.h.b16 %v2018
        %v2562 = vunpack.c.l.b16 %v2019
        %v2563 = vunpack.c.h.b16 %v2019
        %v2564 = vunpack.c.l.b16 %v2020
        %v2565 = vunpack.c.h.b16 %v2020
        %v2566 = vunpack.c.l.b16 %v2021
        %v2567 = vunpack.c.h.b16 %v2021
        %v2568 = vunpack.c.l.b16 %v2022
        %v2569 = vunpack.c.h.b16 %v2022
        %v2570 = vunpack.c.l.b16 %v2023
        %v2571 = vunpack.c.h.b16 %v2023
        %v2572 = vunpack.c.l.b16 %v2024
        %v2573 = vunpack.c.h.b16 %v2024
        %v2574 = vunpack.c.l.b16 %v2025
        %v2575 = vunpack.c.h.b16 %v2025
        %v2576 = vunpack.c.l.b16 %v2026
        %v2577 = vunpack.c.h.b16 %v2026
        %v2578 = vunpack.c.l.b16 %v2027
        %v2579 = vunpack.c.h.b16 %v2027
        %v2580 = vunpack.c.l.b16 %v2028
        %v2581 = vunpack.c.h.b16 %v2028
        %v2582 = vunpack.c.l.b16 %v2029
        %v2583 = vunpack.c.h.b16 %v2029
        %v2584 = vunpack.c.l.b16 %v2030
        %v2585 = vunpack.c.h.b16 %v2030
        %v2586 = vunpack.c.l.b16 %v2031
        %v2587 = vunpack.c.h.b16 %v2031
        %v2588 = vunpack.c.l.b16 %v2032
        %v2589 = vunpack.c.h.b16 %v2032
        %v2590 = vunpack.c.l.b16 %v2033
        %v2591 = vunpack.c.h.b16 %v2033
        %v2592 = vunpack.c.l.b16 %v2034
        %v2593 = vunpack.c.h.b16 %v2034
        %v2594 = vunpack.c.l.b16 %v2035
        %v2595 = vunpack.c.h.b16 %v2035
        %v2596 = vunpack.c.l.b16 %v2036
        %v2597 = vunpack.c.h.b16 %v2036
        %v2598 = vunpack.c.l.b16 %v2037
        %v2599 = vunpack.c.h.b16 %v2037
        %v2600 = vunpack.c.l.b16 %v2038
        %v2601 = vunpack.c.h.b16 %v2038
        %v2602 = vunpack.c.l.b16 %v2039
        %v2603 = vunpack.c.h.b16 %v2039
        %v2604 = vunpack.c.l.b16 %v2040
        %v2605 = vunpack.c.h.b16 %v2040
        %v2606 = vunpack.c.l.b16 %v2041
        %v2607 = vunpack.c.h.b16 %v2041
        %v2608 = vunpack.c.l.b16 %v2042
        %v2609 = vunpack.c.h.b16 %v2042
        %v2610 = vunpack.c.l.b16 %v2043
        %v2611 = vunpack.c.h.b16 %v2043
        %v2612 = vunpack.c.l.b16 %v2044
        %v2613 = vunpack.c.h.b16 %v2044
        %v2614 = vunpack.c.l.b16 %v2045
        %v2615 = vunpack.c.h.b16 %v2045
        %v2616 = vunpack.c.l.b16 %v2046
        %v2617 = vunpack.c.h.b16 %v2046
        %v2618 = vunpack.c.l.b16 %v2047
        %v2619 = vunpack.c.h.b16 %v2047
        %v2620 = vunpack.c.l.b16 %v2048
        %v2621 = vunpack.c.h.b16 %v2048
        %v2622 = vunpack.c.l.b16 %v2049
        %v2623 = vunpack.c.h.b16 %v2049
        %v2624 = vunpack.c.l.b16 %v2050
        %v2625 = vunpack.c.h.b16 %v2050
        %v2626 = vunpack.c.l.b16 %v2051
        %v2627 = vunpack.c.h.b16 %v2051
        %v2628 = vpack.c.b16 %v2256, %v2244
        %v2629 = vpack.c.b16 %v2257, %v2245
        %v2630 = vpack.c.b16 %v2258, %v2246
        %v2631 = vpack.c.b16 %v2259, %v2247
        %v2632 = vpack.c.b16 %v2260, %v2248
        %v2633 = vpack.c.b16 %v2261, %v2249
        %v2634 = vpack.c.b16 %v2262, %v2250
        %v2635 = vpack.c.b16 %v2263, %v2251
        %v2636 = vpack.c.b16 %v2264, %v2252
        %v2637 = vpack.c.b16 %v2265, %v2253
        %v2638 = vpack.c.b16 %v2266, %v2254
        %v2639 = vpack.c.b16 %v2267, %v2255
        %v2640 = vpack.c.b16 %v2280, %v2268
        %v2641 = vpack.c.b16 %v2281, %v2269
        %v2642 = vpack.c.b16 %v2282, %v2270
        %v2643 = vpack.c.b16 %v2283, %v2271
        %v2644 = vpack.c.b16 %v2284, %v2272
        %v2645 = vpack.c.b16 %v2285, %v2273
        %v2646 = vpack.c.b16 %v2286, %v2274
        %v2647 = vpack.c.b16 %v2287, %v2275
        %v2648 = vpack.c.b16 %v2288, %v2276
        %v2649 = vpack.c.b16 %v2289, %v2277
        %v2650 = vpack.c.b16 %v2290, %v2278
        %v2651 = vpack.c.b16 %v2291, %v2279
        %v2652 = vpack.c.b16 %v2304, %v2292
        %v2653 = vpack.c.b16 %v2305, %v2293
        %v2654 = vpack.c.b16 %v2306, %v2294
        %v2655 = vpack.c.b16 %v2307, %v2295
        %v2656 = vpack.c.b16 %v2308, %v2296
        %v2657 = vpack.c.b16 %v2309, %v2297
        %v2658 = vpack.c.b16 %v2310, %v2298
        %v2659 = vpack.c.b16 %v2311, %v2299
        %v2660 = vpack.c.b16 %v2312, %v2300
        %v2661 = vpack.c.b16 %v2313, %v2301
        %v2662 = vpack.c.b16 %v2314, %v2302
        %v2663 = vpack.c.b16 %v2315, %v2303
        %v2664 = vpack.c.b16 %v2328, %v2316
        %v2665 = vpack.c.b16 %v2329, %v2317
        %v2666 = vpack.c.b16 %v2330, %v2318
        %v2667 = vpack.c.b16 %v2331, %v2319
        %v2668 = vpack.c.b16 %v2332, %v2320
        %v2669 = vpack.c.b16 %v2333, %v2321
        %v2670 = vpack.c.b16 %v2334, %v2322
        %v2671 = vpack.c.b16 %v2335, %v2323
        %v2672 = vpack.c.b16 %v2336, %v2324
        %v2673 = vpack.c.b16 %v2337, %v2325
        %v2674 = vpack.c.b16 %v2338, %v2326
        %v2675 = vpack.c.b16 %v2339, %v2327
        %v2676 = vpack.c.b16 %v2352, %v2340
        %v2677 = vpack.c.b16 %v2353, %v2341
        %v2678 = vpack.c.b16 %v2354, %v2342
        %v2679 = vpack.c.b16 %v2355, %v2343
        %v2680 = vpack.c.b16 %v2356, %v2344
        %v2681 = vpack.c.b16 %v2357, %v2345
        %v2682 = vpack.c.b16 %v2358, %v2346
        %v2683 = vpack.c.b16 %v2359, %v2347
        %v2684 = vpack.c.b16 %v2360, %v2348
        %v2685 = vpack.c.b16 %v2361, %v2349
        %v2686 = vpack.c.b16 %v2362, %v2350
        %v2687 = vpack.c.b16 %v2363, %v2351
        %v2688 = vpack.c.b16 %v2376, %v2364
        %v2689 = vpack.c.b16 %v2377, %v2365
        %v2690 = vpack.c.b16 %v2378, %v2366
        %v2691 = vpack.c.b16 %v2379, %v2367
        %v2692 = vpack.c.b16 %v2380, %v2368
        %v2693 = vpack.c.b16 %v2381, %v2369
        %v2694 = vpack.c.b16 %v2382, %v2370
        %v2695 = vpack.c.b16 %v2383, %v2371
        %v2696 = vpack.c.b16 %v2384, %v2372
        %v2697 = vpack.c.b16 %v2385, %v2373
        %v2698 = vpack.c.b16 %v2386, %v2374
        %v2699 = vpack.c.b16 %v2387, %v2375
        %v2700 = vpack.c.b16 %v2400, %v2388
        %v2701 = vpack.c.b16 %v2401, %v2389
        %v2702 = vpack.c.b16 %v2402, %v2390
        %v2703 = vpack.c.b16 %v2403, %v2391
        %v2704 = vpack.c.b16 %v2404, %v2392
        %v2705 = vpack.c.b16 %v2405, %v2393
        %v2706 = vpack.c.b16 %v2406, %v2394
        %v2707 = vpack.c.b16 %v2407, %v2395
        %v2708 = vpack.c.b16 %v2408, %v2396
        %v2709 = vpack.c.b16 %v2409, %v2397
        %v2710 = vpack.c.b16 %v2410, %v2398
        %v2711 = vpack.c.b16 %v2411, %v2399
        %v2712 = vpack.c.b16 %v2424, %v2412
        %v2713 = vpack.c.b16 %v2425, %v2413
        %v2714 = vpack.c.b16 %v2426, %v2414
        %v2715 = vpack.c.b16 %v2427, %v2415
        %v2716 = vpack.c.b16 %v2428, %v2416
        %v2717 = vpack.c.b16 %v2429, %v2417
        %v2718 = vpack.c.b16 %v2430, %v2418
        %v2719 = vpack.c.b16 %v2431, %v2419
        %v2720 = vpack.c.b16 %v2432, %v2420
        %v2721 = vpack.c.b16 %v2433, %v2421
        %v2722 = vpack.c.b16 %v2434, %v2422
        %v2723 = vpack.c.b16 %v2435, %v2423
        %v2724 = vpack.c.b16 %v2448, %v2436
        %v2725 = vpack.c.b16 %v2449, %v2437
        %v2726 = vpack.c.b16 %v2450, %v2438
        %v2727 = vpack.c.b16 %v2451, %v2439
        %v2728 = vpack.c.b16 %v2452, %v2440
        %v2729 = vpack.c.b16 %v2453, %v2441
        %v2730 = vpack.c.b16 %v2454, %v2442
        %v2731 = vpack.c.b16 %v2455, %v2443
        %v2732 = vpack.c.b16 %v2456, %v2444
        %v2733 = vpack.c.b16 %v2457, %v2445
        %v2734 = vpack.c.b16 %v2458, %v2446
        %v2735 = vpack.c.b16 %v2459, %v2447
        %v2736 = vpack.c.b16 %v2472, %v2460
        %v2737 = vpack.c.b16 %v2473, %v2461
        %v2738 = vpack.c.b16 %v2474, %v2462
        %v2739 = vpack.c.b16 %v2475, %v2463
        %v2740 = vpack.c.b16 %v2476, %v2464
        %v2741 = vpack.c.b16 %v2477, %v2465
        %v2742 = vpack.c.b16 %v2478, %v2466
        %v2743 = vpack.c.b16 %v2479, %v2467
        %v2744 = vpack.c.b16 %v2480, %v2468
        %v2745 = vpack.c.b16 %v2481, %v2469
        %v2746 = vpack.c.b16 %v2482, %v2470
        %v2747 = vpack.c.b16 %v2483, %v2471
        %v2748 = vpack.c.b16 %v2496, %v2484
        %v2749 = vpack.c.b16 %v2497, %v2485
        %v2750 = vpack.c.b16 %v2498, %v2486
        %v2751 = vpack.c.b16 %v2499, %v2487
        %v2752 = vpack.c.b16 %v2500, %v2488
        %v2753 = vpack.c.b16 %v2501, %v2489
        %v2754 = vpack.c.b16 %v2502, %v2490
        %v2755 = vpack.c.b16 %v2503, %v2491
        %v2756 = vpack.c.b16 %v2504, %v2492
        %v2757 = vpack.c.b16 %v2505, %v2493
        %v2758 = vpack.c.b16 %v2506, %v2494
        %v2759 = vpack.c.b16 %v2507, %v2495
        %v2760 = vpack.c.b16 %v2520, %v2508
        %v2761 = vpack.c.b16 %v2521, %v2509
        %v2762 = vpack.c.b16 %v2522, %v2510
        %v2763 = vpack.c.b16 %v2523, %v2511
        %v2764 = vpack.c.b16 %v2524, %v2512
        %v2765 = vpack.c.b16 %v2525, %v2513
        %v2766 = vpack.c.b16 %v2526, %v2514
        %v2767 = vpack.c.b16 %v2527, %v2515
        %v2768 = vpack.c.b16 %v2528, %v2516
        %v2769 = vpack.c.b16 %v2529, %v2517
        %v2770 = vpack.c.b16 %v2530, %v2518
        %v2771 = vpack.c.b16 %v2531, %v2519
        %v2772 = vpack.c.b16 %v2544, %v2532
        %v2773 = vpack.c.b16 %v2545, %v2533
        %v2774 = vpack.c.b16 %v2546, %v2534
        %v2775 = vpack.c.b16 %v2547, %v2535
        %v2776 = vpack.c.b16 %v2548, %v2536
        %v2777 = vpack.c.b16 %v2549, %v2537
        %v2778 = vpack.c.b16 %v2550, %v2538
        %v2779 = vpack.c.b16 %v2551, %v2539
        %v2780 = vpack.c.b16 %v2552, %v2540
        %v2781 = vpack.c.b16 %v2553, %v2541
        %v2782 = vpack.c.b16 %v2554, %v2542
        %v2783 = vpack.c.b16 %v2555, %v2543
        %v2784 = vpack.c.b16 %v2568, %v2556
        %v2785 = vpack.c.b16 %v2569, %v2557
        %v2786 = vpack.c.b16 %v2570, %v2558
        %v2787 = vpack.c.b16 %v2571, %v2559
        %v2788 = vpack.c.b16 %v2572, %v2560
        %v2789 = vpack.c.b16 %v2573, %v2561
        %v2790 = vpack.c.b16 %v2574, %v2562
        %v2791 = vpack.c.b16 %v2575, %v2563
        %v2792 = vpack.c.b16 %v2576, %v2564
        %v2793 = vpack.c.b16 %v2577, %v2565
        %v2794 = vpack.c.b16 %v2578, %v2566
        %v2795 = vpack.c.b16 %v2579, %v2567
        %v2796 = vpack.c.b16 %v2592, %v2580
        %v2797 = vpack.c.b16 %v2593, %v2581
        %v2798 = vpack.c.b16 %v2594, %v2582
        %v2799 = vpack.c.b16 %v2595, %v2583
        %v2800 = vpack.c.b16 %v2596, %v2584
        %v2801 = vpack.c.b16 %v2597, %v2585
        %v2802 = vpack.c.b16 %v2598, %v2586
        %v2803 = vpack.c.b16 %v2599, %v2587
        %v2804 = vpack.c.b16 %v2600, %v2588
        %v2805 = vpack.c.b16 %v2601, %v2589
        %v2806 = vpack.c.b16 %v2602, %v2590
        %v2807 = vpack.c.b16 %v2603, %v2591
        %v2808 = vpack.c.b16 %v2616, %v2604
        %v2809 = vpack.c.b16 %v2617, %v2605
        %v2810 = vpack.c.b16 %v2618, %v2606
        %v2811 = vpack.c.b16 %v2619, %v2607
        %v2812 = vpack.c.b16 %v2620, %v2608
        %v2813 = vpack.c.b16 %v2621, %v2609
        %v2814 = vpack.c.b16 %v2622, %v2610
        %v2815 = vpack.c.b16 %v2623, %v2611
        %v2816 = vpack.c.b16 %v2624, %v2612
        %v2817 = vpack.c.b16 %v2625, %v2613
        %v2818 = vpack.c.b16 %v2626, %v2614
        %v2819 = vpack.c.b16 %v2627, %v2615
        %3012 = vmatprep.subr.bf16.mxu0 %v2629
        %3013 = vmatpush1.bf16.msra.mxu0 %v2628
        %3014 = vmatprep.subr.bf16.mxu0 %v2641
        %3015 = vmatpush1.bf16.msra.mxu0 %v2640
        %3016 = vmatprep.subr.bf16.mxu0 %v2653
        %3017 = vmatpush1.bf16.msra.mxu0 %v2652
        %3018 = vmatprep.subr.bf16.mxu0 %v2665
        %3019 = vmatpush1.bf16.msra.mxu0 %v2664
        %3020 = vmatprep.subr.bf16.mxu0 %v2677
        %3021 = vmatpush1.bf16.msra.mxu0 %v2676
        %3022 = vmatprep.subr.bf16.mxu0 %v2689
        %3023 = vmatpush1.bf16.msra.mxu0 %v2688
        %3024 = vmatprep.subr.bf16.mxu0 %v2701
        %3025 = vmatpush1.bf16.msra.mxu0 %v2700
        %3026 = vmatprep.subr.bf16.mxu0 %v2713
        %3027 = vmatpush1.bf16.msra.mxu0 %v2712
        %3028 = vmatprep.subr.bf16.mxu0 %v2725
        %3029 = vmatpush1.bf16.msra.mxu0 %v2724
        %3030 = vmatprep.subr.bf16.mxu0 %v2737
        %3031 = vmatpush1.bf16.msra.mxu0 %v2736
        %3032 = vmatprep.subr.bf16.mxu0 %v2749
        %3033 = vmatpush1.bf16.msra.mxu0 %v2748
        %3034 = vmatprep.subr.bf16.mxu0 %v2761
        %3035 = vmatpush1.bf16.msra.mxu0 %v2760
        %3036 = vmatprep.subr.bf16.mxu0 %v2773
        %3037 = vmatpush1.bf16.msra.mxu0 %v2772
        %3038 = vmatprep.subr.bf16.mxu0 %v2785
        %3039 = vmatpush1.bf16.msra.mxu0 %v2784
        %3040 = vmatprep.subr.bf16.mxu0 %v2797
        %3041 = vmatpush1.bf16.msra.mxu0 %v2796
        %3042 = vmatprep.subr.bf16.mxu0 %v2809
        %3043 = vmatpush1.bf16.msra.mxu0 %v2808
        %3044 = vmatprep.mubr.bf16.mxu0 %v1859
        %3045 = vmatmul.mubr.bf16.gmra.mrb[0].mxu0 %v1858
        %v3046 = vpop.f32.mrb[0].mxu0
        %v3047 = vadd.f32 0.0, %v3046
        %v3048 = vpop.f32.mrb[0].mxu0
        %v3049 = vadd.f32 0.0, %v3048
        %v3050 = vpop.f32.mrb[0].mxu0
        %v3051 = vadd.f32 0.0, %v3050
        %v3052 = vpop.f32.mrb[0].mxu0
        %v3053 = vadd.f32 0.0, %v3052
        %3054 = vdwg.mxu0
        %3055 = vmatprep.subr.bf16.mxu0 %v2631
        %3056 = vmatpush1.bf16.msra.mxu0 %v2630
        %3057 = vmatprep.subr.bf16.mxu0 %v2643
        %3058 = vmatpush1.bf16.msra.mxu0 %v2642
        %3059 = vmatprep.subr.bf16.mxu0 %v2655
        %3060 = vmatpush1.bf16.msra.mxu0 %v2654
        %3061 = vmatprep.subr.bf16.mxu0 %v2667
        %3062 = vmatpush1.bf16.msra.mxu0 %v2666
        %3063 = vmatprep.subr.bf16.mxu0 %v2679
        %3064 = vmatpush1.bf16.msra.mxu0 %v2678
        %3065 = vmatprep.subr.bf16.mxu0 %v2691
        %3066 = vmatpush1.bf16.msra.mxu0 %v2690
        %3067 = vmatprep.subr.bf16.mxu0 %v2703
        %3068 = vmatpush1.bf16.msra.mxu0 %v2702
        %3069 = vmatprep.subr.bf16.mxu0 %v2715
        %3070 = vmatpush1.bf16.msra.mxu0 %v2714
        %3071 = vmatprep.subr.bf16.mxu0 %v2727
        %3072 = vmatpush1.bf16.msra.mxu0 %v2726
        %3073 = vmatprep.subr.bf16.mxu0 %v2739
        %3074 = vmatpush1.bf16.msra.mxu0 %v2738
        %3075 = vmatprep.subr.bf16.mxu0 %v2751
        %3076 = vmatpush1.bf16.msra.mxu0 %v2750
        %3077 = vmatprep.subr.bf16.mxu0 %v2763
        %3078 = vmatpush1.bf16.msra.mxu0 %v2762
        %3079 = vmatprep.subr.bf16.mxu0 %v2775
        %3080 = vmatpush1.bf16.msra.mxu0 %v2774
        %3081 = vmatprep.subr.bf16.mxu0 %v2787
        %3082 = vmatpush1.bf16.msra.mxu0 %v2786
        %3083 = vmatprep.subr.bf16.mxu0 %v2799
        %3084 = vmatpush1.bf16.msra.mxu0 %v2798
        %3085 = vmatprep.subr.bf16.mxu0 %v2811
        %3086 = vmatpush1.bf16.msra.mxu0 %v2810
        %3087 = vmatprep.mubr.bf16.mxu0 %v1859
        %3088 = vmatmul.mubr.bf16.gmra.mrb[0].mxu0 %v1858
        %v3089 = vpop.f32.mrb[0].mxu0
        %v3090 = vadd.f32 0.0, %v3089
        %v3091 = vpop.f32.mrb[0].mxu0
        %v3092 = vadd.f32 0.0, %v3091
        %v3093 = vpop.f32.mrb[0].mxu0
        %v3094 = vadd.f32 0.0, %v3093
        %v3095 = vpop.f32.mrb[0].mxu0
        %v3096 = vadd.f32 0.0, %v3095
        %3097 = vdwg.mxu0
        %3098 = vmatprep.subr.bf16.mxu0 %v2633
        %3099 = vmatpush1.bf16.msra.mxu0 %v2632
        %3100 = vmatprep.subr.bf16.mxu0 %v2645
        %3101 = vmatpush1.bf16.msra.mxu0 %v2644
        %3102 = vmatprep.subr.bf16.mxu0 %v2657
        %3103 = vmatpush1.bf16.msra.mxu0 %v2656
        %3104 = vmatprep.subr.bf16.mxu0 %v2669
        %3105 = vmatpush1.bf16.msra.mxu0 %v2668
        %3106 = vmatprep.subr.bf16.mxu0 %v2681
        %3107 = vmatpush1.bf16.msra.mxu0 %v2680
        %3108 = vmatprep.subr.bf16.mxu0 %v2693
        %3109 = vmatpush1.bf16.msra.mxu0 %v2692
        %3110 = vmatprep.subr.bf16.mxu0 %v2705
        %3111 = vmatpush1.bf16.msra.mxu0 %v2704
        %3112 = vmatprep.subr.bf16.mxu0 %v2717
        %3113 = vmatpush1.bf16.msra.mxu0 %v2716
        %3114 = vmatprep.subr.bf16.mxu0 %v2729
        %3115 = vmatpush1.bf16.msra.mxu0 %v2728
        %3116 = vmatprep.subr.bf16.mxu0 %v2741
        %3117 = vmatpush1.bf16.msra.mxu0 %v2740
        %3118 = vmatprep.subr.bf16.mxu0 %v2753
        %3119 = vmatpush1.bf16.msra.mxu0 %v2752
        %3120 = vmatprep.subr.bf16.mxu0 %v2765
        %3121 = vmatpush1.bf16.msra.mxu0 %v2764
        %3122 = vmatprep.subr.bf16.mxu0 %v2777
        %3123 = vmatpush1.bf16.msra.mxu0 %v2776
        %3124 = vmatprep.subr.bf16.mxu0 %v2789
        %3125 = vmatpush1.bf16.msra.mxu0 %v2788
        %3126 = vmatprep.subr.bf16.mxu0 %v2801
        %3127 = vmatpush1.bf16.msra.mxu0 %v2800
        %3128 = vmatprep.subr.bf16.mxu0 %v2813
        %3129 = vmatpush1.bf16.msra.mxu0 %v2812
        %3130 = vmatprep.mubr.bf16.mxu0 %v1859
        %3131 = vmatmul.mubr.bf16.gmra.mrb[0].mxu0 %v1858
        %v3132 = vpop.f32.mrb[0].mxu0
        %v3133 = vadd.f32 0.0, %v3132
        %v3134 = vpop.f32.mrb[0].mxu0
        %v3135 = vadd.f32 0.0, %v3134
        %v3136 = vpop.f32.mrb[0].mxu0
        %v3137 = vadd.f32 0.0, %v3136
        %v3138 = vpop.f32.mrb[0].mxu0
        %v3139 = vadd.f32 0.0, %v3138
        %3140 = vdwg.mxu0
        %3141 = vmatprep.subr.bf16.mxu0 %v2635
        %3142 = vmatpush1.bf16.msra.mxu0 %v2634
        %3143 = vmatprep.subr.bf16.mxu0 %v2647
        %3144 = vmatpush1.bf16.msra.mxu0 %v2646
        %3145 = vmatprep.subr.bf16.mxu0 %v2659
        %3146 = vmatpush1.bf16.msra.mxu0 %v2658
        %3147 = vmatprep.subr.bf16.mxu0 %v2671
        %3148 = vmatpush1.bf16.msra.mxu0 %v2670
        %3149 = vmatprep.subr.bf16.mxu0 %v2683
        %3150 = vmatpush1.bf16.msra.mxu0 %v2682
        %3151 = vmatprep.subr.bf16.mxu0 %v2695
        %3152 = vmatpush1.bf16.msra.mxu0 %v2694
        %3153 = vmatprep.subr.bf16.mxu0 %v2707
        %3154 = vmatpush1.bf16.msra.mxu0 %v2706
        %3155 = vmatprep.subr.bf16.mxu0 %v2719
        %3156 = vmatpush1.bf16.msra.mxu0 %v2718
        %3157 = vmatprep.subr.bf16.mxu0 %v2731
        %3158 = vmatpush1.bf16.msra.mxu0 %v2730
        %3159 = vmatprep.subr.bf16.mxu0 %v2743
        %3160 = vmatpush1.bf16.msra.mxu0 %v2742
        %3161 = vmatprep.subr.bf16.mxu0 %v2755
        %3162 = vmatpush1.bf16.msra.mxu0 %v2754
        %3163 = vmatprep.subr.bf16.mxu0 %v2767
        %3164 = vmatpush1.bf16.msra.mxu0 %v2766
        %3165 = vmatprep.subr.bf16.mxu0 %v2779
        %3166 = vmatpush1.bf16.msra.mxu0 %v2778
        %3167 = vmatprep.subr.bf16.mxu0 %v2791
        %3168 = vmatpush1.bf16.msra.mxu0 %v2790
        %3169 = vmatprep.subr.bf16.mxu0 %v2803
        %3170 = vmatpush1.bf16.msra.mxu0 %v2802
        %3171 = vmatprep.subr.bf16.mxu0 %v2815
        %3172 = vmatpush1.bf16.msra.mxu0 %v2814
        %3173 = vmatprep.mubr.bf16.mxu0 %v1859
        %3174 = vmatmul.mubr.bf16.gmra.mrb[0].mxu0 %v1858
        %v3175 = vpop.f32.mrb[0].mxu0
        %v3176 = vadd.f32 0.0, %v3175
        %v3177 = vpop.f32.mrb[0].mxu0
        %v3178 = vadd.f32 0.0, %v3177
        %v3179 = vpop.f32.mrb[0].mxu0
        %v3180 = vadd.f32 0.0, %v3179
        %v3181 = vpop.f32.mrb[0].mxu0
        %v3182 = vadd.f32 0.0, %v3181
        %3183 = vdwg.mxu0
        %3184 = vmatprep.subr.bf16.mxu0 %v2637
        %3185 = vmatpush1.bf16.msra.mxu0 %v2636
        %3186 = vmatprep.subr.bf16.mxu0 %v2649
        %3187 = vmatpush1.bf16.msra.mxu0 %v2648
        %3188 = vmatprep.subr.bf16.mxu0 %v2661
        %3189 = vmatpush1.bf16.msra.mxu0 %v2660
        %3190 = vmatprep.subr.bf16.mxu0 %v2673
        %3191 = vmatpush1.bf16.msra.mxu0 %v2672
        %3192 = vmatprep.subr.bf16.mxu0 %v2685
        %3193 = vmatpush1.bf16.msra.mxu0 %v2684
        %3194 = vmatprep.subr.bf16.mxu0 %v2697
        %3195 = vmatpush1.bf16.msra.mxu0 %v2696
        %3196 = vmatprep.subr.bf16.mxu0 %v2709
        %3197 = vmatpush1.bf16.msra.mxu0 %v2708
        %3198 = vmatprep.subr.bf16.mxu0 %v2721
        %3199 = vmatpush1.bf16.msra.mxu0 %v2720
        %3200 = vmatprep.subr.bf16.mxu0 %v2733
        %3201 = vmatpush1.bf16.msra.mxu0 %v2732
        %3202 = vmatprep.subr.bf16.mxu0 %v2745
        %3203 = vmatpush1.bf16.msra.mxu0 %v2744
        %3204 = vmatprep.subr.bf16.mxu0 %v2757
        %3205 = vmatpush1.bf16.msra.mxu0 %v2756
        %3206 = vmatprep.subr.bf16.mxu0 %v2769
        %3207 = vmatpush1.bf16.msra.mxu0 %v2768
        %3208 = vmatprep.subr.bf16.mxu0 %v2781
        %3209 = vmatpush1.bf16.msra.mxu0 %v2780
        %3210 = vmatprep.subr.bf16.mxu0 %v2793
        %3211 = vmatpush1.bf16.msra.mxu0 %v2792
        %3212 = vmatprep.subr.bf16.mxu0 %v2805
        %3213 = vmatpush1.bf16.msra.mxu0 %v2804
        %3214 = vmatprep.subr.bf16.mxu0 %v2817
        %3215 = vmatpush1.bf16.msra.mxu0 %v2816
        %3216 = vmatprep.mubr.bf16.mxu0 %v1859
        %3217 = vmatmul.mubr.bf16.gmra.mrb[0].mxu0 %v1858
        %v3218 = vpop.f32.mrb[0].mxu0
        %v3219 = vadd.f32 0.0, %v3218
        %v3220 = vpop.f32.mrb[0].mxu0
        %v3221 = vadd.f32 0.0, %v3220
        %v3222 = vpop.f32.mrb[0].mxu0
        %v3223 = vadd.f32 0.0, %v3222
        %v3224 = vpop.f32.mrb[0].mxu0
        %v3225 = vadd.f32 0.0, %v3224
        %3226 = vdwg.mxu0
        %3227 = vmatprep.subr.bf16.mxu0 %v2639
        %3228 = vmatpush1.bf16.msra.mxu0 %v2638
        %3229 = vmatprep.subr.bf16.mxu0 %v2651
        %3230 = vmatpush1.bf16.msra.mxu0 %v2650
        %3231 = vmatprep.subr.bf16.mxu0 %v2663
        %3232 = vmatpush1.bf16.msra.mxu0 %v2662
        %3233 = vmatprep.subr.bf16.mxu0 %v2675
        %3234 = vmatpush1.bf16.msra.mxu0 %v2674
        %3235 = vmatprep.subr.bf16.mxu0 %v2687
        %3236 = vmatpush1.bf16.msra.mxu0 %v2686
        %3237 = vmatprep.subr.bf16.mxu0 %v2699
        %3238 = vmatpush1.bf16.msra.mxu0 %v2698
        %3239 = vmatprep.subr.bf16.mxu0 %v2711
        %3240 = vmatpush1.bf16.msra.mxu0 %v2710
        %3241 = vmatprep.subr.bf16.mxu0 %v2723
        %3242 = vmatpush1.bf16.msra.mxu0 %v2722
        %3243 = vmatprep.subr.bf16.mxu0 %v2735
        %3244 = vmatpush1.bf16.msra.mxu0 %v2734
        %3245 = vmatprep.subr.bf16.mxu0 %v2747
        %3246 = vmatpush1.bf16.msra.mxu0 %v2746
        %3247 = vmatprep.subr.bf16.mxu0 %v2759
        %3248 = vmatpush1.bf16.msra.mxu0 %v2758
        %3249 = vmatprep.subr.bf16.mxu0 %v2771
        %3250 = vmatpush1.bf16.msra.mxu0 %v2770
        %3251 = vmatprep.subr.bf16.mxu0 %v2783
        %3252 = vmatpush1.bf16.msra.mxu0 %v2782
        %3253 = vmatprep.subr.bf16.mxu0 %v2795
        %3254 = vmatpush1.bf16.msra.mxu0 %v2794
        %3255 = vmatprep.subr.bf16.mxu0 %v2807
        %3256 = vmatpush1.bf16.msra.mxu0 %v2806
        %3257 = vmatprep.subr.bf16.mxu0 %v2819
        %3258 = vmatpush1.bf16.msra.mxu0 %v2818
        %3259 = vmatprep.mubr.bf16.mxu0 %v1859
        %3260 = vmatmul.mubr.bf16.gmra.mrb[0].mxu0 %v1858
        %v3261 = vpop.f32.mrb[0].mxu0
        %v3262 = vadd.f32 0.0, %v3261
        %v3263 = vpop.f32.mrb[0].mxu0
        %v3264 = vadd.f32 0.0, %v3263
        %v3265 = vpop.f32.mrb[0].mxu0
        %v3266 = vadd.f32 0.0, %v3265
        %v3267 = vpop.f32.mrb[0].mxu0
        %v3268 = vadd.f32 0.0, %v3267
        %3269 = vdwg.mxu0
        %v3270 = vxor.u32 %v3047, 2147483648
        %v3271 = vxor.u32 %v3049, 2147483648
        %v3272 = vxor.u32 %v3090, 2147483648
        %v3273 = vxor.u32 %v3092, 2147483648
        %v3274 = vxor.u32 %v3133, 2147483648
        %v3275 = vxor.u32 %v3135, 2147483648
        %v3276 = vxor.u32 %v3051, 2147483648
        %v3277 = vxor.u32 %v3053, 2147483648
        %v3278 = vxor.u32 %v3094, 2147483648
        %v3279 = vxor.u32 %v3096, 2147483648
        %v3280 = vxor.u32 %v3137, 2147483648
        %v3281 = vxor.u32 %v3139, 2147483648
        %v3282 = vmul.f32 %v3270, 1.442695
        %v3283 = vpow.pop %v3282
        %v3284 = vmul.f32 %v3271, 1.442695
        %v3285 = vpow.pop %v3284
        %v3286 = vmul.f32 %v3272, 1.442695
        %v3287 = vpow.pop %v3286
        %v3288 = vmul.f32 %v3273, 1.442695
        %v3289 = vpow.pop %v3288
        %v3290 = vmul.f32 %v3274, 1.442695
        %v3291 = vpow.pop %v3290
        %v3292 = vmul.f32 %v3275, 1.442695
        %v3293 = vpow.pop %v3292
        %v3294 = vmul.f32 %v3276, 1.442695
        %v3295 = vpow.pop %v3294
        %v3296 = vmul.f32 %v3277, 1.442695
        %v3297 = vpow.pop %v3296
        %v3298 = vmul.f32 %v3278, 1.442695
        %v3299 = vpow.pop %v3298
        %v3300 = vmul.f32 %v3279, 1.442695
        %v3301 = vpow.pop %v3300
        %v3302 = vmul.f32 %v3280, 1.442695
        %v3303 = vpow.pop %v3302
        %v3304 = vmul.f32 %v3281, 1.442695
        %v3305 = vpow.pop %v3304
        %v3306 = vadd.f32 %v3283, 1.0
        %v3307 = vadd.f32 %v3285, 1.0
        %v3308 = vadd.f32 %v3287, 1.0
        %v3309 = vadd.f32 %v3289, 1.0
        %v3310 = vadd.f32 %v3291, 1.0
        %v3311 = vadd.f32 %v3293, 1.0
        %v3312 = vadd.f32 %v3295, 1.0
        %v3313 = vadd.f32 %v3297, 1.0
        %v3314 = vadd.f32 %v3299, 1.0
        %v3315 = vadd.f32 %v3301, 1.0
        %v3316 = vadd.f32 %v3303, 1.0
        %v3317 = vadd.f32 %v3305, 1.0
        %v3318 = vrcp.pop %v3306
        %v3319 = vmul.f32 1.0, %v3318
        %v3320 = vrcp.pop %v3307
        %v3321 = vmul.f32 1.0, %v3320
        %v3322 = vrcp.pop %v3308
        %v3323 = vmul.f32 1.0, %v3322
        %v3324 = vrcp.pop %v3309
        %v3325 = vmul.f32 1.0, %v3324
        %v3326 = vrcp.pop %v3310
        %v3327 = vmul.f32 1.0, %v3326
        %v3328 = vrcp.pop %v3311
        %v3329 = vmul.f32 1.0, %v3328
        %v3330 = vrcp.pop %v3312
        %v3331 = vmul.f32 1.0, %v3330
        %v3332 = vrcp.pop %v3313
        %v3333 = vmul.f32 1.0, %v3332
        %v3334 = vrcp.pop %v3314
        %v3335 = vmul.f32 1.0, %v3334
        %v3336 = vrcp.pop %v3315
        %v3337 = vmul.f32 1.0, %v3336
        %v3338 = vrcp.pop %v3316
        %v3339 = vmul.f32 1.0, %v3338
        %v3340 = vrcp.pop %v3317
        %v3341 = vmul.f32 1.0, %v3340
        %v3342 = vmul.f32 %v3047, %v3319
        %v3343 = vmul.f32 %v3049, %v3321
        %v3344 = vmul.f32 %v3090, %v3323
        %v3345 = vmul.f32 %v3092, %v3325
        %v3346 = vmul.f32 %v3133, %v3327
        %v3347 = vmul.f32 %v3135, %v3329
        %v3348 = vmul.f32 %v3051, %v3331
        %v3349 = vmul.f32 %v3053, %v3333
        %v3350 = vmul.f32 %v3094, %v3335
        %v3351 = vmul.f32 %v3096, %v3337
        %v3352 = vmul.f32 %v3137, %v3339
        %v3353 = vmul.f32 %v3139, %v3341
        %v3354 = vmul.f32 %v3342, %v3176
        %v3355 = vmul.f32 %v3343, %v3178
        %v3356 = vmul.f32 %v3344, %v3219
        %v3357 = vmul.f32 %v3345, %v3221
        %v3358 = vmul.f32 %v3346, %v3262
        %v3359 = vmul.f32 %v3347, %v3264
        %v3360 = vmul.f32 %v3348, %v3180
        %v3361 = vmul.f32 %v3349, %v3182
        %v3362 = vmul.f32 %v3350, %v3223
        %v3363 = vmul.f32 %v3351, %v3225
        %v3364 = vmul.f32 %v3352, %v3266
        %v3365 = vmul.f32 %v3353, %v3268
        %v3366 = vpack.c.bf16 %v3360, %v3354
        %v3367 = vpack.c.bf16 %v3361, %v3355
        %v3368 = vpack.c.bf16 %v3362, %v3356
        %v3369 = vpack.c.bf16 %v3363, %v3357
        %v3370 = vpack.c.bf16 %v3364, %v3358
        %v3371 = vpack.c.bf16 %v3365, %v3359
        %v3372 = vld [vmem:[%s385] sm:$0xff]
        %v3373 = vld [vmem:[%s385 + $0x8] sm:$0xff]
        %v3374 = vld [vmem:[%s385 + $0x10] sm:$0xff]
        %v3375 = vld [vmem:[%s385 + $0x18] sm:$0xff]
        %v3376 = vld [vmem:[%s385 + $0x20] sm:$0xff]
        %v3377 = vld [vmem:[%s385 + $0x28] sm:$0xff]
        %v3378 = vld [vmem:[%s385 + $0x30] sm:$0xff]
        %v3379 = vld [vmem:[%s385 + $0x38] sm:$0xff]
        %v3380 = vld [vmem:[%s385 + $0x40] sm:$0xff]
        %v3381 = vld [vmem:[%s385 + $0x48] sm:$0xff]
        %v3382 = vld [vmem:[%s385 + $0x50] sm:$0xff]
        %v3383 = vld [vmem:[%s385 + $0x58] sm:$0xff]
        %v3384 = vld [vmem:[%s385 + $0x60] sm:$0xff]
        %v3385 = vld [vmem:[%s385 + $0x68] sm:$0xff]
        %v3386 = vld [vmem:[%s385 + $0x70] sm:$0xff]
        %v3387 = vld [vmem:[%s385 + $0x78] sm:$0xff]
        %v3388 = vld [vmem:[%s385 + $0x80] sm:$0xff]
        %v3389 = vld [vmem:[%s385 + $0x88] sm:$0xff]
        %v3390 = vld [vmem:[%s385 + $0x90] sm:$0xff]
        %v3391 = vld [vmem:[%s385 + $0x98] sm:$0xff]
        %v3392 = vld [vmem:[%s385 + $0xa0] sm:$0xff]
        %v3393 = vld [vmem:[%s385 + $0xa8] sm:$0xff]
        %v3394 = vld [vmem:[%s385 + $0xb0] sm:$0xff]
        %v3395 = vld [vmem:[%s385 + $0xb8] sm:$0xff]
        %v3396 = vld [vmem:[%s385 + $0xc0] sm:$0xff]
        %v3397 = vld [vmem:[%s385 + $0xc8] sm:$0xff]
        %v3398 = vld [vmem:[%s385 + $0xd0] sm:$0xff]
        %v3399 = vld [vmem:[%s385 + $0xd8] sm:$0xff]
        %v3400 = vld [vmem:[%s385 + $0xe0] sm:$0xff]
        %v3401 = vld [vmem:[%s385 + $0xe8] sm:$0xff]
        %v3402 = vld [vmem:[%s385 + $0xf0] sm:$0xff]
        %v3403 = vld [vmem:[%s385 + $0xf8] sm:$0xff]
        %v3404 = vld [vmem:[%s385 + $0x100] sm:$0xff]
        %v3405 = vld [vmem:[%s385 + $0x108] sm:$0xff]
        %v3406 = vld [vmem:[%s385 + $0x110] sm:$0xff]
        %v3407 = vld [vmem:[%s385 + $0x118] sm:$0xff]
        %v3408 = vld [vmem:[%s385 + $0x120] sm:$0xff]
        %v3409 = vld [vmem:[%s385 + $0x128] sm:$0xff]
        %v3410 = vld [vmem:[%s385 + $0x130] sm:$0xff]
        %v3411 = vld [vmem:[%s385 + $0x138] sm:$0xff]
        %v3412 = vld [vmem:[%s385 + $0x140] sm:$0xff]
        %v3413 = vld [vmem:[%s385 + $0x148] sm:$0xff]
        %v3414 = vld [vmem:[%s385 + $0x150] sm:$0xff]
        %v3415 = vld [vmem:[%s385 + $0x158] sm:$0xff]
        %v3416 = vld [vmem:[%s385 + $0x160] sm:$0xff]
        %v3417 = vld [vmem:[%s385 + $0x168] sm:$0xff]
        %v3418 = vld [vmem:[%s385 + $0x170] sm:$0xff]
        %v3419 = vld [vmem:[%s385 + $0x178] sm:$0xff]
        %v3420 = vld [vmem:[%s385 + $0x180] sm:$0xff]
        %v3421 = vld [vmem:[%s385 + $0x188] sm:$0xff]
        %v3422 = vld [vmem:[%s385 + $0x190] sm:$0xff]
        %v3423 = vld [vmem:[%s385 + $0x198] sm:$0xff]
        %v3424 = vld [vmem:[%s385 + $0x1a0] sm:$0xff]
        %v3425 = vld [vmem:[%s385 + $0x1a8] sm:$0xff]
        %v3426 = vld [vmem:[%s385 + $0x1b0] sm:$0xff]
        %v3427 = vld [vmem:[%s385 + $0x1b8] sm:$0xff]
        %v3428 = vld [vmem:[%s385 + $0x1c0] sm:$0xff]
        %v3429 = vld [vmem:[%s385 + $0x1c8] sm:$0xff]
        %v3430 = vld [vmem:[%s385 + $0x1d0] sm:$0xff]
        %v3431 = vld [vmem:[%s385 + $0x1d8] sm:$0xff]
        %v3432 = vld [vmem:[%s385 + $0x1e0] sm:$0xff]
        %v3433 = vld [vmem:[%s385 + $0x1e8] sm:$0xff]
        %v3434 = vld [vmem:[%s385 + $0x1f0] sm:$0xff]
        %v3435 = vld [vmem:[%s385 + $0x1f8] sm:$0xff]
        %v3436 = vld [vmem:[%s385 + $0x200] sm:$0xff]
        %v3437 = vld [vmem:[%s385 + $0x208] sm:$0xff]
        %v3438 = vld [vmem:[%s385 + $0x210] sm:$0xff]
        %v3439 = vld [vmem:[%s385 + $0x218] sm:$0xff]
        %v3440 = vld [vmem:[%s385 + $0x220] sm:$0xff]
        %v3441 = vld [vmem:[%s385 + $0x228] sm:$0xff]
        %v3442 = vld [vmem:[%s385 + $0x230] sm:$0xff]
        %v3443 = vld [vmem:[%s385 + $0x238] sm:$0xff]
        %v3444 = vld [vmem:[%s385 + $0x240] sm:$0xff]
        %v3445 = vld [vmem:[%s385 + $0x248] sm:$0xff]
        %v3446 = vld [vmem:[%s385 + $0x250] sm:$0xff]
        %v3447 = vld [vmem:[%s385 + $0x258] sm:$0xff]
        %v3448 = vld [vmem:[%s385 + $0x260] sm:$0xff]
        %v3449 = vld [vmem:[%s385 + $0x268] sm:$0xff]
        %v3450 = vld [vmem:[%s385 + $0x270] sm:$0xff]
        %v3451 = vld [vmem:[%s385 + $0x278] sm:$0xff]
        %v3452 = vld [vmem:[%s385 + $0x280] sm:$0xff]
        %v3453 = vld [vmem:[%s385 + $0x288] sm:$0xff]
        %v3454 = vld [vmem:[%s385 + $0x290] sm:$0xff]
        %v3455 = vld [vmem:[%s385 + $0x298] sm:$0xff]
        %v3456 = vld [vmem:[%s385 + $0x2a0] sm:$0xff]
        %v3457 = vld [vmem:[%s385 + $0x2a8] sm:$0xff]
        %v3458 = vld [vmem:[%s385 + $0x2b0] sm:$0xff]
        %v3459 = vld [vmem:[%s385 + $0x2b8] sm:$0xff]
        %v3460 = vld [vmem:[%s385 + $0x2c0] sm:$0xff]
        %v3461 = vld [vmem:[%s385 + $0x2c8] sm:$0xff]
        %v3462 = vld [vmem:[%s385 + $0x2d0] sm:$0xff]
        %v3463 = vld [vmem:[%s385 + $0x2d8] sm:$0xff]
        %v3464 = vld [vmem:[%s385 + $0x2e0] sm:$0xff]
        %v3465 = vld [vmem:[%s385 + $0x2e8] sm:$0xff]
        %v3466 = vld [vmem:[%s385 + $0x2f0] sm:$0xff]
        %v3467 = vld [vmem:[%s385 + $0x2f8] sm:$0xff]
        %v3564 = vunpack.c.l.b16 %v3372
        %v3565 = vunpack.c.h.b16 %v3372
        %v3566 = vunpack.c.l.b16 %v3373
        %v3567 = vunpack.c.h.b16 %v3373
        %v3568 = vunpack.c.l.b16 %v3374
        %v3569 = vunpack.c.h.b16 %v3374
        %v3570 = vunpack.c.l.b16 %v3375
        %v3571 = vunpack.c.h.b16 %v3375
        %v3572 = vunpack.c.l.b16 %v3376
        %v3573 = vunpack.c.h.b16 %v3376
        %v3574 = vunpack.c.l.b16 %v3377
        %v3575 = vunpack.c.h.b16 %v3377
        %v3576 = vunpack.c.l.b16 %v3378
        %v3577 = vunpack.c.h.b16 %v3378
        %v3578 = vunpack.c.l.b16 %v3379
        %v3579 = vunpack.c.h.b16 %v3379
        %v3580 = vunpack.c.l.b16 %v3380
        %v3581 = vunpack.c.h.b16 %v3380
        %v3582 = vunpack.c.l.b16 %v3381
        %v3583 = vunpack.c.h.b16 %v3381
        %v3584 = vunpack.c.l.b16 %v3382
        %v3585 = vunpack.c.h.b16 %v3382
        %v3586 = vunpack.c.l.b16 %v3383
        %v3587 = vunpack.c.h.b16 %v3383
        %v3588 = vunpack.c.l.b16 %v3384
        %v3589 = vunpack.c.h.b16 %v3384
        %v3590 = vunpack.c.l.b16 %v3385
        %v3591 = vunpack.c.h.b16 %v3385
        %v3592 = vunpack.c.l.b16 %v3386
        %v3593 = vunpack.c.h.b16 %v3386
        %v3594 = vunpack.c.l.b16 %v3387
        %v3595 = vunpack.c.h.b16 %v3387
        %v3596 = vunpack.c.l.b16 %v3388
        %v3597 = vunpack.c.h.b16 %v3388
        %v3598 = vunpack.c.l.b16 %v3389
        %v3599 = vunpack.c.h.b16 %v3389
        %v3600 = vunpack.c.l.b16 %v3390
        %v3601 = vunpack.c.h.b16 %v3390
        %v3602 = vunpack.c.l.b16 %v3391
        %v3603 = vunpack.c.h.b16 %v3391
        %v3604 = vunpack.c.l.b16 %v3392
        %v3605 = vunpack.c.h.b16 %v3392
        %v3606 = vunpack.c.l.b16 %v3393
        %v3607 = vunpack.c.h.b16 %v3393
        %v3608 = vunpack.c.l.b16 %v3394
        %v3609 = vunpack.c.h.b16 %v3394
        %v3610 = vunpack.c.l.b16 %v3395
        %v3611 = vunpack.c.h.b16 %v3395
        %v3612 = vunpack.c.l.b16 %v3396
        %v3613 = vunpack.c.h.b16 %v3396
        %v3614 = vunpack.c.l.b16 %v3397
        %v3615 = vunpack.c.h.b16 %v3397
        %v3616 = vunpack.c.l.b16 %v3398
        %v3617 = vunpack.c.h.b16 %v3398
        %v3618 = vunpack.c.l.b16 %v3399
        %v3619 = vunpack.c.h.b16 %v3399
        %v3620 = vunpack.c.l.b16 %v3400
        %v3621 = vunpack.c.h.b16 %v3400
        %v3622 = vunpack.c.l.b16 %v3401
        %v3623 = vunpack.c.h.b16 %v3401
        %v3624 = vunpack.c.l.b16 %v3402
        %v3625 = vunpack.c.h.b16 %v3402
        %v3626 = vunpack.c.l.b16 %v3403
        %v3627 = vunpack.c.h.b16 %v3403
        %v3628 = vunpack.c.l.b16 %v3404
        %v3629 = vunpack.c.h.b16 %v3404
        %v3630 = vunpack.c.l.b16 %v3405
        %v3631 = vunpack.c.h.b16 %v3405
        %v3632 = vunpack.c.l.b16 %v3406
        %v3633 = vunpack.c.h.b16 %v3406
        %v3634 = vunpack.c.l.b16 %v3407
        %v3635 = vunpack.c.h.b16 %v3407
        %v3636 = vunpack.c.l.b16 %v3408
        %v3637 = vunpack.c.h.b16 %v3408
        %v3638 = vunpack.c.l.b16 %v3409
        %v3639 = vunpack.c.h.b16 %v3409
        %v3640 = vunpack.c.l.b16 %v3410
        %v3641 = vunpack.c.h.b16 %v3410
        %v3642 = vunpack.c.l.b16 %v3411
        %v3643 = vunpack.c.h.b16 %v3411
        %v3644 = vunpack.c.l.b16 %v3412
        %v3645 = vunpack.c.h.b16 %v3412
        %v3646 = vunpack.c.l.b16 %v3413
        %v3647 = vunpack.c.h.b16 %v3413
        %v3648 = vunpack.c.l.b16 %v3414
        %v3649 = vunpack.c.h.b16 %v3414
        %v3650 = vunpack.c.l.b16 %v3415
        %v3651 = vunpack.c.h.b16 %v3415
        %v3652 = vunpack.c.l.b16 %v3416
        %v3653 = vunpack.c.h.b16 %v3416
        %v3654 = vunpack.c.l.b16 %v3417
        %v3655 = vunpack.c.h.b16 %v3417
        %v3656 = vunpack.c.l.b16 %v3418
        %v3657 = vunpack.c.h.b16 %v3418
        %v3658 = vunpack.c.l.b16 %v3419
        %v3659 = vunpack.c.h.b16 %v3419
        %v3660 = vunpack.c.l.b16 %v3420
        %v3661 = vunpack.c.h.b16 %v3420
        %v3662 = vunpack.c.l.b16 %v3421
        %v3663 = vunpack.c.h.b16 %v3421
        %v3664 = vunpack.c.l.b16 %v3422
        %v3665 = vunpack.c.h.b16 %v3422
        %v3666 = vunpack.c.l.b16 %v3423
        %v3667 = vunpack.c.h.b16 %v3423
        %v3668 = vunpack.c.l.b16 %v3424
        %v3669 = vunpack.c.h.b16 %v3424
        %v3670 = vunpack.c.l.b16 %v3425
        %v3671 = vunpack.c.h.b16 %v3425
        %v3672 = vunpack.c.l.b16 %v3426
        %v3673 = vunpack.c.h.b16 %v3426
        %v3674 = vunpack.c.l.b16 %v3427
        %v3675 = vunpack.c.h.b16 %v3427
        %v3676 = vunpack.c.l.b16 %v3428
        %v3677 = vunpack.c.h.b16 %v3428
        %v3678 = vunpack.c.l.b16 %v3429
        %v3679 = vunpack.c.h.b16 %v3429
        %v3680 = vunpack.c.l.b16 %v3430
        %v3681 = vunpack.c.h.b16 %v3430
        %v3682 = vunpack.c.l.b16 %v3431
        %v3683 = vunpack.c.h.b16 %v3431
        %v3684 = vunpack.c.l.b16 %v3432
        %v3685 = vunpack.c.h.b16 %v3432
        %v3686 = vunpack.c.l.b16 %v3433
        %v3687 = vunpack.c.h.b16 %v3433
        %v3688 = vunpack.c.l.b16 %v3434
        %v3689 = vunpack.c.h.b16 %v3434
        %v3690 = vunpack.c.l.b16 %v3435
        %v3691 = vunpack.c.h.b16 %v3435
        %v3692 = vunpack.c.l.b16 %v3436
        %v3693 = vunpack.c.h.b16 %v3436
        %v3694 = vunpack.c.l.b16 %v3437
        %v3695 = vunpack.c.h.b16 %v3437
        %v3696 = vunpack.c.l.b16 %v3438
        %v3697 = vunpack.c.h.b16 %v3438
        %v3698 = vunpack.c.l.b16 %v3439
        %v3699 = vunpack.c.h.b16 %v3439
        %v3700 = vunpack.c.l.b16 %v3440
        %v3701 = vunpack.c.h.b16 %v3440
        %v3702 = vunpack.c.l.b16 %v3441
        %v3703 = vunpack.c.h.b16 %v3441
        %v3704 = vunpack.c.l.b16 %v3442
        %v3705 = vunpack.c.h.b16 %v3442
        %v3706 = vunpack.c.l.b16 %v3443
        %v3707 = vunpack.c.h.b16 %v3443
        %v3708 = vunpack.c.l.b16 %v3444
        %v3709 = vunpack.c.h.b16 %v3444
        %v3710 = vunpack.c.l.b16 %v3445
        %v3711 = vunpack.c.h.b16 %v3445
        %v3712 = vunpack.c.l.b16 %v3446
        %v3713 = vunpack.c.h.b16 %v3446
        %v3714 = vunpack.c.l.b16 %v3447
        %v3715 = vunpack.c.h.b16 %v3447
        %v3716 = vunpack.c.l.b16 %v3448
        %v3717 = vunpack.c.h.b16 %v3448
        %v3718 = vunpack.c.l.b16 %v3449
        %v3719 = vunpack.c.h.b16 %v3449
        %v3720 = vunpack.c.l.b16 %v3450
        %v3721 = vunpack.c.h.b16 %v3450
        %v3722 = vunpack.c.l.b16 %v3451
        %v3723 = vunpack.c.h.b16 %v3451
        %v3724 = vunpack.c.l.b16 %v3452
        %v3725 = vunpack.c.h.b16 %v3452
        %v3726 = vunpack.c.l.b16 %v3453
        %v3727 = vunpack.c.h.b16 %v3453
        %v3728 = vunpack.c.l.b16 %v3454
        %v3729 = vunpack.c.h.b16 %v3454
        %v3730 = vunpack.c.l.b16 %v3455
        %v3731 = vunpack.c.h.b16 %v3455
        %v3732 = vunpack.c.l.b16 %v3456
        %v3733 = vunpack.c.h.b16 %v3456
        %v3734 = vunpack.c.l.b16 %v3457
        %v3735 = vunpack.c.h.b16 %v3457
        %v3736 = vunpack.c.l.b16 %v3458
        %v3737 = vunpack.c.h.b16 %v3458
        %v3738 = vunpack.c.l.b16 %v3459
        %v3739 = vunpack.c.h.b16 %v3459
        %v3740 = vunpack.c.l.b16 %v3460
        %v3741 = vunpack.c.h.b16 %v3460
        %v3742 = vunpack.c.l.b16 %v3461
        %v3743 = vunpack.c.h.b16 %v3461
        %v3744 = vunpack.c.l.b16 %v3462
        %v3745 = vunpack.c.h.b16 %v3462
        %v3746 = vunpack.c.l.b16 %v3463
        %v3747 = vunpack.c.h.b16 %v3463
        %v3748 = vunpack.c.l.b16 %v3464
        %v3749 = vunpack.c.h.b16 %v3464
        %v3750 = vunpack.c.l.b16 %v3465
        %v3751 = vunpack.c.h.b16 %v3465
        %v3752 = vunpack.c.l.b16 %v3466
        %v3753 = vunpack.c.h.b16 %v3466
        %v3754 = vunpack.c.l.b16 %v3467
        %v3755 = vunpack.c.h.b16 %v3467
        %v3756 = vpack.c.b16 %v3566, %v3564
        %v3757 = vpack.c.b16 %v3567, %v3565
        %v3758 = vpack.c.b16 %v3570, %v3568
        %v3759 = vpack.c.b16 %v3571, %v3569
        %v3760 = vpack.c.b16 %v3574, %v3572
        %v3761 = vpack.c.b16 %v3575, %v3573
        %v3762 = vpack.c.b16 %v3578, %v3576
        %v3763 = vpack.c.b16 %v3579, %v3577
        %v3764 = vpack.c.b16 %v3582, %v3580
        %v3765 = vpack.c.b16 %v3583, %v3581
        %v3766 = vpack.c.b16 %v3586, %v3584
        %v3767 = vpack.c.b16 %v3587, %v3585
        %v3768 = vpack.c.b16 %v3590, %v3588
        %v3769 = vpack.c.b16 %v3591, %v3589
        %v3770 = vpack.c.b16 %v3594, %v3592
        %v3771 = vpack.c.b16 %v3595, %v3593
        %v3772 = vpack.c.b16 %v3598, %v3596
        %v3773 = vpack.c.b16 %v3599, %v3597
        %v3774 = vpack.c.b16 %v3602, %v3600
        %v3775 = vpack.c.b16 %v3603, %v3601
        %v3776 = vpack.c.b16 %v3606, %v3604
        %v3777 = vpack.c.b16 %v3607, %v3605
        %v3778 = vpack.c.b16 %v3610, %v3608
        %v3779 = vpack.c.b16 %v3611, %v3609
        %v3780 = vpack.c.b16 %v3614, %v3612
        %v3781 = vpack.c.b16 %v3615, %v3613
        %v3782 = vpack.c.b16 %v3618, %v3616
        %v3783 = vpack.c.b16 %v3619, %v3617
        %v3784 = vpack.c.b16 %v3622, %v3620
        %v3785 = vpack.c.b16 %v3623, %v3621
        %v3786 = vpack.c.b16 %v3626, %v3624
        %v3787 = vpack.c.b16 %v3627, %v3625
        %v3788 = vpack.c.b16 %v3630, %v3628
        %v3789 = vpack.c.b16 %v3631, %v3629
        %v3790 = vpack.c.b16 %v3634, %v3632
        %v3791 = vpack.c.b16 %v3635, %v3633
        %v3792 = vpack.c.b16 %v3638, %v3636
        %v3793 = vpack.c.b16 %v3639, %v3637
        %v3794 = vpack.c.b16 %v3642, %v3640
        %v3795 = vpack.c.b16 %v3643, %v3641
        %v3796 = vpack.c.b16 %v3646, %v3644
        %v3797 = vpack.c.b16 %v3647, %v3645
        %v3798 = vpack.c.b16 %v3650, %v3648
        %v3799 = vpack.c.b16 %v3651, %v3649
        %v3800 = vpack.c.b16 %v3654, %v3652
        %v3801 = vpack.c.b16 %v3655, %v3653
        %v3802 = vpack.c.b16 %v3658, %v3656
        %v3803 = vpack.c.b16 %v3659, %v3657
        %v3804 = vpack.c.b16 %v3662, %v3660
        %v3805 = vpack.c.b16 %v3663, %v3661
        %v3806 = vpack.c.b16 %v3666, %v3664
        %v3807 = vpack.c.b16 %v3667, %v3665
        %v3808 = vpack.c.b16 %v3670, %v3668
        %v3809 = vpack.c.b16 %v3671, %v3669
        %v3810 = vpack.c.b16 %v3674, %v3672
        %v3811 = vpack.c.b16 %v3675, %v3673
        %v3812 = vpack.c.b16 %v3678, %v3676
        %v3813 = vpack.c.b16 %v3679, %v3677
        %v3814 = vpack.c.b16 %v3682, %v3680
        %v3815 = vpack.c.b16 %v3683, %v3681
        %v3816 = vpack.c.b16 %v3686, %v3684
        %v3817 = vpack.c.b16 %v3687, %v3685
        %v3818 = vpack.c.b16 %v3690, %v3688
        %v3819 = vpack.c.b16 %v3691, %v3689
        %v3820 = vpack.c.b16 %v3694, %v3692
        %v3821 = vpack.c.b16 %v3695, %v3693
        %v3822 = vpack.c.b16 %v3698, %v3696
        %v3823 = vpack.c.b16 %v3699, %v3697
        %v3824 = vpack.c.b16 %v3702, %v3700
        %v3825 = vpack.c.b16 %v3703, %v3701
        %v3826 = vpack.c.b16 %v3706, %v3704
        %v3827 = vpack.c.b16 %v3707, %v3705
        %v3828 = vpack.c.b16 %v3710, %v3708
        %v3829 = vpack.c.b16 %v3711, %v3709
        %v3830 = vpack.c.b16 %v3714, %v3712
        %v3831 = vpack.c.b16 %v3715, %v3713
        %v3832 = vpack.c.b16 %v3718, %v3716
        %v3833 = vpack.c.b16 %v3719, %v3717
        %v3834 = vpack.c.b16 %v3722, %v3720
        %v3835 = vpack.c.b16 %v3723, %v3721
        %v3836 = vpack.c.b16 %v3726, %v3724
        %v3837 = vpack.c.b16 %v3727, %v3725
        %v3838 = vpack.c.b16 %v3730, %v3728
        %v3839 = vpack.c.b16 %v3731, %v3729
        %v3840 = vpack.c.b16 %v3734, %v3732
        %v3841 = vpack.c.b16 %v3735, %v3733
        %v3842 = vpack.c.b16 %v3738, %v3736
        %v3843 = vpack.c.b16 %v3739, %v3737
        %v3844 = vpack.c.b16 %v3742, %v3740
        %v3845 = vpack.c.b16 %v3743, %v3741
        %v3846 = vpack.c.b16 %v3746, %v3744
        %v3847 = vpack.c.b16 %v3747, %v3745
        %v3848 = vpack.c.b16 %v3750, %v3748
        %v3849 = vpack.c.b16 %v3751, %v3749
        %v3850 = vpack.c.b16 %v3754, %v3752
        %v3851 = vpack.c.b16 %v3755, %v3753
        %3948 = vmatprep.subr.bf16.mxu0 %v3757
        %3949 = vmatpush1.bf16.msra.mxu0 %v3756
        %3950 = vmatprep.subr.bf16.mxu0 %v3759
        %3951 = vmatpush1.bf16.msra.mxu0 %v3758
        %3952 = vmatprep.subr.bf16.mxu0 %v3761
        %3953 = vmatpush1.bf16.msra.mxu0 %v3760
        %3954 = vmatprep.subr.bf16.mxu0 %v3763
        %3955 = vmatpush1.bf16.msra.mxu0 %v3762
        %3956 = vmatprep.subr.bf16.mxu0 %v3765
        %3957 = vmatpush1.bf16.msra.mxu0 %v3764
        %3958 = vmatprep.subr.bf16.mxu0 %v3767
        %3959 = vmatpush1.bf16.msra.mxu0 %v3766
        %3960 = vmatprep.subr.bf16.mxu0 %v3769
        %3961 = vmatpush1.bf16.msra.mxu0 %v3768
        %3962 = vmatprep.subr.bf16.mxu0 %v3771
        %3963 = vmatpush1.bf16.msra.mxu0 %v3770
        %3964 = vmatprep.subr.bf16.mxu0 %v3773
        %3965 = vmatpush1.bf16.msra.mxu0 %v3772
        %3966 = vmatprep.subr.bf16.mxu0 %v3775
        %3967 = vmatpush1.bf16.msra.mxu0 %v3774
        %3968 = vmatprep.subr.bf16.mxu0 %v3777
        %3969 = vmatpush1.bf16.msra.mxu0 %v3776
        %3970 = vmatprep.subr.bf16.mxu0 %v3779
        %3971 = vmatpush1.bf16.msra.mxu0 %v3778
        %3972 = vmatprep.subr.bf16.mxu0 %v3781
        %3973 = vmatpush1.bf16.msra.mxu0 %v3780
        %3974 = vmatprep.subr.bf16.mxu0 %v3783
        %3975 = vmatpush1.bf16.msra.mxu0 %v3782
        %3976 = vmatprep.subr.bf16.mxu0 %v3785
        %3977 = vmatpush1.bf16.msra.mxu0 %v3784
        %3978 = vmatprep.subr.bf16.mxu0 %v3787
        %3979 = vmatpush1.bf16.msra.mxu0 %v3786
        %3980 = vmatprep.mubr.bf16.mxu0 %v3367
        %3981 = vmatmul.mubr.bf16.gmra.mrb[0].mxu0 %v3366
        %v3982 = vpop.f32.mrb[0].mxu0
        %v3983 = vadd.f32 0.0, %v3982
        %v3984 = vpop.f32.mrb[0].mxu0
        %v3985 = vadd.f32 0.0, %v3984
        %v3986 = vpop.f32.mrb[0].mxu0
        %v3987 = vadd.f32 0.0, %v3986
        %v3988 = vpop.f32.mrb[0].mxu0
        %v3989 = vadd.f32 0.0, %v3988
        %3990 = vdwg.mxu0
        %3991 = vmatprep.subr.bf16.mxu0 %v3789
        %3992 = vmatpush1.bf16.msra.mxu0 %v3788
        %3993 = vmatprep.subr.bf16.mxu0 %v3791
        %3994 = vmatpush1.bf16.msra.mxu0 %v3790
        %3995 = vmatprep.subr.bf16.mxu0 %v3793
        %3996 = vmatpush1.bf16.msra.mxu0 %v3792
        %3997 = vmatprep.subr.bf16.mxu0 %v3795
        %3998 = vmatpush1.bf16.msra.mxu0 %v3794
        %3999 = vmatprep.subr.bf16.mxu0 %v3797
        %4000 = vmatpush1.bf16.msra.mxu0 %v3796
        %4001 = vmatprep.subr.bf16.mxu0 %v3799
        %4002 = vmatpush1.bf16.msra.mxu0 %v3798
        %4003 = vmatprep.subr.bf16.mxu0 %v3801
        %4004 = vmatpush1.bf16.msra.mxu0 %v3800
        %4005 = vmatprep.subr.bf16.mxu0 %v3803
        %4006 = vmatpush1.bf16.msra.mxu0 %v3802
        %4007 = vmatprep.subr.bf16.mxu0 %v3805
        %4008 = vmatpush1.bf16.msra.mxu0 %v3804
        %4009 = vmatprep.subr.bf16.mxu0 %v3807
        %4010 = vmatpush1.bf16.msra.mxu0 %v3806
        %4011 = vmatprep.subr.bf16.mxu0 %v3809
        %4012 = vmatpush1.bf16.msra.mxu0 %v3808
        %4013 = vmatprep.subr.bf16.mxu0 %v3811
        %4014 = vmatpush1.bf16.msra.mxu0 %v3810
        %4015 = vmatprep.subr.bf16.mxu0 %v3813
        %4016 = vmatpush1.bf16.msra.mxu0 %v3812
        %4017 = vmatprep.subr.bf16.mxu0 %v3815
        %4018 = vmatpush1.bf16.msra.mxu0 %v3814
        %4019 = vmatprep.subr.bf16.mxu0 %v3817
        %4020 = vmatpush1.bf16.msra.mxu0 %v3816
        %4021 = vmatprep.subr.bf16.mxu0 %v3819
        %4022 = vmatpush1.bf16.msra.mxu0 %v3818
        %4023 = vmatprep.mubr.bf16.mxu0 %v3369
        %4024 = vmatmul.mubr.bf16.gmra.mrb[0].mxu0 %v3368
        %v4025 = vpop.f32.mrb[0].mxu0
        %v4026 = vadd.f32 %v3983, %v4025
        %v4027 = vpop.f32.mrb[0].mxu0
        %v4028 = vadd.f32 %v3985, %v4027
        %v4029 = vpop.f32.mrb[0].mxu0
        %v4030 = vadd.f32 %v3987, %v4029
        %v4031 = vpop.f32.mrb[0].mxu0
        %v4032 = vadd.f32 %v3989, %v4031
        %4033 = vdwg.mxu0
        %4034 = vmatprep.subr.bf16.mxu0 %v3821
        %4035 = vmatpush1.bf16.msra.mxu0 %v3820
        %4036 = vmatprep.subr.bf16.mxu0 %v3823
        %4037 = vmatpush1.bf16.msra.mxu0 %v3822
        %4038 = vmatprep.subr.bf16.mxu0 %v3825
        %4039 = vmatpush1.bf16.msra.mxu0 %v3824
        %4040 = vmatprep.subr.bf16.mxu0 %v3827
        %4041 = vmatpush1.bf16.msra.mxu0 %v3826
        %4042 = vmatprep.subr.bf16.mxu0 %v3829
        %4043 = vmatpush1.bf16.msra.mxu0 %v3828
        %4044 = vmatprep.subr.bf16.mxu0 %v3831
        %4045 = vmatpush1.bf16.msra.mxu0 %v3830
        %4046 = vmatprep.subr.bf16.mxu0 %v3833
        %4047 = vmatpush1.bf16.msra.mxu0 %v3832
        %4048 = vmatprep.subr.bf16.mxu0 %v3835
        %4049 = vmatpush1.bf16.msra.mxu0 %v3834
        %4050 = vmatprep.subr.bf16.mxu0 %v3837
        %4051 = vmatpush1.bf16.msra.mxu0 %v3836
        %4052 = vmatprep.subr.bf16.mxu0 %v3839
        %4053 = vmatpush1.bf16.msra.mxu0 %v3838
        %4054 = vmatprep.subr.bf16.mxu0 %v3841
        %4055 = vmatpush1.bf16.msra.mxu0 %v3840
        %4056 = vmatprep.subr.bf16.mxu0 %v3843
        %4057 = vmatpush1.bf16.msra.mxu0 %v3842
        %4058 = vmatprep.subr.bf16.mxu0 %v3845
        %4059 = vmatpush1.bf16.msra.mxu0 %v3844
        %4060 = vmatprep.subr.bf16.mxu0 %v3847
        %4061 = vmatpush1.bf16.msra.mxu0 %v3846
        %4062 = vmatprep.subr.bf16.mxu0 %v3849
        %4063 = vmatpush1.bf16.msra.mxu0 %v3848
        %4064 = vmatprep.subr.bf16.mxu0 %v3851
        %4065 = vmatpush1.bf16.msra.mxu0 %v3850
        %4066 = vmatprep.mubr.bf16.mxu0 %v3371
        %4067 = vmatmul.mubr.bf16.gmra.mrb[0].mxu0 %v3370
        %v4068 = vpop.f32.mrb[0].mxu0
        %v4069 = vadd.f32 %v4026, %v4068
        %v4070 = vpop.f32.mrb[0].mxu0
        %v4071 = vadd.f32 %v4028, %v4070
        %v4072 = vpop.f32.mrb[0].mxu0
        %v4073 = vadd.f32 %v4030, %v4072
        %v4074 = vpop.f32.mrb[0].mxu0
        %v4075 = vadd.f32 %v4032, %v4074
        %4076 = vdwg.mxu0
        %v4077 = vadd.f32 %v1818, %v4069
        %v4078 = vadd.f32 %v1819, %v4071
        %v4079 = vadd.f32 %v1820, %v4073
        %v4080 = vadd.f32 %v1821, %v4075
        %4081 = vst [vmem:[#allocation2] sm:$0xff] %v4077
        %4082 = vst [vmem:[#allocation2 + $0x8] sm:$0xff] %v4078
        %4083 = vst [vmem:[#allocation2 + $0x10] sm:$0xff] %v4079
        %4084 = vst [vmem:[#allocation2 + $0x18] sm:$0xff] %v4080
        %p4085 = scmp.eq.s32.totalorder %s20, 1
        // Predicated region
        $region57: #{llama_transformer_forward.1} parent=51 // pred_check
          %p4086 = pneg %p4085
        $region58: #{llama_transformer_forward.1} parent=51 // pred_check_branch
          %4088 = sbr.rel (%p4086) target = $region60
        $region59: #{llama_transformer_forward.1} parent=51 // pred_region
          %v4089 = vmul.f32 %v4077, %v4077
          %v4090 = vmul.f32 %v4078, %v4078
          %v4091 = vmul.f32 %v4079, %v4079
          %v4092 = vmul.f32 %v4080, %v4080
          %v4093 = vadd.f32 %v4089, %v4090
          %4094 = vadd.xlane.f32.xlu0 %v4093
          %v4095 = vpop.xlane.xlu0 %4094
          %v4096 = vadd.f32 %v4091, %v4092
          %4097 = vadd.xlane.f32.xlu0 %v4096
          %v4098 = vpop.xlane.xlu0 %4097
          %v4099 = vmul.f32 %v4095, %v413
          %v4100 = vmul.f32 %v4098, %v413
          %v4101 = vadd.f32 %v4099, 1e-05
          %v4102 = vadd.f32 %v4100, 1e-05
          %v4103 = vrsqrt.pop %v4101
          %v4104 = vrsqrt.pop %v4102
          %v4105 = vmul.f32 %v4077, %v4103
          %v4106 = vmul.f32 %v4078, %v4103
          %v4107 = vmul.f32 %v4079, %v4104
          %v4108 = vmul.f32 %v4080, %v4104
          %v4109 = vld [vmem:[%s7] sm:$0x3]
          %v4111 = vlaneseq
          %v4112 = vshrl.u32 %v4111, 7
          %v4113 = vsub.s32 0, %v4112
          %v4114 = vrot.slane %v4109, %v4113
          %v4115 = vlaneseq
          %v4116 = vshrl.u32 %v4115, 7
          %v4117 = vsub.s32 1, %v4116
          %v4118 = vrot.slane %v4109, %v4117
          %v4121 = vmul.f32 %v4105, %v4114
          %v4122 = vmul.f32 %v4106, %v4118
          %v4123 = vmul.f32 %v4107, %v4114
          %v4124 = vmul.f32 %v4108, %v4118
          %4125 = vst [vmem:[#allocation4] sm:$0xff] %v4121
          %4126 = vst [vmem:[#allocation4 + $0x8] sm:$0xff] %v4122
          %4127 = vst [vmem:[#allocation4 + $0x10] sm:$0xff] %v4123
          %4128 = vst [vmem:[#allocation4 + $0x18] sm:$0xff] %v4124
        $region60: #{llama_transformer_forward.1} parent=51 // pred_fallthru
          _
        // Predicated region
        $region61: #{llama_transformer_forward.1} parent=51 // pred_check
          %p4129 = pneg %p231
        $region62: #{llama_transformer_forward.1} parent=51 // pred_check_branch
          %4131 = sbr.rel (%p4129) target = $region64
        $region63: #{llama_transformer_forward.1} parent=51 // pred_region
          %s4133 = ssub.s32 512, 512
          %4134 = vsyncadd [#allocation5], %s4133
          %s4135 = sshll.u32 [#allocation4], 4
          %s4136 = int_to_ptr.vmem [resolvable:$true] %s4135
          %4141 = dma.vmem_to_hbm [thread:$0]  %s4136, 512, %s8, [#allocation5], 256, 256, 16
        $region64: #{llama_transformer_forward.1} parent=51 // pred_fallthru
          _
        // Predicated region
        $region65: #{llama_transformer_forward.1} parent=51 // pred_check
          %p4142 = pneg %p231
        $region66: #{llama_transformer_forward.1} parent=51 // pred_check_branch
          %4144 = sbr.rel (%p4142) target = $region68
        $region67: #{llama_transformer_forward.1} parent=51 // pred_region
          %4145 = dma.done [#allocation5], 512
        $region68: #{llama_transformer_forward.1} parent=51 // pred_fallthru
          _
      $region52: #{llama_transformer_forward.1} parent=5 // pred_fallthru
        _
      %p4146 = scmp.le.s32.totalorder 2, %s15
      // Predicated region
      $region69: #{llama_transformer_forward.1} parent=5 // pred_check
        %p4147 = pneg %p4146
      $region70: #{llama_transformer_forward.1} parent=5 // pred_check_branch
        %4149 = sbr.rel (%p4147) target = $region72
      $region71: #{llama_transformer_forward.1} parent=5 // pred_region
        %s4150 = ssub.s32 %s15, 2
      $region72: #{llama_transformer_forward.1} parent=5 // pred_fallthru
        _
    $region6: #{llama_transformer_forward.1} parent=1 // loop_footer
      %s19 = sadd.s32 1, %s15
    $region7: #{llama_transformer_forward.1} parent=1 // loop_footer_branch
      %14 = sbr.rel target = $region3
    $region8: #{llama_transformer_forward.1} parent=1 // loop_exit
      _
    %4151 = vsyncpa [#allocation5], 1
    %s4152 = scalar_lea.sflag [#allocation5], 1
    %4153 = vsyncpa %s4152, 1

</llo_original>
